<compile_context>
chip_gen: v7x
topology: tpu7x:2x2x1
jax: 0.10.0
libtpu: 0.0.40
codegen_flags: <defaults>
</compile_context>

<pallas_src>
import functools

import jax
import jax.numpy as jnp
from jax import lax
from jax.experimental import pallas as pl
from jax.experimental.pallas import tpu as pltpu

_F32 = jnp.float32
_HIGH = lax.Precision.HIGHEST


def _dg(a, b, contract):
    """dot_general with exact (HIGHEST) f32 contraction on the MXU."""
    return lax.dot_general(a, b, (contract, ((), ())),
                           precision=_HIGH, preferred_element_type=_F32)


def _prefix_sum_lanes(x):
    """Inclusive prefix sum along the last (lane) axis: Hillis-Steele w/ XLU rolls."""
    n = x.shape[-1]
    lane = lax.broadcasted_iota(jnp.int32, x.shape, x.ndim - 1)
    d = 1
    while d < n:
        shifted = pltpu.roll(x, d, axis=x.ndim - 1)
        x = x + jnp.where(lane >= d, shifted, 0.0)
        d *= 2
    return x


def _grouping_kernel(start_ref, pts_ref, grp_ref, ctr_ref, *,
                     num_groups, group_size, group_radius):
    G, K = num_groups, group_size
    GK = G * K
    pts = pts_ref[0]                       # (C, N) channel-major, f32
    C, N = pts.shape
    xyz = pts[:3, :]                       # (3, N)

    lane_n = lax.broadcasted_iota(jnp.int32, (1, N), 1)
    g_lane = lax.broadcasted_iota(jnp.int32, (1, G), 1)

    start = start_ref[pl.program_id(0)]    # random start index for this batch

    # ---------------- farthest point sampling (serial, G steps) -------------
    # Carry: (3, G) center accumulator, running min distances, current index.
    # No (G, N) selection matrix is carried any more.
    def fps_body(i, carry):
        centers_cm, min_d, idx = carry
        onehot_i = (lane_n == idx).astype(_F32)                     # (1, N)
        c = jnp.sum(xyz * onehot_i, axis=1, keepdims=True)          # (3, 1) exact copy
        centers_cm = centers_cm + c * (g_lane == i).astype(_F32)    # (3, G)
        d = jnp.sum((xyz - c) ** 2, axis=0, keepdims=True)          # (1, N)
        min_d = jnp.minimum(min_d, d)
        max_v = jnp.max(min_d)
        idx = jnp.min(jnp.where(min_d >= max_v, lane_n, N))         # first argmax
        return centers_cm, min_d, idx

    centers_cm, _, _ = lax.fori_loop(
        0, G, fps_body,
        (jnp.zeros((3, G), _F32), jnp.full((1, N), jnp.inf, _F32), start))

    # ------- squared distances centers -> all points, one MXU call ----------
    x_norm = jnp.sum(xyz * xyz, axis=0, keepdims=True)                  # (1, N)
    c_norm = jnp.sum(centers_cm * centers_cm, axis=0, keepdims=True)    # (1, G)
    cent_aug = jnp.concatenate([centers_cm, c_norm], axis=0)            # (4, G)
    xyz_aug = jnp.concatenate([-2.0 * xyz, jnp.ones((1, N), _F32)], axis=0)  # (4, N)
    dist2 = x_norm + _dg(cent_aug, xyz_aug, ((0,), (0,)))               # (G, N)

    # ---------------- neighbor slot map (G, N): slot k in [0,K) or -1 -------
    if group_radius is None:
        # kNN: K rounds of argmin; only the slot index is recorded (no gather
        # and no (G, K, C) value inside the loop).
        # TODO(synk): if K > N the unmatched slots gather zeros instead of
        # replicating a point (harmless for K <= N, which is the normal case).
        def knn_body(k, carry):
            dist, slot_map = carry
            m = jnp.min(dist, axis=1, keepdims=True)                               # (G, 1)
            idxk = jnp.min(jnp.where(dist <= m, lane_n, N), axis=1, keepdims=True) # (G, 1)
            hit = lane_n == idxk                                                   # (G, N)
            slot_map = jnp.where(hit, k.astype(_F32), slot_map)
            dist = jnp.where(hit, jnp.inf, dist)
            return dist, slot_map

        _, slot_map = lax.fori_loop(
            0, K, knn_body, (dist2, jnp.full((G, N), -1.0, _F32)))
    else:
        # Ball query: first K in-radius points in index order (prefix-sum ranks,
        # no (N, N) matrix and no per-slot loop).
        in_r = dist2 < _F32(group_radius * group_radius)
        ranks = _prefix_sum_lanes(in_r.astype(_F32))                # inclusive counts
        slot_map = jnp.where(in_r, ranks - 1.0, -1.0)               # (G, N)

    # ------- expand to (G*K, N) rows and gather with ONE MXU matmul ---------
    g_row = lax.broadcasted_iota(jnp.int32, (G, GK), 0)
    j_lane = lax.broadcasted_iota(jnp.int32, (G, GK), 1)
    expand = ((j_lane >= g_row * K) & (j_lane < (g_row + 1) * K)).astype(_F32)

    slot_exp = _dg(expand, slot_map, ((0,), (0,)))                  # (GK, N) exact ints
    j_col = lax.broadcasted_iota(jnp.int32, (GK, 1), 0).astype(_F32)
    g_col = jnp.floor((j_col + 0.5) * (1.0 / K))                    # j // K (exact)
    k_row = j_col - g_col * K                                       # j %  K (exact)

    if group_radius is None:
        want = k_row
    else:
        # fill_empty_indices: slots beyond the in-radius count re-use slot 0
        # (the group's first in-radius point, which is always the center).
        max_slot = jnp.max(slot_exp, axis=1, keepdims=True)         # counts - 1
        want = jnp.where(max_slot < k_row, 0.0, k_row)

    onehot = (slot_exp == want).astype(_F32)                        # (GK, N)
    gathered = _dg(pts, onehot, ((1,), (1,)))                       # (C, GK) exact copies

    # ---------------- re-center xyz rows, optional 1/r scaling --------------
    centers_exp = _dg(centers_cm, expand, ((1,), (0,)))             # (3, GK) exact copies
    if C > 3:
        offset = jnp.concatenate(
            [centers_exp, jnp.zeros((C - 3, GK), _F32)], axis=0)    # (C, GK)
    else:
        offset = centers_exp
    groups = gathered - offset
    if group_radius is not None:
        groups = groups * _F32(1.0 / group_radius)

    grp_ref[0] = groups                                             # (C, GK) lane-dense
    ctr_ref[0] = centers_cm                                         # (3, G)  lane-dense


def pointcloud_grouping(points, *, num_groups, group_size, group_radius=None, key=None):
    """points: (B, N, C) with xyz in channels 0..2. Returns (groups, centers)."""
    B, N, C = points.shape
    assert C >= 3
    G, K = num_groups, group_size
    GK = G * K
    points = points.astype(jnp.float32)
    pts_cm = jnp.transpose(points, (0, 2, 1))          # (B, C, N): points lane-dense
    if key is None:
        key = jax.random.PRNGKey(0)
    # random_start_point=True, made deterministic via an explicit PRNGKey
    start = jax.random.randint(key, (B,), 0, N, dtype=jnp.int32)

    kernel = functools.partial(_grouping_kernel, num_groups=G, group_size=K,
                               group_radius=group_radius)

    grid_spec = pltpu.PrefetchScalarGridSpec(
        num_scalar_prefetch=1,
        grid=(B,),
        in_specs=[pl.BlockSpec((1, C, N), lambda b, sref: (b, 0, 0))],
        out_specs=[
            pl.BlockSpec((1, C, GK), lambda b, sref: (b, 0, 0)),
            pl.BlockSpec((1, 3, G), lambda b, sref: (b, 0, 0)),
        ],
    )

    # Rough per-step VMEM budget (f32): in/out blocks (double buffered) plus the
    # (G,N) / (G*K,N) intermediates; clamped so it is valid on every generation.
    # TODO(synk): for very large N*G*K the (G*K, N) one-hot should be chunked over G.
    vmem_est = 4 * (2 * C * N + 2 * C * GK + 2 * 3 * G
                    + 6 * G * N + 3 * GK * N + G * GK) + (2 << 20)
    vmem_limit = int(min(max(vmem_est, 32 * 1024 * 1024), 64 * 1024 * 1024))

    groups_cm, centers_cm = pl.pallas_call(
        kernel,
        grid_spec=grid_spec,
        out_shape=(
            jax.ShapeDtypeStruct((B, C, GK), jnp.float32),
            jax.ShapeDtypeStruct((B, 3, G), jnp.float32),
        ),
        compiler_params=pltpu.CompilerParams(
            dimension_semantics=("parallel",),
            vmem_limit_bytes=vmem_limit,
        ),
    )(start, pts_cm)

    # Layout plumbing back to the PyTorch (B, G, K, C) / (B, G, 3) layout.
    groups = jnp.transpose(groups_cm, (0, 2, 1)).reshape(B, G, K, C)
    centers = jnp.transpose(centers_cm, (0, 2, 1))
    return groups, centers


if __name__ == "__main__":
    key = jax.random.PRNGKey(0)
    k_pts, k_start = jax.random.split(key)

    B, N, C = 2, 128, 6      # small point cloud with 3 extra feature channels
    G, K = 8, 16             # num_groups, group_size

    points = jax.random.normal(k_pts, (B, N, C), dtype=jnp.float32)

    # ---- kNN path (group_radius=None) ----
    groups, centers = pointcloud_grouping(
        points, num_groups=G, group_size=K, group_radius=None, key=k_start)
    jax.block_until_ready((groups, centers))
    assert groups.shape == (B, G, K, C) and centers.shape == (B, G, 3)
    # each center is itself a cloud point -> one neighbor has ~zero relative xyz
    # (exact with HIGHEST-precision gathers; loose tolerance guards any fallback)
    min_norm = jnp.min(jnp.sum(groups[..., :3] ** 2, axis=-1), axis=-1)
    assert bool(jnp.all(min_norm < 1e-2))

    # ---- ball-query path (group_radius set) ----
    groups_r, centers_r = pointcloud_grouping(
        points, num_groups=G, group_size=K, group_radius=1.5, key=k_start)
    jax.block_until_ready((groups_r, centers_r))
    assert groups_r.shape == (B, G, K, C)
    # all gathered neighbors lie inside the (normalized) unit radius
    assert bool(jnp.all(jnp.sum(groups_r[..., :3] ** 2, axis=-1) <= 1.0 + 5e-2))

    print("KERNEL_OK")
</pallas_src>

<mosaic_0001>
module attributes {stable_mosaic.version = 11 : i64} {
  func.func @_grouping_kernel(%arg0: i32, %arg1: memref<2xi32, #tpu.memory_space<smem>>, %arg2: memref<1x6x128xf32, #tpu.memory_space<vmem>>, %arg3: memref<1x6x128xf32, #tpu.memory_space<vmem>>, %arg4: memref<1x3x8xf32, #tpu.memory_space<vmem>>) attributes {dimension_semantics = [#tpu.dimension_semantics<parallel>], iteration_bounds = array<i64: 2>, scalar_prefetch = 1 : i64, scratch_operands = 0 : i64, tpu.core_type = #tpu.core_type<tc>, window_params = [{transform_indices = @transform_0, window_bounds = array<i64: 1, 6, 128>}, {transform_indices = @transform_1, window_bounds = array<i64: 1, 6, 128>}, {transform_indices = @transform_2, window_bounds = array<i64: 1, 3, 8>}]} {
    %c0 = arith.constant 0 : index
    %c0_0 = arith.constant 0 : index
    %c0_1 = arith.constant 0 : index
    %0 = vector.load %arg2[%c0, %c0_0, %c0_1] : memref<1x6x128xf32, #tpu.memory_space<vmem>>, vector<1x6x128xf32>
    %1 = vector.shape_cast %0 : vector<1x6x128xf32> to vector<6x128xf32>
    %2 = vector.extract_strided_slice %1 {offsets = [0, 0], sizes = [3, 128], strides = [1, 1]} : vector<6x128xf32> to vector<3x128xf32>
    %3 = tpu.iota {dimensions = array<i32: 1>} : vector<1x128xi32>
    %4 = tpu.iota {dimensions = array<i32: 1>} : vector<1x8xi32>
    %5 = arith.index_cast %arg0 : i32 to index
    %6 = memref.load %arg1[%5] : memref<2xi32, #tpu.memory_space<smem>>
    %cst = arith.constant 0.000000e+00 : f32
    %7 = vector.broadcast %cst : f32 to vector<3x8xf32>
    %cst_2 = arith.constant 0x7F800000 : f32
    %8 = vector.broadcast %cst_2 : f32 to vector<1x128xf32>
    %c0_i32 = arith.constant 0 : i32
    %c8_i32 = arith.constant 8 : i32
    %9 = arith.addi %c0_i32, %c8_i32 : i32
    %c1_i32 = arith.constant 1 : i32
    %10:3 = scf.for %arg5 = %c0_i32 to %9 step %c1_i32 iter_args(%arg6 = %7, %arg7 = %8, %arg8 = %6) -> (vector<3x8xf32>, vector<1x128xf32>, i32)  : i32 {
      %67 = vector.broadcast %arg8 : i32 to vector<1x128xi32>
      %68 = arith.cmpi eq, %3, %67 : vector<1x128xi32>
      %69 = arith.extui %68 : vector<1x128xi1> to vector<1x128xi32>
      %70 = arith.sitofp %69 : vector<1x128xi32> to vector<1x128xf32>
      %71 = vector.broadcast %70 : vector<1x128xf32> to vector<3x128xf32>
      %72 = arith.mulf %2, %71 : vector<3x128xf32>
      %cst_29 = arith.constant dense<0.000000e+00> : vector<3xf32>
      %73 = vector.multi_reduction <add>, %72, %cst_29 [1] : vector<3x128xf32> to vector<3xf32>
      %74 = vector.shape_cast %73 : vector<3xf32> to vector<3x1xf32>
      %75 = vector.broadcast %arg5 : i32 to vector<1x8xi32>
      %76 = arith.cmpi eq, %4, %75 : vector<1x8xi32>
      %77 = arith.extui %76 : vector<1x8xi1> to vector<1x8xi32>
      %78 = arith.sitofp %77 : vector<1x8xi32> to vector<1x8xf32>
      %79 = vector.broadcast %74 : vector<3x1xf32> to vector<3x8xf32>
      %80 = vector.broadcast %78 : vector<1x8xf32> to vector<3x8xf32>
      %81 = arith.mulf %79, %80 : vector<3x8xf32>
      %82 = arith.addf %arg6, %81 : vector<3x8xf32>
      %83 = vector.broadcast %74 : vector<3x1xf32> to vector<3x128xf32>
      %84 = arith.subf %2, %83 : vector<3x128xf32>
      %85 = arith.mulf %84, %84 : vector<3x128xf32>
      %cst_30 = arith.constant dense<0.000000e+00> : vector<128xf32>
      %86 = vector.multi_reduction <add>, %85, %cst_30 [0] : vector<3x128xf32> to vector<128xf32>
      %87 = vector.shape_cast %86 : vector<128xf32> to vector<1x128xf32>
      %88 = arith.minimumf %arg7, %87 : vector<1x128xf32>
      %89 = vector.shape_cast %88 : vector<1x128xf32> to vector<1x1x128xf32>
      %cst_31 = arith.constant dense<0xFF800000> : vector<1xf32>
      %90 = vector.multi_reduction <maximumf>, %89, %cst_31 [1, 2] : vector<1x1x128xf32> to vector<1xf32>
      %91 = vector.shape_cast %90 : vector<1xf32> to vector<1x1x1xf32>
      %92 = vector.extract %91[0, 0, 0] : f32 from vector<1x1x1xf32>
      %93 = vector.broadcast %92 : f32 to vector<1x128xf32>
      %94 = arith.cmpf oge, %88, %93 : vector<1x128xf32>
      %c128_i32 = arith.constant 128 : i32
      %95 = vector.broadcast %c128_i32 : i32 to vector<1x128xi32>
      %96 = arith.select %94, %3, %95 : vector<1x128xi1>, vector<1x128xi32>
      %97 = vector.shape_cast %96 : vector<1x128xi32> to vector<1x1x128xi32>
      %cst_32 = arith.constant dense<2147483647> : vector<1xi32>
      %98 = vector.multi_reduction <minsi>, %97, %cst_32 [1, 2] : vector<1x1x128xi32> to vector<1xi32>
      %99 = vector.shape_cast %98 : vector<1xi32> to vector<1x1x1xi32>
      %100 = vector.extract %99[0, 0, 0] : i32 from vector<1x1x1xi32>
      scf.yield %82, %88, %100 : vector<3x8xf32>, vector<1x128xf32>, i32
    }
    %c8_i32_3 = arith.constant 8 : i32
    %11 = arith.mulf %2, %2 : vector<3x128xf32>
    %cst_4 = arith.constant dense<0.000000e+00> : vector<128xf32>
    %12 = vector.multi_reduction <add>, %11, %cst_4 [0] : vector<3x128xf32> to vector<128xf32>
    %13 = vector.shape_cast %12 : vector<128xf32> to vector<1x128xf32>
    %14 = arith.mulf %10#0, %10#0 : vector<3x8xf32>
    %cst_5 = arith.constant dense<0.000000e+00> : vector<8xf32>
    %15 = vector.multi_reduction <add>, %14, %cst_5 [0] : vector<3x8xf32> to vector<8xf32>
    %16 = vector.shape_cast %15 : vector<8xf32> to vector<1x8xf32>
    %17 = tpu.concatenate %10#0, %16 in 0 : vector<3x8xf32>, vector<1x8xf32> -> vector<4x8xf32>
    %cst_6 = arith.constant -2.000000e+00 : f32
    %18 = vector.broadcast %cst_6 : f32 to vector<3x128xf32>
    %19 = arith.mulf %18, %2 : vector<3x128xf32>
    %cst_7 = arith.constant 1.000000e+00 : f32
    %20 = vector.broadcast %cst_7 : f32 to vector<1x128xf32>
    %21 = tpu.concatenate %19, %20 in 0 : vector<3x128xf32>, vector<1x128xf32> -> vector<4x128xf32>
    %cst_8 = arith.constant dense<0.000000e+00> : vector<8x128xf32>
    %22 = tpu.matmul %17, %21, %cst_8 {dimension_numbers = #tpu.dot_dimension_numbers<[0], [0], [1], [1], [0, 1, 1, 1], [], []>, precision = #tpu.contract_precision<fp32>} : vector<4x8xf32>, vector<4x128xf32>, vector<8x128xf32> -> vector<8x128xf32>
    %23 = vector.broadcast %13 : vector<1x128xf32> to vector<8x128xf32>
    %24 = arith.addf %23, %22 : vector<8x128xf32>
    %cst_9 = arith.constant -1.000000e+00 : f32
    %25 = vector.broadcast %cst_9 : f32 to vector<8x128xf32>
    %c0_i32_10 = arith.constant 0 : i32
    %c16_i32 = arith.constant 16 : i32
    %26 = arith.addi %c0_i32_10, %c16_i32 : i32
    %c1_i32_11 = arith.constant 1 : i32
    %27:2 = scf.for %arg5 = %c0_i32_10 to %26 step %c1_i32_11 iter_args(%arg6 = %24, %arg7 = %25) -> (vector<8x128xf32>, vector<8x128xf32>)  : i32 {
      %cst_29 = arith.constant dense<0x7F800000> : vector<8xf32>
      %67 = vector.multi_reduction <minimumf>, %arg6, %cst_29 [1] : vector<8x128xf32> to vector<8xf32>
      %68 = vector.shape_cast %67 : vector<8xf32> to vector<8x1xf32>
      %69 = vector.broadcast %68 : vector<8x1xf32> to vector<8x128xf32>
      %70 = arith.cmpf ole, %arg6, %69 : vector<8x128xf32>
      %c128_i32 = arith.constant 128 : i32
      %71 = vector.shape_cast %3 : vector<1x128xi32> to vector<1x128xi32>
      %72 = vector.broadcast %71 : vector<1x128xi32> to vector<8x128xi32>
      %73 = vector.broadcast %c128_i32 : i32 to vector<8x128xi32>
      %74 = arith.select %70, %72, %73 : vector<8x128xi1>, vector<8x128xi32>
      %cst_30 = arith.constant dense<2147483647> : vector<8xi32>
      %75 = vector.multi_reduction <minsi>, %74, %cst_30 [1] : vector<8x128xi32> to vector<8xi32>
      %76 = vector.shape_cast %75 : vector<8xi32> to vector<8x1xi32>
      %77 = vector.broadcast %3 : vector<1x128xi32> to vector<8x128xi32>
      %78 = vector.broadcast %76 : vector<8x1xi32> to vector<8x128xi32>
      %79 = arith.cmpi eq, %77, %78 : vector<8x128xi32>
      %80 = arith.sitofp %arg5 : i32 to f32
      %81 = vector.broadcast %80 : f32 to vector<8x128xf32>
      %82 = arith.select %79, %81, %arg7 : vector<8x128xi1>, vector<8x128xf32>
      %cst_31 = arith.constant 0x7F800000 : f32
      %83 = vector.broadcast %cst_31 : f32 to vector<8x128xf32>
      %84 = arith.select %79, %83, %arg6 : vector<8x128xi1>, vector<8x128xf32>
      scf.yield %84, %82 : vector<8x128xf32>, vector<8x128xf32>
    }
    %c16_i32_12 = arith.constant 16 : i32
    %28 = tpu.iota {dimensions = array<i32: 0>} : vector<8x128xi32>
    %29 = tpu.iota {dimensions = array<i32: 1>} : vector<8x128xi32>
    %c16_i32_13 = arith.constant 16 : i32
    %30 = vector.broadcast %c16_i32_13 : i32 to vector<8x128xi32>
    %31 = arith.muli %28, %30 : vector<8x128xi32>
    %32 = arith.cmpi sge, %29, %31 : vector<8x128xi32>
    %c1_i32_14 = arith.constant 1 : i32
    %33 = vector.broadcast %c1_i32_14 : i32 to vector<8x128xi32>
    %34 = arith.addi %28, %33 : vector<8x128xi32>
    %c16_i32_15 = arith.constant 16 : i32
    %35 = vector.broadcast %c16_i32_15 : i32 to vector<8x128xi32>
    %36 = arith.muli %34, %35 : vector<8x128xi32>
    %37 = arith.cmpi slt, %29, %36 : vector<8x128xi32>
    %38 = arith.andi %32, %37 : vector<8x128xi1>
    %39 = arith.extui %38 : vector<8x128xi1> to vector<8x128xi32>
    %40 = arith.sitofp %39 : vector<8x128xi32> to vector<8x128xf32>
    %cst_16 = arith.constant dense<0.000000e+00> : vector<128x128xf32>
    %41 = tpu.matmul %40, %27#1, %cst_16 {dimension_numbers = #tpu.dot_dimension_numbers<[0], [0], [1], [1], [0, 1, 1, 1], [], []>, precision = #tpu.contract_precision<fp32>} : vector<8x128xf32>, vector<8x128xf32>, vector<128x128xf32> -> vector<128x128xf32>
    %42 = tpu.iota {dimensions = array<i32: 0>} : vector<128x1xi32>
    %43 = arith.sitofp %42 : vector<128x1xi32> to vector<128x1xf32>
    %cst_17 = arith.constant 5.000000e-01 : f32
    %44 = vector.broadcast %cst_17 : f32 to vector<128x1xf32>
    %45 = arith.addf %43, %44 : vector<128x1xf32>
    %cst_18 = arith.constant 6.250000e-02 : f32
    %46 = vector.broadcast %cst_18 : f32 to vector<128x1xf32>
    %47 = arith.mulf %45, %46 : vector<128x1xf32>
    %48 = math.floor %47 : vector<128x1xf32>
    %cst_19 = arith.constant 1.600000e+01 : f32
    %49 = vector.broadcast %cst_19 : f32 to vector<128x1xf32>
    %50 = arith.mulf %48, %49 : vector<128x1xf32>
    %51 = arith.subf %43, %50 : vector<128x1xf32>
    %52 = vector.broadcast %51 : vector<128x1xf32> to vector<128x128xf32>
    %53 = arith.cmpf oeq, %41, %52 : vector<128x128xf32>
    %54 = arith.extui %53 : vector<128x128xi1> to vector<128x128xi32>
    %55 = arith.sitofp %54 : vector<128x128xi32> to vector<128x128xf32>
    %cst_20 = arith.constant dense<0.000000e+00> : vector<6x128xf32>
    %56 = tpu.matmul %1, %55, %cst_20 {dimension_numbers = #tpu.dot_dimension_numbers<[1], [1], [0], [0], [0, 0, 1, 0], [], []>, precision = #tpu.contract_precision<fp32>} : vector<6x128xf32>, vector<128x128xf32>, vector<6x128xf32> -> vector<6x128xf32>
    %cst_21 = arith.constant dense<0.000000e+00> : vector<3x128xf32>
    %57 = tpu.matmul %10#0, %40, %cst_21 {dimension_numbers = #tpu.dot_dimension_numbers<[1], [0], [0], [1], [0, 0, 1, 1], [], []>, precision = #tpu.contract_precision<fp32>} : vector<3x8xf32>, vector<8x128xf32>, vector<3x128xf32> -> vector<3x128xf32>
    %cst_22 = arith.constant 0.000000e+00 : f32
    %58 = vector.broadcast %cst_22 : f32 to vector<3x128xf32>
    %59 = tpu.concatenate %57, %58 in 0 : vector<3x128xf32>, vector<3x128xf32> -> vector<6x128xf32>
    %60 = arith.subf %56, %59 : vector<6x128xf32>
    %c0_23 = arith.constant 0 : index
    %c0_24 = arith.constant 0 : index
    %c0_25 = arith.constant 0 : index
    %61 = vector.load %arg3[%c0_23, %c0_24, %c0_25] : memref<1x6x128xf32, #tpu.memory_space<vmem>>, vector<1x6x128xf32>
    %62 = vector.shape_cast %61 : vector<1x6x128xf32> to vector<6x128xf32>
    %63 = vector.shape_cast %60 : vector<6x128xf32> to vector<1x6x128xf32>
    tpu.vector_store %arg3[%c0_23, %c0_24, %c0_25], %63 {strides = array<i32>} : memref<1x6x128xf32, #tpu.memory_space<vmem>>, vector<1x6x128xf32>,
    %c0_26 = arith.constant 0 : index
    %c0_27 = arith.constant 0 : index
    %c0_28 = arith.constant 0 : index
    %64 = vector.load %arg4[%c0_26, %c0_27, %c0_28] : memref<1x3x8xf32, #tpu.memory_space<vmem>>, vector<1x3x8xf32>
    %65 = vector.shape_cast %64 : vector<1x3x8xf32> to vector<3x8xf32>
    %66 = vector.shape_cast %10#0 : vector<3x8xf32> to vector<1x3x8xf32>
    tpu.vector_store %arg4[%c0_26, %c0_27, %c0_28], %66 {strides = array<i32>} : memref<1x3x8xf32, #tpu.memory_space<vmem>>, vector<1x3x8xf32>,
    return
  }
  func.func @transform_0(%arg0: i32, %arg1: memref<2xi32, #tpu.memory_space<smem>>) -> (i32, i32, i32) {
    %c0_i32 = arith.constant 0 : i32
    %c0_i32_0 = arith.constant 0 : i32
    %c0_i32_1 = arith.constant 0 : i32
    return %arg0, %c0_i32, %c0_i32_0 : i32, i32, i32
  }
  func.func @transform_1(%arg0: i32, %arg1: memref<2xi32, #tpu.memory_space<smem>>) -> (i32, i32, i32) {
    %c0_i32 = arith.constant 0 : i32
    %c0_i32_0 = arith.constant 0 : i32
    %c0_i32_1 = arith.constant 0 : i32
    return %arg0, %c0_i32, %c0_i32_0 : i32, i32, i32
  }
  func.func @transform_2(%arg0: i32, %arg1: memref<2xi32, #tpu.memory_space<smem>>) -> (i32, i32, i32) {
    %c0_i32 = arith.constant 0 : i32
    %c0_i32_0 = arith.constant 0 : i32
    %c0_i32_1 = arith.constant 0 : i32
    return %arg0, %c0_i32, %c0_i32_0 : i32, i32, i32
  }
}

</mosaic_0001>

<llo_original>
// kernel: tpu_custom_call.1
$region0: #{tpu_custom_call.1}
  #allocation0 [shape = 'u32[]', space=smem, size = 0x4, offset = 0x4, fixed_abs, tag = 'smem constant byte address 0x4 - core index']
  #allocation1 [shape = 'u32[144,128]{1,0:T(1,128)}', space=vmem, size = 0x12000, scoped, tag = 'internal scratch']
  #allocation2 [shape = 's32[1]{0}', space=sflag, size = 0x4, scoped, tag = 'scoped memory for tpu_custom_call.1']
  #allocation3 [shape = 'u8[512]{0}', space=smem, size = 0x200, scoped, tag = 'prefetched SMEM operand 0']
  %s0 = inlined_call_operand.vmem [shape: s32[2], index: 0, kind: input, shape index: {}]
  %s1 = inlined_call_operand.vmem [shape: f32[2,6,128], index: 1, kind: input, shape index: {}]
  %s2 = inlined_call_operand.vmem [shape: f32[2,6,128], index: 2, kind: output, shape index: {0}]
  %s3 = inlined_call_operand.vmem [shape: f32[2,3,8], index: 3, kind: output, shape index: {1}]
  %4 = xla_tuple %s2, %s3
  %s5 = sld [smem:[#allocation0]]
  $region59: #{tpu_custom_call.1} parent=0
    _
  %s7 = ssub.s32 1, %s5
  %s8 = scalar_select 0, %s7, %s5
  %s9 = sshll.u32 %s0, 4
  %s10 = int_to_ptr.vmem [resolvable:$true] %s9
  %12 = dma.vmem_to_smem %s10, 16, [#allocation3], [#allocation2]
  %13 = dma.done [#allocation2], 16
  %14 = sfence
  loop: start=0, step=1, limit=4
  $region2: #{tpu_custom_call.1} parent=0 // loop_pre_header
    _
  $region3: #{tpu_custom_call.1} parent=0 // loop_header
    %s16 = sphi 0, %s20
    %p17 = scmp.ge.s32.totalorder %s16, 4
    %s26 = sphi 0, %s28
    %s29 = sphi 0, %s26
    %s30 = sphi 0, %s29
    %s46 = sphi 0, %s30
    %s52 = sphi 0, %s54
    %s55 = sphi 0, %s52
    %s56 = sphi 0, %s55
    %s72 = sphi 0, %s56
    %s78 = sphi 0, %s80
    %s81 = sphi 0, %s78
    %s82 = sphi 0, %s81
    %s98 = sphi 0, %s82
  $region4: #{tpu_custom_call.1} parent=0 // loop_header_branch
    %19 = sbr.rel (%p17) target = $region8
  $region5: #{tpu_custom_call.1} parent=0 // loop_body
    %s21 = ssub.s32 %s16, 1
    %s22 = ssub.s32 %s16, 2
    %s23 = sadd.s32 %s16, 1
    %s24 = ssub.s32 %s16, %s23
    %p25 = scmp.eq.s32.totalorder %s24, 0
    %s27 = sadd.s32 %s26, 1
    %s28 = scalar_select %p25, %s26, %s27
    %p31 = pneg %p25
    %p32 = scmp.eq.s32.totalorder %s16, 1
    %p33 = por %p31, %p32
    %p34 = scmp.ne.s32.totalorder %s26, %s29
    %p35 = scmp.eq.s32.totalorder %s16, 0
    %p36 = por %p34, %p35
    %p37 = scmp.ne.s32.totalorder %s26, %s29
    %p38 = scmp.eq.s32.totalorder %s21, 1
    %p39 = por %p37, %p38
    %p40 = scmp.ne.s32.totalorder %s29, %s30
    %p41 = scmp.eq.s32.totalorder %s21, 0
    %p42 = por %p40, %p41
    %p43 = scmp.ne.s32.totalorder %s29, %s30
    %p44 = scmp.eq.s32.totalorder %s22, 1
    %p45 = por %p43, %p44
    %p47 = scmp.ne.s32.totalorder %s30, %s46
    %p48 = scmp.eq.s32.totalorder %s22, 0
    %p49 = por %p47, %p48
    %s50 = ssub.s32 %s16, %s23
    %p51 = scmp.eq.s32.totalorder %s50, 0
    %s53 = sadd.s32 %s52, 1
    %s54 = scalar_select %p51, %s52, %s53
    %p57 = pneg %p51
    %p58 = scmp.eq.s32.totalorder %s16, 1
    %p59 = por %p57, %p58
    %p60 = scmp.ne.s32.totalorder %s52, %s55
    %p61 = scmp.eq.s32.totalorder %s16, 0
    %p62 = por %p60, %p61
    %p63 = scmp.ne.s32.totalorder %s52, %s55
    %p64 = scmp.eq.s32.totalorder %s21, 1
    %p65 = por %p63, %p64
    %p66 = scmp.ne.s32.totalorder %s55, %s56
    %p67 = scmp.eq.s32.totalorder %s21, 0
    %p68 = por %p66, %p67
    %p69 = scmp.ne.s32.totalorder %s55, %s56
    %p70 = scmp.eq.s32.totalorder %s22, 1
    %p71 = por %p69, %p70
    %p73 = scmp.ne.s32.totalorder %s56, %s72
    %p74 = scmp.eq.s32.totalorder %s22, 0
    %p75 = por %p73, %p74
    %s76 = ssub.s32 %s16, %s23
    %p77 = scmp.eq.s32.totalorder %s76, 0
    %s79 = sadd.s32 %s78, 1
    %s80 = scalar_select %p77, %s78, %s79
    %p83 = pneg %p77
    %p84 = scmp.eq.s32.totalorder %s16, 1
    %p85 = por %p83, %p84
    %p86 = scmp.ne.s32.totalorder %s78, %s81
    %p87 = scmp.eq.s32.totalorder %s16, 0
    %p88 = por %p86, %p87
    %p89 = scmp.ne.s32.totalorder %s78, %s81
    %p90 = scmp.eq.s32.totalorder %s21, 1
    %p91 = por %p89, %p90
    %p92 = scmp.ne.s32.totalorder %s81, %s82
    %p93 = scmp.eq.s32.totalorder %s21, 0
    %p94 = por %p92, %p93
    %p95 = scmp.ne.s32.totalorder %s81, %s82
    %p96 = scmp.eq.s32.totalorder %s22, 1
    %p97 = por %p95, %p96
    %p99 = scmp.ne.s32.totalorder %s82, %s98
    %p100 = scmp.eq.s32.totalorder %s22, 0
    %p101 = por %p99, %p100
    %p102 = scmp.le.s32.totalorder 1, %s16
    %p103 = scmp.lt.s32.totalorder %s16, 3
    %p104 = pnand %p102, %p103
    %p105 = pneg %p104
    // Predicated region
    $region9: #{tpu_custom_call.1} parent=5 // pred_check
      _
    $region10: #{tpu_custom_call.1} parent=5 // pred_check_branch
      %107 = sbr.rel (%p104) target = $region12
    $region11: #{tpu_custom_call.1} parent=5 // pred_region
      %s108 = ssub.s32 %s16, 1
    $region12: #{tpu_custom_call.1} parent=5 // pred_fallthru
      _
    %p109 = scmp.lt.s32.totalorder %s16, 2
    // Predicated region
    $region13: #{tpu_custom_call.1} parent=5 // pred_check
      %p110 = pneg %p109
    $region14: #{tpu_custom_call.1} parent=5 // pred_check_branch
      %112 = sbr.rel (%p110) target = $region16
    $region15: #{tpu_custom_call.1} parent=5 // pred_region
      // Predicated region
      $region17: #{tpu_custom_call.1} parent=15 // pred_check
        %p113 = pneg %p36
      $region18: #{tpu_custom_call.1} parent=15 // pred_check_branch
        %115 = sbr.rel (%p113) target = $region20
      $region19: #{tpu_custom_call.1} parent=15 // pred_region
        %p116 = scmp.lt.s32.totalorder %s16, 1
        %s117 = scalar_select %p116, %s16, 1
        %s118 = smul.addr %s117, 8
        %s119 = scalar_lea.vmem %s1, %s118
      $region20: #{tpu_custom_call.1} parent=15 // pred_fallthru
        _
    $region16: #{tpu_custom_call.1} parent=5 // pred_fallthru
      _
    %p120 = scmp.le.s32.totalorder 1, %s16
    %p121 = scmp.lt.s32.totalorder %s16, 3
    %p122 = pnand %p120, %p121
    %p123 = pneg %p122
    // Predicated region
    $region21: #{tpu_custom_call.1} parent=5 // pred_check
      _
    $region22: #{tpu_custom_call.1} parent=5 // pred_check_branch
      %125 = sbr.rel (%p122) target = $region24
    $region23: #{tpu_custom_call.1} parent=5 // pred_region
      %s126 = ssub.s32 %s16, 1
      %p127 = scmp.lt.s32.totalorder %s21, 1
      %s128 = scalar_select %p127, %s21, 1
      %s129 = smul.addr %s128, 8
      %s130 = scalar_lea.vmem %s1, %s129
      %p131 = pneg %p42
      %p132 = pneg %p39
      %p133 = pneg %p68
      %p134 = pneg %p65
      %p135 = scmp.lt.s32.totalorder %s21, 1
      %s136 = scalar_select %p135, %s21, 1
      %s137 = smul.addr %s136, 8
      %s138 = scalar_lea.vmem %s2, %s137
      %p139 = pneg %p94
      %p140 = pneg %p91
      %p141 = scmp.lt.s32.totalorder %s21, 1
      %s142 = scalar_select %p141, %s21, 1
      %s143 = smul.addr %s142, 4
      %s144 = scalar_lea.vmem %s3, %s143
      %p145 = scmp.lt.s32.totalorder %s21, 1
      %s146 = scalar_select %p145, %s21, 1
      %s147 = smul.addr %s146, 8
      %s148 = scalar_lea.vmem %s1, %s147
      %p149 = scmp.lt.s32.totalorder %s21, 1
      %s150 = scalar_select %p149, %s21, 1
      %s151 = smul.addr %s150, 8
      %s152 = scalar_lea.vmem %s2, %s151
      %p153 = scmp.lt.s32.totalorder %s21, 1
      %s154 = scalar_select %p153, %s21, 1
      %s155 = smul.addr %s154, 4
      %s156 = scalar_lea.vmem %s3, %s155
      %v157 = vld [vmem:[%s148] sm:$0x3f]
      %v158 = vlaneseq
      %v159 = vand.u32 %v158, 127
      %s160 = sld [smem:[#allocation3 + %s21]]
      loop: start=0, step=1, limit=8
      $region25: #{tpu_custom_call.1} parent=23 // loop_pre_header
        _
      $region26: #{tpu_custom_call.1} parent=23 // loop_header
        %s162 = sphi 0, %s166
        %p163 = scmp.ge.s32.totalorder %s162, 8
        %v167 = vphi 0.0, %v184
        %v168 = vphi inf, %v194
        %s169 = sphi %s160, %s215
      $region27: #{tpu_custom_call.1} parent=23 // loop_header_branch
        %165 = sbr.rel (%p163) target = $region31
      $region28: #{tpu_custom_call.1} parent=23 // loop_body
        %v170 = vstv %s169
        %vm171 = vcmp.eq.s32.totalorder %v159, %v170
        %v172 = vsel %vm171, 1, 0
        %v173 = vcvt.s32.f32 %v172
        %v174 = vmul.f32 %v157, %v173
        %vm175 = vcmask 1042432
        %v176 = vsel %vm175, %v174, 0.0
        %177 = vadd.xlane.f32.xlu0 %v176
        %v178 = vpop.xlane.xlu0 %177
        %v179 = vstv %s162
        %vm180 = vcmp.eq.s32.totalorder %v159, %v179
        %v181 = vsel %vm180, 1, 0
        %v182 = vcvt.s32.f32 %v181
        %v183 = vmul.f32 %v178, %v182
        %v184 = vadd.f32 %v167, %v183
        %v185 = vsub.f32 %v157, %v178
        %v186 = vmul.f32 %v185, %v185
        %v187 = vsel %vm175, %v186, 0.0
        %v188 = vrot.slane %v187, 4
        %v189 = vadd.f32 %v187, %v188
        %v190 = vrot.slane %v189, 2
        %v191 = vadd.f32 %v189, %v190
        %v192 = vrot.slane %v191, 1
        %v193 = vadd.f32 %v191, %v192
        %v194 = vmin.f32 %v168, %v193
        %195 = vmax.xlane.f32.xlu0 %v194
        %v196 = vpop.xlane.xlu0 %195
        %s197 = vtos %v196
        %v198 = vstv %s197
        %vm199 = vcmp.ge.f32.partialorder %v194, %v198
        %v200 = vsel %vm199, %v159, 128
        %v201 = vand.u32 %v200, 65535
        %v202 = vshra.s32 %v200, 16
        %v203 = vcvt.s32.f32 %v201
        %v204 = vcvt.s32.f32 %v202
        %205 = vmin.xlane.f32.xlu0 %v204
        %v206 = vpop.xlane.xlu0 %205
        %vm207 = vcmp.eq.f32.partialorder %v204, %v206
        %v208 = vsel %vm207, %v203, inf
        %209 = vmin.xlane.f32.xlu0 %v208
        %v210 = vpop.xlane.xlu0 %209
        %v211 = vcvt.f32.s32 %v210
        %v212 = vcvt.f32.s32 %v206
        %v213 = vshll.u32 %v212, 16
        %v214 = vadd.s32 %v213, %v211
        %s215 = vtos %v214
      $region29: #{tpu_custom_call.1} parent=23 // loop_footer
        %s166 = sadd.s32 1, %s162
      $region30: #{tpu_custom_call.1} parent=23 // loop_footer_branch
        %161 = sbr.rel target = $region26
      $region31: #{tpu_custom_call.1} parent=23 // loop_exit
        _
      %v216 = vmul.f32 %v157, %v157
      %vm217 = vcmask 1042432
      %v218 = vsel %vm217, %v216, 0.0
      %v219 = vrot.slane %v218, 4
      %v220 = vadd.f32 %v218, %v219
      %v221 = vrot.slane %v220, 2
      %v222 = vadd.f32 %v220, %v221
      %v223 = vrot.slane %v222, 1
      %v224 = vadd.f32 %v222, %v223
      %v225 = vmul.f32 %v167, %v167
      %vm226 = vcmask 59392
      %v227 = vsel %vm226, %v225, 0.0
      %v228 = vrot.slane %v227, 4
      %v229 = vadd.f32 %v227, %v228
      %v230 = vrot.slane %v229, 2
      %v231 = vadd.f32 %v229, %v230
      %v232 = vrot.slane %v231, 1
      %v233 = vadd.f32 %v231, %v232
      %v234 = vsel %vm217, %v167, %v233
      %v235 = vmul.f32 %v157, -2.0
      %v236 = vsel %vm217, %v235, 1.0
      %237 = vxpose.xlu0.b32.start [1/16] %v234, 128
      %238 = vxpose.xlu0.b32.cont [2/16] 0.0, 128
      %239 = vxpose.xlu0.b32.cont [3/16] 0.0, 128
      %240 = vxpose.xlu0.b32.cont [4/16] 0.0, 128
      %241 = vxpose.xlu0.b32.cont [5/16] 0.0, 128
      %242 = vxpose.xlu0.b32.cont [6/16] 0.0, 128
      %243 = vxpose.xlu0.b32.cont [7/16] 0.0, 128
      %244 = vxpose.xlu0.b32.cont [8/16] 0.0, 128
      %245 = vxpose.xlu0.b32.cont [9/16] 0.0, 128
      %246 = vxpose.xlu0.b32.cont [10/16] 0.0, 128
      %247 = vxpose.xlu0.b32.cont [11/16] 0.0, 128
      %248 = vxpose.xlu0.b32.cont [12/16] 0.0, 128
      %249 = vxpose.xlu0.b32.cont [13/16] 0.0, 128
      %250 = vxpose.xlu0.b32.cont [14/16] 0.0, 128
      %251 = vxpose.xlu0.b32.cont [15/16] 0.0, 128
      %252 = vxpose.xlu0.b32.end [16/16] 0.0, 128
      %v253 = vpop.trf.xlu0
      %v254 = vpop.trf.xlu0
      %v255 = vpop.trf.xlu0
      %v256 = vpop.trf.xlu0
      %v257 = vpop.trf.xlu0
      %v258 = vpop.trf.xlu0
      %v259 = vpop.trf.xlu0
      %v260 = vpop.trf.xlu0
      %v261 = vpop.trf.xlu0
      %v262 = vpop.trf.xlu0
      %v263 = vpop.trf.xlu0
      %v264 = vpop.trf.xlu0
      %v265 = vpop.trf.xlu0
      %v266 = vpop.trf.xlu0
      %v267 = vpop.trf.xlu0
      %v268 = vpop.trf.xlu0
      %vm269 = vcmask 31744
      %v271 = vsel %vm269, %v253, 0
      %vm273 = vcmask 1043456
      %v275 = vsel %vm273, %v236, 0
      %277 = vmatprep.subr.mxu0 0.0
      %v278 = vand.u32 %v275, 4294901760
      %279 = vmatpush1.msra.mxu0 %v278
      %280 = vmatprep.subr.mxu0 0.0
      %281 = vmatpush1.msra.mxu0 0.0
      %282 = vmatprep.subr.mxu0 0.0
      %283 = vmatpush1.msra.mxu0 0.0
      %284 = vmatprep.subr.mxu0 0.0
      %285 = vmatpush1.msra.mxu0 0.0
      %286 = vmatprep.subr.mxu0 0.0
      %287 = vmatpush1.msra.mxu0 0.0
      %288 = vmatprep.subr.mxu0 0.0
      %289 = vmatpush1.msra.mxu0 0.0
      %290 = vmatprep.subr.mxu0 0.0
      %291 = vmatpush1.msra.mxu0 0.0
      %292 = vmatprep.subr.mxu0 0.0
      %293 = vmatpush1.msra.mxu0 0.0
      %294 = vmatprep.subr.mxu0 0.0
      %295 = vmatpush1.msra.mxu0 0.0
      %296 = vmatprep.subr.mxu0 0.0
      %297 = vmatpush1.msra.mxu0 0.0
      %298 = vmatprep.subr.mxu0 0.0
      %299 = vmatpush1.msra.mxu0 0.0
      %300 = vmatprep.subr.mxu0 0.0
      %301 = vmatpush1.msra.mxu0 0.0
      %302 = vmatprep.subr.mxu0 0.0
      %303 = vmatpush1.msra.mxu0 0.0
      %304 = vmatprep.subr.mxu0 0.0
      %305 = vmatpush1.msra.mxu0 0.0
      %306 = vmatprep.subr.mxu0 0.0
      %307 = vmatpush1.msra.mxu0 0.0
      %308 = vmatprep.subr.mxu0 0.0
      %309 = vmatpush1.msra.mxu0 0.0
      %310 = vmatprep.subr.mxu0 0.0
      %311 = vmatpush1.msra.mxu0 0.0
      %312 = vmatprep.subr.mxu0 0.0
      %313 = vmatpush1.msra.mxu0 0.0
      %314 = vmatprep.subr.mxu0 0.0
      %315 = vmatpush1.msra.mxu0 0.0
      %316 = vmatprep.subr.mxu0 0.0
      %317 = vmatpush1.msra.mxu0 0.0
      %318 = vmatprep.subr.mxu0 0.0
      %319 = vmatpush1.msra.mxu0 0.0
      %320 = vmatprep.subr.mxu0 0.0
      %321 = vmatpush1.msra.mxu0 0.0
      %322 = vmatprep.subr.mxu0 0.0
      %323 = vmatpush1.msra.mxu0 0.0
      %324 = vmatprep.subr.mxu0 0.0
      %325 = vmatpush1.msra.mxu0 0.0
      %326 = vmatprep.subr.mxu0 0.0
      %327 = vmatpush1.msra.mxu0 0.0
      %328 = vmatprep.subr.mxu0 0.0
      %329 = vmatpush1.msra.mxu0 0.0
      %330 = vmatprep.subr.mxu0 0.0
      %331 = vmatpush1.msra.mxu0 0.0
      %332 = vmatprep.subr.mxu0 0.0
      %333 = vmatpush1.msra.mxu0 0.0
      %334 = vmatprep.subr.mxu0 0.0
      %335 = vmatpush1.msra.mxu0 0.0
      %336 = vmatprep.subr.mxu0 0.0
      %337 = vmatpush1.msra.mxu0 0.0
      %338 = vmatprep.subr.mxu0 0.0
      %339 = vmatpush1.msra.mxu0 0.0
      %340 = vmatprep.subr.mxu0 0.0
      %341 = vmatpush1.msra.mxu0 0.0
      %342 = vmatprep.mubr.f32.mxu0 0.0
      %v343 = vand.u32 %v271, 4294901760
      %v344 = vsub.f32 %v271, %v343
      %v345 = vand.u32 %v344, 4294901760
      %v346 = vsub.f32 %v344, %v345
      %v347 = vand.u32 %v346, 4294901760
      %348 = vmatmul.mubr.f32.gmra.mrb[0].mxu0 %v347
      %v349 = vpop.f32.mrb[0].mxu0
      %v350 = vadd.f32 0.0, %v349
      %v351 = vpop.f32.mrb[0].mxu0
      %352 = vdwg.mxu0
      %353 = vmatprep.subr.mxu0 0.0
      %v354 = vand.u32 %v275, 4294901760
      %v355 = vsub.f32 %v275, %v354
      %v356 = vand.u32 %v355, 4294901760
      %v357 = vsub.f32 %v355, %v356
      %v358 = vand.u32 %v357, 4294901760
      %359 = vmatpush1.msra.mxu0 %v358
      %360 = vmatprep.subr.mxu0 0.0
      %361 = vmatpush1.msra.mxu0 0.0
      %362 = vmatprep.subr.mxu0 0.0
      %363 = vmatpush1.msra.mxu0 0.0
      %364 = vmatprep.subr.mxu0 0.0
      %365 = vmatpush1.msra.mxu0 0.0
      %366 = vmatprep.subr.mxu0 0.0
      %367 = vmatpush1.msra.mxu0 0.0
      %368 = vmatprep.subr.mxu0 0.0
      %369 = vmatpush1.msra.mxu0 0.0
      %370 = vmatprep.subr.mxu0 0.0
      %371 = vmatpush1.msra.mxu0 0.0
      %372 = vmatprep.subr.mxu0 0.0
      %373 = vmatpush1.msra.mxu0 0.0
      %374 = vmatprep.subr.mxu0 0.0
      %375 = vmatpush1.msra.mxu0 0.0
      %376 = vmatprep.subr.mxu0 0.0
      %377 = vmatpush1.msra.mxu0 0.0
      %378 = vmatprep.subr.mxu0 0.0
      %379 = vmatpush1.msra.mxu0 0.0
      %380 = vmatprep.subr.mxu0 0.0
      %381 = vmatpush1.msra.mxu0 0.0
      %382 = vmatprep.subr.mxu0 0.0
      %383 = vmatpush1.msra.mxu0 0.0
      %384 = vmatprep.subr.mxu0 0.0
      %385 = vmatpush1.msra.mxu0 0.0
      %386 = vmatprep.subr.mxu0 0.0
      %387 = vmatpush1.msra.mxu0 0.0
      %388 = vmatprep.subr.mxu0 0.0
      %389 = vmatpush1.msra.mxu0 0.0
      %390 = vmatprep.subr.mxu0 0.0
      %391 = vmatpush1.msra.mxu0 0.0
      %392 = vmatprep.subr.mxu0 0.0
      %393 = vmatpush1.msra.mxu0 0.0
      %394 = vmatprep.subr.mxu0 0.0
      %395 = vmatpush1.msra.mxu0 0.0
      %396 = vmatprep.subr.mxu0 0.0
      %397 = vmatpush1.msra.mxu0 0.0
      %398 = vmatprep.subr.mxu0 0.0
      %399 = vmatpush1.msra.mxu0 0.0
      %400 = vmatprep.subr.mxu0 0.0
      %401 = vmatpush1.msra.mxu0 0.0
      %402 = vmatprep.subr.mxu0 0.0
      %403 = vmatpush1.msra.mxu0 0.0
      %404 = vmatprep.subr.mxu0 0.0
      %405 = vmatpush1.msra.mxu0 0.0
      %406 = vmatprep.subr.mxu0 0.0
      %407 = vmatpush1.msra.mxu0 0.0
      %408 = vmatprep.subr.mxu0 0.0
      %409 = vmatpush1.msra.mxu0 0.0
      %410 = vmatprep.subr.mxu0 0.0
      %411 = vmatpush1.msra.mxu0 0.0
      %412 = vmatprep.subr.mxu0 0.0
      %413 = vmatpush1.msra.mxu0 0.0
      %414 = vmatprep.subr.mxu0 0.0
      %415 = vmatpush1.msra.mxu0 0.0
      %416 = vmatprep.subr.mxu0 0.0
      %417 = vmatpush1.msra.mxu0 0.0
      %418 = vmatprep.subr.mxu0 0.0
      %419 = vmatpush1.msra.mxu0 0.0
      %420 = vmatprep.subr.mxu0 0.0
      %421 = vmatpush1.msra.mxu0 0.0
      %422 = vmatprep.mubr.f32.mxu0 0.0
      %v423 = vand.u32 %v271, 4294901760
      %424 = vmatmul.mubr.f32.gmra.mrb[0].mxu0 %v423
      %v425 = vpop.f32.mrb[0].mxu0
      %v426 = vadd.f32 %v350, %v425
      %v427 = vpop.f32.mrb[0].mxu0
      %428 = vdwg.mxu0
      %429 = vmatprep.subr.mxu0 0.0
      %v430 = vand.u32 %v275, 4294901760
      %v431 = vsub.f32 %v275, %v430
      %432 = vmatpush1.msra.mxu0 %v431
      %433 = vmatprep.subr.mxu0 0.0
      %434 = vmatpush1.msra.mxu0 0.0
      %435 = vmatprep.subr.mxu0 0.0
      %436 = vmatpush1.msra.mxu0 0.0
      %437 = vmatprep.subr.mxu0 0.0
      %438 = vmatpush1.msra.mxu0 0.0
      %439 = vmatprep.subr.mxu0 0.0
      %440 = vmatpush1.msra.mxu0 0.0
      %441 = vmatprep.subr.mxu0 0.0
      %442 = vmatpush1.msra.mxu0 0.0
      %443 = vmatprep.subr.mxu0 0.0
      %444 = vmatpush1.msra.mxu0 0.0
      %445 = vmatprep.subr.mxu0 0.0
      %446 = vmatpush1.msra.mxu0 0.0
      %447 = vmatprep.subr.mxu0 0.0
      %448 = vmatpush1.msra.mxu0 0.0
      %449 = vmatprep.subr.mxu0 0.0
      %450 = vmatpush1.msra.mxu0 0.0
      %451 = vmatprep.subr.mxu0 0.0
      %452 = vmatpush1.msra.mxu0 0.0
      %453 = vmatprep.subr.mxu0 0.0
      %454 = vmatpush1.msra.mxu0 0.0
      %455 = vmatprep.subr.mxu0 0.0
      %456 = vmatpush1.msra.mxu0 0.0
      %457 = vmatprep.subr.mxu0 0.0
      %458 = vmatpush1.msra.mxu0 0.0
      %459 = vmatprep.subr.mxu0 0.0
      %460 = vmatpush1.msra.mxu0 0.0
      %461 = vmatprep.subr.mxu0 0.0
      %462 = vmatpush1.msra.mxu0 0.0
      %463 = vmatprep.subr.mxu0 0.0
      %464 = vmatpush1.msra.mxu0 0.0
      %465 = vmatprep.subr.mxu0 0.0
      %466 = vmatpush1.msra.mxu0 0.0
      %467 = vmatprep.subr.mxu0 0.0
      %468 = vmatpush1.msra.mxu0 0.0
      %469 = vmatprep.subr.mxu0 0.0
      %470 = vmatpush1.msra.mxu0 0.0
      %471 = vmatprep.subr.mxu0 0.0
      %472 = vmatpush1.msra.mxu0 0.0
      %473 = vmatprep.subr.mxu0 0.0
      %474 = vmatpush1.msra.mxu0 0.0
      %475 = vmatprep.subr.mxu0 0.0
      %476 = vmatpush1.msra.mxu0 0.0
      %477 = vmatprep.subr.mxu0 0.0
      %478 = vmatpush1.msra.mxu0 0.0
      %479 = vmatprep.subr.mxu0 0.0
      %480 = vmatpush1.msra.mxu0 0.0
      %481 = vmatprep.subr.mxu0 0.0
      %482 = vmatpush1.msra.mxu0 0.0
      %483 = vmatprep.subr.mxu0 0.0
      %484 = vmatpush1.msra.mxu0 0.0
      %485 = vmatprep.subr.mxu0 0.0
      %486 = vmatpush1.msra.mxu0 0.0
      %487 = vmatprep.subr.mxu0 0.0
      %488 = vmatpush1.msra.mxu0 0.0
      %489 = vmatprep.subr.mxu0 0.0
      %490 = vmatpush1.msra.mxu0 0.0
      %491 = vmatprep.subr.mxu0 0.0
      %492 = vmatpush1.msra.mxu0 0.0
      %493 = vmatprep.subr.mxu0 0.0
      %494 = vmatpush1.msra.mxu0 0.0
      %495 = vmatprep.mubr.f32.mxu0 0.0
      %v496 = vand.u32 %v271, 4294901760
      %v497 = vsub.f32 %v271, %v496
      %498 = vmatmul.mubr.f32.gmra.mrb[0].mxu0 %v497
      %v499 = vpop.f32.mrb[0].mxu0
      %v500 = vadd.f32 %v426, %v499
      %v501 = vpop.f32.mrb[0].mxu0
      %502 = vdwg.mxu0
      %503 = vmatprep.subr.mxu0 0.0
      %v504 = vand.u32 %v275, 4294901760
      %505 = vmatpush1.msra.mxu0 %v504
      %506 = vmatprep.subr.mxu0 0.0
      %507 = vmatpush1.msra.mxu0 0.0
      %508 = vmatprep.subr.mxu0 0.0
      %509 = vmatpush1.msra.mxu0 0.0
      %510 = vmatprep.subr.mxu0 0.0
      %511 = vmatpush1.msra.mxu0 0.0
      %512 = vmatprep.subr.mxu0 0.0
      %513 = vmatpush1.msra.mxu0 0.0
      %514 = vmatprep.subr.mxu0 0.0
      %515 = vmatpush1.msra.mxu0 0.0
      %516 = vmatprep.subr.mxu0 0.0
      %517 = vmatpush1.msra.mxu0 0.0
      %518 = vmatprep.subr.mxu0 0.0
      %519 = vmatpush1.msra.mxu0 0.0
      %520 = vmatprep.subr.mxu0 0.0
      %521 = vmatpush1.msra.mxu0 0.0
      %522 = vmatprep.subr.mxu0 0.0
      %523 = vmatpush1.msra.mxu0 0.0
      %524 = vmatprep.subr.mxu0 0.0
      %525 = vmatpush1.msra.mxu0 0.0
      %526 = vmatprep.subr.mxu0 0.0
      %527 = vmatpush1.msra.mxu0 0.0
      %528 = vmatprep.subr.mxu0 0.0
      %529 = vmatpush1.msra.mxu0 0.0
      %530 = vmatprep.subr.mxu0 0.0
      %531 = vmatpush1.msra.mxu0 0.0
      %532 = vmatprep.subr.mxu0 0.0
      %533 = vmatpush1.msra.mxu0 0.0
      %534 = vmatprep.subr.mxu0 0.0
      %535 = vmatpush1.msra.mxu0 0.0
      %536 = vmatprep.subr.mxu0 0.0
      %537 = vmatpush1.msra.mxu0 0.0
      %538 = vmatprep.subr.mxu0 0.0
      %539 = vmatpush1.msra.mxu0 0.0
      %540 = vmatprep.subr.mxu0 0.0
      %541 = vmatpush1.msra.mxu0 0.0
      %542 = vmatprep.subr.mxu0 0.0
      %543 = vmatpush1.msra.mxu0 0.0
      %544 = vmatprep.subr.mxu0 0.0
      %545 = vmatpush1.msra.mxu0 0.0
      %546 = vmatprep.subr.mxu0 0.0
      %547 = vmatpush1.msra.mxu0 0.0
      %548 = vmatprep.subr.mxu0 0.0
      %549 = vmatpush1.msra.mxu0 0.0
      %550 = vmatprep.subr.mxu0 0.0
      %551 = vmatpush1.msra.mxu0 0.0
      %552 = vmatprep.subr.mxu0 0.0
      %553 = vmatpush1.msra.mxu0 0.0
      %554 = vmatprep.subr.mxu0 0.0
      %555 = vmatpush1.msra.mxu0 0.0
      %556 = vmatprep.subr.mxu0 0.0
      %557 = vmatpush1.msra.mxu0 0.0
      %558 = vmatprep.subr.mxu0 0.0
      %559 = vmatpush1.msra.mxu0 0.0
      %560 = vmatprep.subr.mxu0 0.0
      %561 = vmatpush1.msra.mxu0 0.0
      %562 = vmatprep.subr.mxu0 0.0
      %563 = vmatpush1.msra.mxu0 0.0
      %564 = vmatprep.subr.mxu0 0.0
      %565 = vmatpush1.msra.mxu0 0.0
      %566 = vmatprep.subr.mxu0 0.0
      %567 = vmatpush1.msra.mxu0 0.0
      %568 = vmatprep.mubr.f32.mxu0 0.0
      %v569 = vand.u32 %v271, 4294901760
      %v570 = vsub.f32 %v271, %v569
      %v571 = vand.u32 %v570, 4294901760
      %572 = vmatmul.mubr.f32.gmra.mrb[0].mxu0 %v571
      %v573 = vpop.f32.mrb[0].mxu0
      %v574 = vadd.f32 %v500, %v573
      %v575 = vpop.f32.mrb[0].mxu0
      %576 = vdwg.mxu0
      %577 = vmatprep.subr.mxu0 0.0
      %v578 = vand.u32 %v275, 4294901760
      %v579 = vsub.f32 %v275, %v578
      %v580 = vand.u32 %v579, 4294901760
      %581 = vmatpush1.msra.mxu0 %v580
      %582 = vmatprep.subr.mxu0 0.0
      %583 = vmatpush1.msra.mxu0 0.0
      %584 = vmatprep.subr.mxu0 0.0
      %585 = vmatpush1.msra.mxu0 0.0
      %586 = vmatprep.subr.mxu0 0.0
      %587 = vmatpush1.msra.mxu0 0.0
      %588 = vmatprep.subr.mxu0 0.0
      %589 = vmatpush1.msra.mxu0 0.0
      %590 = vmatprep.subr.mxu0 0.0
      %591 = vmatpush1.msra.mxu0 0.0
      %592 = vmatprep.subr.mxu0 0.0
      %593 = vmatpush1.msra.mxu0 0.0
      %594 = vmatprep.subr.mxu0 0.0
      %595 = vmatpush1.msra.mxu0 0.0
      %596 = vmatprep.subr.mxu0 0.0
      %597 = vmatpush1.msra.mxu0 0.0
      %598 = vmatprep.subr.mxu0 0.0
      %599 = vmatpush1.msra.mxu0 0.0
      %600 = vmatprep.subr.mxu0 0.0
      %601 = vmatpush1.msra.mxu0 0.0
      %602 = vmatprep.subr.mxu0 0.0
      %603 = vmatpush1.msra.mxu0 0.0
      %604 = vmatprep.subr.mxu0 0.0
      %605 = vmatpush1.msra.mxu0 0.0
      %606 = vmatprep.subr.mxu0 0.0
      %607 = vmatpush1.msra.mxu0 0.0
      %608 = vmatprep.subr.mxu0 0.0
      %609 = vmatpush1.msra.mxu0 0.0
      %610 = vmatprep.subr.mxu0 0.0
      %611 = vmatpush1.msra.mxu0 0.0
      %612 = vmatprep.subr.mxu0 0.0
      %613 = vmatpush1.msra.mxu0 0.0
      %614 = vmatprep.subr.mxu0 0.0
      %615 = vmatpush1.msra.mxu0 0.0
      %616 = vmatprep.subr.mxu0 0.0
      %617 = vmatpush1.msra.mxu0 0.0
      %618 = vmatprep.subr.mxu0 0.0
      %619 = vmatpush1.msra.mxu0 0.0
      %620 = vmatprep.subr.mxu0 0.0
      %621 = vmatpush1.msra.mxu0 0.0
      %622 = vmatprep.subr.mxu0 0.0
      %623 = vmatpush1.msra.mxu0 0.0
      %624 = vmatprep.subr.mxu0 0.0
      %625 = vmatpush1.msra.mxu0 0.0
      %626 = vmatprep.subr.mxu0 0.0
      %627 = vmatpush1.msra.mxu0 0.0
      %628 = vmatprep.subr.mxu0 0.0
      %629 = vmatpush1.msra.mxu0 0.0
      %630 = vmatprep.subr.mxu0 0.0
      %631 = vmatpush1.msra.mxu0 0.0
      %632 = vmatprep.subr.mxu0 0.0
      %633 = vmatpush1.msra.mxu0 0.0
      %634 = vmatprep.subr.mxu0 0.0
      %635 = vmatpush1.msra.mxu0 0.0
      %636 = vmatprep.subr.mxu0 0.0
      %637 = vmatpush1.msra.mxu0 0.0
      %638 = vmatprep.subr.mxu0 0.0
      %639 = vmatpush1.msra.mxu0 0.0
      %640 = vmatprep.subr.mxu0 0.0
      %641 = vmatpush1.msra.mxu0 0.0
      %642 = vmatprep.subr.mxu0 0.0
      %643 = vmatpush1.msra.mxu0 0.0
      %644 = vmatprep.mubr.f32.mxu0 0.0
      %v645 = vand.u32 %v271, 4294901760
      %646 = vmatmul.mubr.f32.gmra.mrb[0].mxu0 %v645
      %v647 = vpop.f32.mrb[0].mxu0
      %v648 = vadd.f32 %v574, %v647
      %v649 = vpop.f32.mrb[0].mxu0
      %650 = vdwg.mxu0
      %651 = vmatprep.subr.mxu0 0.0
      %v652 = vand.u32 %v275, 4294901760
      %653 = vmatpush1.msra.mxu0 %v652
      %654 = vmatprep.subr.mxu0 0.0
      %655 = vmatpush1.msra.mxu0 0.0
      %656 = vmatprep.subr.mxu0 0.0
      %657 = vmatpush1.msra.mxu0 0.0
      %658 = vmatprep.subr.mxu0 0.0
      %659 = vmatpush1.msra.mxu0 0.0
      %660 = vmatprep.subr.mxu0 0.0
      %661 = vmatpush1.msra.mxu0 0.0
      %662 = vmatprep.subr.mxu0 0.0
      %663 = vmatpush1.msra.mxu0 0.0
      %664 = vmatprep.subr.mxu0 0.0
      %665 = vmatpush1.msra.mxu0 0.0
      %666 = vmatprep.subr.mxu0 0.0
      %667 = vmatpush1.msra.mxu0 0.0
      %668 = vmatprep.subr.mxu0 0.0
      %669 = vmatpush1.msra.mxu0 0.0
      %670 = vmatprep.subr.mxu0 0.0
      %671 = vmatpush1.msra.mxu0 0.0
      %672 = vmatprep.subr.mxu0 0.0
      %673 = vmatpush1.msra.mxu0 0.0
      %674 = vmatprep.subr.mxu0 0.0
      %675 = vmatpush1.msra.mxu0 0.0
      %676 = vmatprep.subr.mxu0 0.0
      %677 = vmatpush1.msra.mxu0 0.0
      %678 = vmatprep.subr.mxu0 0.0
      %679 = vmatpush1.msra.mxu0 0.0
      %680 = vmatprep.subr.mxu0 0.0
      %681 = vmatpush1.msra.mxu0 0.0
      %682 = vmatprep.subr.mxu0 0.0
      %683 = vmatpush1.msra.mxu0 0.0
      %684 = vmatprep.subr.mxu0 0.0
      %685 = vmatpush1.msra.mxu0 0.0
      %686 = vmatprep.subr.mxu0 0.0
      %687 = vmatpush1.msra.mxu0 0.0
      %688 = vmatprep.subr.mxu0 0.0
      %689 = vmatpush1.msra.mxu0 0.0
      %690 = vmatprep.subr.mxu0 0.0
      %691 = vmatpush1.msra.mxu0 0.0
      %692 = vmatprep.subr.mxu0 0.0
      %693 = vmatpush1.msra.mxu0 0.0
      %694 = vmatprep.subr.mxu0 0.0
      %695 = vmatpush1.msra.mxu0 0.0
      %696 = vmatprep.subr.mxu0 0.0
      %697 = vmatpush1.msra.mxu0 0.0
      %698 = vmatprep.subr.mxu0 0.0
      %699 = vmatpush1.msra.mxu0 0.0
      %700 = vmatprep.subr.mxu0 0.0
      %701 = vmatpush1.msra.mxu0 0.0
      %702 = vmatprep.subr.mxu0 0.0
      %703 = vmatpush1.msra.mxu0 0.0
      %704 = vmatprep.subr.mxu0 0.0
      %705 = vmatpush1.msra.mxu0 0.0
      %706 = vmatprep.subr.mxu0 0.0
      %707 = vmatpush1.msra.mxu0 0.0
      %708 = vmatprep.subr.mxu0 0.0
      %709 = vmatpush1.msra.mxu0 0.0
      %710 = vmatprep.subr.mxu0 0.0
      %711 = vmatpush1.msra.mxu0 0.0
      %712 = vmatprep.subr.mxu0 0.0
      %713 = vmatpush1.msra.mxu0 0.0
      %714 = vmatprep.subr.mxu0 0.0
      %715 = vmatpush1.msra.mxu0 0.0
      %716 = vmatprep.mubr.f32.mxu0 0.0
      %v717 = vand.u32 %v271, 4294901760
      %718 = vmatmul.mubr.f32.gmra.mrb[0].mxu0 %v717
      %v719 = vpop.f32.mrb[0].mxu0
      %v720 = vadd.f32 %v648, %v719
      %v721 = vpop.f32.mrb[0].mxu0
      %722 = vdwg.mxu0
      %v723 = vadd.f32 %v224, %v720
      loop: start=0, step=1, limit=16
      $region32: #{tpu_custom_call.1} parent=23 // loop_pre_header
        _
      $region33: #{tpu_custom_call.1} parent=23 // loop_header
        %s725 = sphi 0, %s729
        %p726 = scmp.ge.s32.totalorder %s725, 16
        %v730 = vphi %v723, %v754
        %v731 = vphi -1.0, %v753
      $region34: #{tpu_custom_call.1} parent=23 // loop_header_branch
        %728 = sbr.rel (%p726) target = $region38
      $region35: #{tpu_custom_call.1} parent=23 // loop_body
        %732 = vmin.xlane.f32.xlu0 %v730
        %v733 = vpop.xlane.xlu0 %732
        %vm734 = vcmp.le.f32.partialorder %v730, %v733
        %v735 = vsel %vm734, %v159, 128
        %v736 = vand.u32 %v735, 65535
        %v737 = vshra.s32 %v735, 16
        %v738 = vcvt.s32.f32 %v736
        %v739 = vcvt.s32.f32 %v737
        %740 = vmin.xlane.f32.xlu0 %v739
        %v741 = vpop.xlane.xlu0 %740
        %vm742 = vcmp.eq.f32.partialorder %v739, %v741
        %v743 = vsel %vm742, %v738, inf
        %744 = vmin.xlane.f32.xlu0 %v743
        %v745 = vpop.xlane.xlu0 %744
        %v746 = vcvt.f32.s32 %v745
        %v747 = vcvt.f32.s32 %v741
        %v748 = vshll.u32 %v747, 16
        %v749 = vadd.s32 %v748, %v746
        %vm750 = vcmp.eq.s32.totalorder %v159, %v749
        %s751 = scvt.s32.f32 %s725
        %v752 = vstv %s751
        %v753 = vsel %vm750, %v752, %v731
        %v754 = vsel %vm750, inf, %v730
      $region36: #{tpu_custom_call.1} parent=23 // loop_footer
        %s729 = sadd.s32 1, %s725
      $region37: #{tpu_custom_call.1} parent=23 // loop_footer_branch
        %724 = sbr.rel target = $region33
      $region38: #{tpu_custom_call.1} parent=23 // loop_exit
        _
      %v755 = vlaneseq
      %v756 = vshrl.u32 %v755, 7
      %v757 = vmul.u32 %v756, 16
      %vm758 = vcmp.ge.s32.totalorder %v159, %v757
      %v759 = vadd.s32 %v756, 1
      %v760 = vmul.u32 %v759, 16
      %vm761 = vcmp.lt.s32.totalorder %v159, %v760
      %vm762 = vmand %vm758, %vm761
      %v763 = vsel %vm762, 1, 0
      %v764 = vcvt.s32.f32 %v763
      %765 = vxpose.xlu0.b32.start [1/16] %v764, 128
      %766 = vxpose.xlu0.b32.cont [2/16] 0.0, 128
      %767 = vxpose.xlu0.b32.cont [3/16] 0.0, 128
      %768 = vxpose.xlu0.b32.cont [4/16] 0.0, 128
      %769 = vxpose.xlu0.b32.cont [5/16] 0.0, 128
      %770 = vxpose.xlu0.b32.cont [6/16] 0.0, 128
      %771 = vxpose.xlu0.b32.cont [7/16] 0.0, 128
      %772 = vxpose.xlu0.b32.cont [8/16] 0.0, 128
      %773 = vxpose.xlu0.b32.cont [9/16] 0.0, 128
      %774 = vxpose.xlu0.b32.cont [10/16] 0.0, 128
      %775 = vxpose.xlu0.b32.cont [11/16] 0.0, 128
      %776 = vxpose.xlu0.b32.cont [12/16] 0.0, 128
      %777 = vxpose.xlu0.b32.cont [13/16] 0.0, 128
      %778 = vxpose.xlu0.b32.cont [14/16] 0.0, 128
      %779 = vxpose.xlu0.b32.cont [15/16] 0.0, 128
      %780 = vxpose.xlu0.b32.end [16/16] 0.0, 128
      %v781 = vpop.trf.xlu0
      %v782 = vpop.trf.xlu0
      %v783 = vpop.trf.xlu0
      %v784 = vpop.trf.xlu0
      %v785 = vpop.trf.xlu0
      %v786 = vpop.trf.xlu0
      %v787 = vpop.trf.xlu0
      %v788 = vpop.trf.xlu0
      %v789 = vpop.trf.xlu0
      %v790 = vpop.trf.xlu0
      %v791 = vpop.trf.xlu0
      %v792 = vpop.trf.xlu0
      %v793 = vpop.trf.xlu0
      %v794 = vpop.trf.xlu0
      %v795 = vpop.trf.xlu0
      %v796 = vpop.trf.xlu0
      %vm797 = vcmask 64512
      %v799 = vsel %vm797, %v781, 0
      %v802 = vsel %vm797, %v782, 0
      %v805 = vsel %vm797, %v783, 0
      %v808 = vsel %vm797, %v784, 0
      %v811 = vsel %vm797, %v785, 0
      %v814 = vsel %vm797, %v786, 0
      %v817 = vsel %vm797, %v787, 0
      %v820 = vsel %vm797, %v788, 0
      %v823 = vsel %vm797, %v789, 0
      %v826 = vsel %vm797, %v790, 0
      %v829 = vsel %vm797, %v791, 0
      %v832 = vsel %vm797, %v792, 0
      %v835 = vsel %vm797, %v793, 0
      %v838 = vsel %vm797, %v794, 0
      %v841 = vsel %vm797, %v795, 0
      %v844 = vsel %vm797, %v796, 0
      %846 = vmatprep.subr.mxu0 0.0
      %v847 = vand.u32 %v731, 4294901760
      %848 = vmatpush1.msra.mxu0 %v847
      %849 = vmatprep.subr.mxu0 0.0
      %850 = vmatpush1.msra.mxu0 0.0
      %851 = vmatprep.subr.mxu0 0.0
      %852 = vmatpush1.msra.mxu0 0.0
      %853 = vmatprep.subr.mxu0 0.0
      %854 = vmatpush1.msra.mxu0 0.0
      %855 = vmatprep.subr.mxu0 0.0
      %856 = vmatpush1.msra.mxu0 0.0
      %857 = vmatprep.subr.mxu0 0.0
      %858 = vmatpush1.msra.mxu0 0.0
      %859 = vmatprep.subr.mxu0 0.0
      %860 = vmatpush1.msra.mxu0 0.0
      %861 = vmatprep.subr.mxu0 0.0
      %862 = vmatpush1.msra.mxu0 0.0
      %863 = vmatprep.subr.mxu0 0.0
      %864 = vmatpush1.msra.mxu0 0.0
      %865 = vmatprep.subr.mxu0 0.0
      %866 = vmatpush1.msra.mxu0 0.0
      %867 = vmatprep.subr.mxu0 0.0
      %868 = vmatpush1.msra.mxu0 0.0
      %869 = vmatprep.subr.mxu0 0.0
      %870 = vmatpush1.msra.mxu0 0.0
      %871 = vmatprep.subr.mxu0 0.0
      %872 = vmatpush1.msra.mxu0 0.0
      %873 = vmatprep.subr.mxu0 0.0
      %874 = vmatpush1.msra.mxu0 0.0
      %875 = vmatprep.subr.mxu0 0.0
      %876 = vmatpush1.msra.mxu0 0.0
      %877 = vmatprep.subr.mxu0 0.0
      %878 = vmatpush1.msra.mxu0 0.0
      %879 = vmatprep.subr.mxu0 0.0
      %880 = vmatpush1.msra.mxu0 0.0
      %881 = vmatprep.subr.mxu0 0.0
      %882 = vmatpush1.msra.mxu0 0.0
      %883 = vmatprep.subr.mxu0 0.0
      %884 = vmatpush1.msra.mxu0 0.0
      %885 = vmatprep.subr.mxu0 0.0
      %886 = vmatpush1.msra.mxu0 0.0
      %887 = vmatprep.subr.mxu0 0.0
      %888 = vmatpush1.msra.mxu0 0.0
      %889 = vmatprep.subr.mxu0 0.0
      %890 = vmatpush1.msra.mxu0 0.0
      %891 = vmatprep.subr.mxu0 0.0
      %892 = vmatpush1.msra.mxu0 0.0
      %893 = vmatprep.subr.mxu0 0.0
      %894 = vmatpush1.msra.mxu0 0.0
      %895 = vmatprep.subr.mxu0 0.0
      %896 = vmatpush1.msra.mxu0 0.0
      %897 = vmatprep.subr.mxu0 0.0
      %898 = vmatpush1.msra.mxu0 0.0
      %899 = vmatprep.subr.mxu0 0.0
      %900 = vmatpush1.msra.mxu0 0.0
      %901 = vmatprep.subr.mxu0 0.0
      %902 = vmatpush1.msra.mxu0 0.0
      %903 = vmatprep.subr.mxu0 0.0
      %904 = vmatpush1.msra.mxu0 0.0
      %905 = vmatprep.subr.mxu0 0.0
      %906 = vmatpush1.msra.mxu0 0.0
      %907 = vmatprep.subr.mxu0 0.0
      %908 = vmatpush1.msra.mxu0 0.0
      %909 = vmatprep.subr.mxu0 0.0
      %910 = vmatpush1.msra.mxu0 0.0
      %911 = vmatprep.mubr.f32.mxu0 0.0
      %v912 = vand.u32 %v799, 4294901760
      %v913 = vsub.f32 %v799, %v912
      %v914 = vand.u32 %v913, 4294901760
      %v915 = vsub.f32 %v913, %v914
      %v916 = vand.u32 %v915, 4294901760
      %917 = vmatmul.mubr.f32.gmra.mrb[0].mxu0 %v916
      %v918 = vpop.f32.mrb[0].mxu0
      %v919 = vadd.f32 0.0, %v918
      %v920 = vpop.f32.mrb[0].mxu0
      %921 = vmatprep.mubr.f32.mxu0 0.0
      %v922 = vand.u32 %v802, 4294901760
      %v923 = vsub.f32 %v802, %v922
      %v924 = vand.u32 %v923, 4294901760
      %v925 = vsub.f32 %v923, %v924
      %v926 = vand.u32 %v925, 4294901760
      %927 = vmatmul.mubr.f32.gmra.mrb[0].mxu0 %v926
      %v928 = vpop.f32.mrb[0].mxu0
      %v929 = vadd.f32 0.0, %v928
      %v930 = vpop.f32.mrb[0].mxu0
      %931 = vmatprep.mubr.f32.mxu0 0.0
      %v932 = vand.u32 %v805, 4294901760
      %v933 = vsub.f32 %v805, %v932
      %v934 = vand.u32 %v933, 4294901760
      %v935 = vsub.f32 %v933, %v934
      %v936 = vand.u32 %v935, 4294901760
      %937 = vmatmul.mubr.f32.gmra.mrb[0].mxu0 %v936
      %v938 = vpop.f32.mrb[0].mxu0
      %v939 = vadd.f32 0.0, %v938
      %v940 = vpop.f32.mrb[0].mxu0
      %941 = vmatprep.mubr.f32.mxu0 0.0
      %v942 = vand.u32 %v808, 4294901760
      %v943 = vsub.f32 %v808, %v942
      %v944 = vand.u32 %v943, 4294901760
      %v945 = vsub.f32 %v943, %v944
      %v946 = vand.u32 %v945, 4294901760
      %947 = vmatmul.mubr.f32.gmra.mrb[0].mxu0 %v946
      %v948 = vpop.f32.mrb[0].mxu0
      %v949 = vadd.f32 0.0, %v948
      %v950 = vpop.f32.mrb[0].mxu0
      %951 = vmatprep.mubr.f32.mxu0 0.0
      %v952 = vand.u32 %v811, 4294901760
      %v953 = vsub.f32 %v811, %v952
      %v954 = vand.u32 %v953, 4294901760
      %v955 = vsub.f32 %v953, %v954
      %v956 = vand.u32 %v955, 4294901760
      %957 = vmatmul.mubr.f32.gmra.mrb[0].mxu0 %v956
      %v958 = vpop.f32.mrb[0].mxu0
      %v959 = vadd.f32 0.0, %v958
      %v960 = vpop.f32.mrb[0].mxu0
      %961 = vmatprep.mubr.f32.mxu0 0.0
      %v962 = vand.u32 %v814, 4294901760
      %v963 = vsub.f32 %v814, %v962
      %v964 = vand.u32 %v963, 4294901760
      %v965 = vsub.f32 %v963, %v964
      %v966 = vand.u32 %v965, 4294901760
      %967 = vmatmul.mubr.f32.gmra.mrb[0].mxu0 %v966
      %v968 = vpop.f32.mrb[0].mxu0
      %v969 = vadd.f32 0.0, %v968
      %v970 = vpop.f32.mrb[0].mxu0
      %971 = vmatprep.mubr.f32.mxu0 0.0
      %v972 = vand.u32 %v817, 4294901760
      %v973 = vsub.f32 %v817, %v972
      %v974 = vand.u32 %v973, 4294901760
      %v975 = vsub.f32 %v973, %v974
      %v976 = vand.u32 %v975, 4294901760
      %977 = vmatmul.mubr.f32.gmra.mrb[0].mxu0 %v976
      %v978 = vpop.f32.mrb[0].mxu0
      %v979 = vadd.f32 0.0, %v978
      %v980 = vpop.f32.mrb[0].mxu0
      %981 = vmatprep.mubr.f32.mxu0 0.0
      %v982 = vand.u32 %v820, 4294901760
      %v983 = vsub.f32 %v820, %v982
      %v984 = vand.u32 %v983, 4294901760
      %v985 = vsub.f32 %v983, %v984
      %v986 = vand.u32 %v985, 4294901760
      %987 = vmatmul.mubr.f32.gmra.mrb[0].mxu0 %v986
      %v988 = vpop.f32.mrb[0].mxu0
      %v989 = vadd.f32 0.0, %v988
      %v990 = vpop.f32.mrb[0].mxu0
      %991 = vmatprep.mubr.f32.mxu0 0.0
      %v992 = vand.u32 %v823, 4294901760
      %v993 = vsub.f32 %v823, %v992
      %v994 = vand.u32 %v993, 4294901760
      %v995 = vsub.f32 %v993, %v994
      %v996 = vand.u32 %v995, 4294901760
      %997 = vmatmul.mubr.f32.gmra.mrb[0].mxu0 %v996
      %v998 = vpop.f32.mrb[0].mxu0
      %v999 = vadd.f32 0.0, %v998
      %v1000 = vpop.f32.mrb[0].mxu0
      %1001 = vmatprep.mubr.f32.mxu0 0.0
      %v1002 = vand.u32 %v826, 4294901760
      %v1003 = vsub.f32 %v826, %v1002
      %v1004 = vand.u32 %v1003, 4294901760
      %v1005 = vsub.f32 %v1003, %v1004
      %v1006 = vand.u32 %v1005, 4294901760
      %1007 = vmatmul.mubr.f32.gmra.mrb[0].mxu0 %v1006
      %v1008 = vpop.f32.mrb[0].mxu0
      %v1009 = vadd.f32 0.0, %v1008
      %v1010 = vpop.f32.mrb[0].mxu0
      %1011 = vmatprep.mubr.f32.mxu0 0.0
      %v1012 = vand.u32 %v829, 4294901760
      %v1013 = vsub.f32 %v829, %v1012
      %v1014 = vand.u32 %v1013, 4294901760
      %v1015 = vsub.f32 %v1013, %v1014
      %v1016 = vand.u32 %v1015, 4294901760
      %1017 = vmatmul.mubr.f32.gmra.mrb[0].mxu0 %v1016
      %v1018 = vpop.f32.mrb[0].mxu0
      %v1019 = vadd.f32 0.0, %v1018
      %v1020 = vpop.f32.mrb[0].mxu0
      %1021 = vmatprep.mubr.f32.mxu0 0.0
      %v1022 = vand.u32 %v832, 4294901760
      %v1023 = vsub.f32 %v832, %v1022
      %v1024 = vand.u32 %v1023, 4294901760
      %v1025 = vsub.f32 %v1023, %v1024
      %v1026 = vand.u32 %v1025, 4294901760
      %1027 = vmatmul.mubr.f32.gmra.mrb[0].mxu0 %v1026
      %v1028 = vpop.f32.mrb[0].mxu0
      %v1029 = vadd.f32 0.0, %v1028
      %v1030 = vpop.f32.mrb[0].mxu0
      %1031 = vmatprep.mubr.f32.mxu0 0.0
      %v1032 = vand.u32 %v835, 4294901760
      %v1033 = vsub.f32 %v835, %v1032
      %v1034 = vand.u32 %v1033, 4294901760
      %v1035 = vsub.f32 %v1033, %v1034
      %v1036 = vand.u32 %v1035, 4294901760
      %1037 = vmatmul.mubr.f32.gmra.mrb[0].mxu0 %v1036
      %v1038 = vpop.f32.mrb[0].mxu0
      %v1039 = vadd.f32 0.0, %v1038
      %v1040 = vpop.f32.mrb[0].mxu0
      %1041 = vmatprep.mubr.f32.mxu0 0.0
      %v1042 = vand.u32 %v838, 4294901760
      %v1043 = vsub.f32 %v838, %v1042
      %v1044 = vand.u32 %v1043, 4294901760
      %v1045 = vsub.f32 %v1043, %v1044
      %v1046 = vand.u32 %v1045, 4294901760
      %1047 = vmatmul.mubr.f32.gmra.mrb[0].mxu0 %v1046
      %v1048 = vpop.f32.mrb[0].mxu0
      %v1049 = vadd.f32 0.0, %v1048
      %v1050 = vpop.f32.mrb[0].mxu0
      %1051 = vmatprep.mubr.f32.mxu0 0.0
      %v1052 = vand.u32 %v841, 4294901760
      %v1053 = vsub.f32 %v841, %v1052
      %v1054 = vand.u32 %v1053, 4294901760
      %v1055 = vsub.f32 %v1053, %v1054
      %v1056 = vand.u32 %v1055, 4294901760
      %1057 = vmatmul.mubr.f32.gmra.mrb[0].mxu0 %v1056
      %v1058 = vpop.f32.mrb[0].mxu0
      %v1059 = vadd.f32 0.0, %v1058
      %v1060 = vpop.f32.mrb[0].mxu0
      %1061 = vmatprep.mubr.f32.mxu0 0.0
      %v1062 = vand.u32 %v844, 4294901760
      %v1063 = vsub.f32 %v844, %v1062
      %v1064 = vand.u32 %v1063, 4294901760
      %v1065 = vsub.f32 %v1063, %v1064
      %v1066 = vand.u32 %v1065, 4294901760
      %1067 = vmatmul.mubr.f32.gmra.mrb[0].mxu0 %v1066
      %v1068 = vpop.f32.mrb[0].mxu0
      %v1069 = vadd.f32 0.0, %v1068
      %v1070 = vpop.f32.mrb[0].mxu0
      %1071 = vdwg.mxu0
      %1072 = vmatprep.subr.mxu0 0.0
      %v1073 = vand.u32 %v731, 4294901760
      %v1074 = vsub.f32 %v731, %v1073
      %v1075 = vand.u32 %v1074, 4294901760
      %v1076 = vsub.f32 %v1074, %v1075
      %v1077 = vand.u32 %v1076, 4294901760
      %1078 = vmatpush1.msra.mxu0 %v1077
      %1079 = vmatprep.subr.mxu0 0.0
      %1080 = vmatpush1.msra.mxu0 0.0
      %1081 = vmatprep.subr.mxu0 0.0
      %1082 = vmatpush1.msra.mxu0 0.0
      %1083 = vmatprep.subr.mxu0 0.0
      %1084 = vmatpush1.msra.mxu0 0.0
      %1085 = vmatprep.subr.mxu0 0.0
      %1086 = vmatpush1.msra.mxu0 0.0
      %1087 = vmatprep.subr.mxu0 0.0
      %1088 = vmatpush1.msra.mxu0 0.0
      %1089 = vmatprep.subr.mxu0 0.0
      %1090 = vmatpush1.msra.mxu0 0.0
      %1091 = vmatprep.subr.mxu0 0.0
      %1092 = vmatpush1.msra.mxu0 0.0
      %1093 = vmatprep.subr.mxu0 0.0
      %1094 = vmatpush1.msra.mxu0 0.0
      %1095 = vmatprep.subr.mxu0 0.0
      %1096 = vmatpush1.msra.mxu0 0.0
      %1097 = vmatprep.subr.mxu0 0.0
      %1098 = vmatpush1.msra.mxu0 0.0
      %1099 = vmatprep.subr.mxu0 0.0
      %1100 = vmatpush1.msra.mxu0 0.0
      %1101 = vmatprep.subr.mxu0 0.0
      %1102 = vmatpush1.msra.mxu0 0.0
      %1103 = vmatprep.subr.mxu0 0.0
      %1104 = vmatpush1.msra.mxu0 0.0
      %1105 = vmatprep.subr.mxu0 0.0
      %1106 = vmatpush1.msra.mxu0 0.0
      %1107 = vmatprep.subr.mxu0 0.0
      %1108 = vmatpush1.msra.mxu0 0.0
      %1109 = vmatprep.subr.mxu0 0.0
      %1110 = vmatpush1.msra.mxu0 0.0
      %1111 = vmatprep.subr.mxu0 0.0
      %1112 = vmatpush1.msra.mxu0 0.0
      %1113 = vmatprep.subr.mxu0 0.0
      %1114 = vmatpush1.msra.mxu0 0.0
      %1115 = vmatprep.subr.mxu0 0.0
      %1116 = vmatpush1.msra.mxu0 0.0
      %1117 = vmatprep.subr.mxu0 0.0
      %1118 = vmatpush1.msra.mxu0 0.0
      %1119 = vmatprep.subr.mxu0 0.0
      %1120 = vmatpush1.msra.mxu0 0.0
      %1121 = vmatprep.subr.mxu0 0.0
      %1122 = vmatpush1.msra.mxu0 0.0
      %1123 = vmatprep.subr.mxu0 0.0
      %1124 = vmatpush1.msra.mxu0 0.0
      %1125 = vmatprep.subr.mxu0 0.0
      %1126 = vmatpush1.msra.mxu0 0.0
      %1127 = vmatprep.subr.mxu0 0.0
      %1128 = vmatpush1.msra.mxu0 0.0
      %1129 = vmatprep.subr.mxu0 0.0
      %1130 = vmatpush1.msra.mxu0 0.0
      %1131 = vmatprep.subr.mxu0 0.0
      %1132 = vmatpush1.msra.mxu0 0.0
      %1133 = vmatprep.subr.mxu0 0.0
      %1134 = vmatpush1.msra.mxu0 0.0
      %1135 = vmatprep.subr.mxu0 0.0
      %1136 = vmatpush1.msra.mxu0 0.0
      %1137 = vmatprep.subr.mxu0 0.0
      %1138 = vmatpush1.msra.mxu0 0.0
      %1139 = vmatprep.subr.mxu0 0.0
      %1140 = vmatpush1.msra.mxu0 0.0
      %1141 = vmatprep.mubr.f32.mxu0 0.0
      %v1142 = vand.u32 %v799, 4294901760
      %1143 = vmatmul.mubr.f32.gmra.mrb[0].mxu0 %v1142
      %v1144 = vpop.f32.mrb[0].mxu0
      %v1145 = vadd.f32 %v919, %v1144
      %v1146 = vpop.f32.mrb[0].mxu0
      %1147 = vmatprep.mubr.f32.mxu0 0.0
      %v1148 = vand.u32 %v802, 4294901760
      %1149 = vmatmul.mubr.f32.gmra.mrb[0].mxu0 %v1148
      %v1150 = vpop.f32.mrb[0].mxu0
      %v1151 = vadd.f32 %v929, %v1150
      %v1152 = vpop.f32.mrb[0].mxu0
      %1153 = vmatprep.mubr.f32.mxu0 0.0
      %v1154 = vand.u32 %v805, 4294901760
      %1155 = vmatmul.mubr.f32.gmra.mrb[0].mxu0 %v1154
      %v1156 = vpop.f32.mrb[0].mxu0
      %v1157 = vadd.f32 %v939, %v1156
      %v1158 = vpop.f32.mrb[0].mxu0
      %1159 = vmatprep.mubr.f32.mxu0 0.0
      %v1160 = vand.u32 %v808, 4294901760
      %1161 = vmatmul.mubr.f32.gmra.mrb[0].mxu0 %v1160
      %v1162 = vpop.f32.mrb[0].mxu0
      %v1163 = vadd.f32 %v949, %v1162
      %v1164 = vpop.f32.mrb[0].mxu0
      %1165 = vmatprep.mubr.f32.mxu0 0.0
      %v1166 = vand.u32 %v811, 4294901760
      %1167 = vmatmul.mubr.f32.gmra.mrb[0].mxu0 %v1166
      %v1168 = vpop.f32.mrb[0].mxu0
      %v1169 = vadd.f32 %v959, %v1168
      %v1170 = vpop.f32.mrb[0].mxu0
      %1171 = vmatprep.mubr.f32.mxu0 0.0
      %v1172 = vand.u32 %v814, 4294901760
      %1173 = vmatmul.mubr.f32.gmra.mrb[0].mxu0 %v1172
      %v1174 = vpop.f32.mrb[0].mxu0
      %v1175 = vadd.f32 %v969, %v1174
      %v1176 = vpop.f32.mrb[0].mxu0
      %1177 = vmatprep.mubr.f32.mxu0 0.0
      %v1178 = vand.u32 %v817, 4294901760
      %1179 = vmatmul.mubr.f32.gmra.mrb[0].mxu0 %v1178
      %v1180 = vpop.f32.mrb[0].mxu0
      %v1181 = vadd.f32 %v979, %v1180
      %v1182 = vpop.f32.mrb[0].mxu0
      %1183 = vmatprep.mubr.f32.mxu0 0.0
      %v1184 = vand.u32 %v820, 4294901760
      %1185 = vmatmul.mubr.f32.gmra.mrb[0].mxu0 %v1184
      %v1186 = vpop.f32.mrb[0].mxu0
      %v1187 = vadd.f32 %v989, %v1186
      %v1188 = vpop.f32.mrb[0].mxu0
      %1189 = vmatprep.mubr.f32.mxu0 0.0
      %v1190 = vand.u32 %v823, 4294901760
      %1191 = vmatmul.mubr.f32.gmra.mrb[0].mxu0 %v1190
      %v1192 = vpop.f32.mrb[0].mxu0
      %v1193 = vadd.f32 %v999, %v1192
      %v1194 = vpop.f32.mrb[0].mxu0
      %1195 = vmatprep.mubr.f32.mxu0 0.0
      %v1196 = vand.u32 %v826, 4294901760
      %1197 = vmatmul.mubr.f32.gmra.mrb[0].mxu0 %v1196
      %v1198 = vpop.f32.mrb[0].mxu0
      %v1199 = vadd.f32 %v1009, %v1198
      %v1200 = vpop.f32.mrb[0].mxu0
      %1201 = vmatprep.mubr.f32.mxu0 0.0
      %v1202 = vand.u32 %v829, 4294901760
      %1203 = vmatmul.mubr.f32.gmra.mrb[0].mxu0 %v1202
      %v1204 = vpop.f32.mrb[0].mxu0
      %v1205 = vadd.f32 %v1019, %v1204
      %v1206 = vpop.f32.mrb[0].mxu0
      %1207 = vmatprep.mubr.f32.mxu0 0.0
      %v1208 = vand.u32 %v832, 4294901760
      %1209 = vmatmul.mubr.f32.gmra.mrb[0].mxu0 %v1208
      %v1210 = vpop.f32.mrb[0].mxu0
      %v1211 = vadd.f32 %v1029, %v1210
      %v1212 = vpop.f32.mrb[0].mxu0
      %1213 = vmatprep.mubr.f32.mxu0 0.0
      %v1214 = vand.u32 %v835, 4294901760
      %1215 = vmatmul.mubr.f32.gmra.mrb[0].mxu0 %v1214
      %v1216 = vpop.f32.mrb[0].mxu0
      %v1217 = vadd.f32 %v1039, %v1216
      %v1218 = vpop.f32.mrb[0].mxu0
      %1219 = vmatprep.mubr.f32.mxu0 0.0
      %v1220 = vand.u32 %v838, 4294901760
      %1221 = vmatmul.mubr.f32.gmra.mrb[0].mxu0 %v1220
      %v1222 = vpop.f32.mrb[0].mxu0
      %v1223 = vadd.f32 %v1049, %v1222
      %v1224 = vpop.f32.mrb[0].mxu0
      %1225 = vmatprep.mubr.f32.mxu0 0.0
      %v1226 = vand.u32 %v841, 4294901760
      %1227 = vmatmul.mubr.f32.gmra.mrb[0].mxu0 %v1226
      %v1228 = vpop.f32.mrb[0].mxu0
      %v1229 = vadd.f32 %v1059, %v1228
      %v1230 = vpop.f32.mrb[0].mxu0
      %1231 = vmatprep.mubr.f32.mxu0 0.0
      %v1232 = vand.u32 %v844, 4294901760
      %1233 = vmatmul.mubr.f32.gmra.mrb[0].mxu0 %v1232
      %v1234 = vpop.f32.mrb[0].mxu0
      %v1235 = vadd.f32 %v1069, %v1234
      %v1236 = vpop.f32.mrb[0].mxu0
      %1237 = vdwg.mxu0
      %1238 = vmatprep.subr.mxu0 0.0
      %v1239 = vand.u32 %v731, 4294901760
      %v1240 = vsub.f32 %v731, %v1239
      %1241 = vmatpush1.msra.mxu0 %v1240
      %1242 = vmatprep.subr.mxu0 0.0
      %1243 = vmatpush1.msra.mxu0 0.0
      %1244 = vmatprep.subr.mxu0 0.0
      %1245 = vmatpush1.msra.mxu0 0.0
      %1246 = vmatprep.subr.mxu0 0.0
      %1247 = vmatpush1.msra.mxu0 0.0
      %1248 = vmatprep.subr.mxu0 0.0
      %1249 = vmatpush1.msra.mxu0 0.0
      %1250 = vmatprep.subr.mxu0 0.0
      %1251 = vmatpush1.msra.mxu0 0.0
      %1252 = vmatprep.subr.mxu0 0.0
      %1253 = vmatpush1.msra.mxu0 0.0
      %1254 = vmatprep.subr.mxu0 0.0
      %1255 = vmatpush1.msra.mxu0 0.0
      %1256 = vmatprep.subr.mxu0 0.0
      %1257 = vmatpush1.msra.mxu0 0.0
      %1258 = vmatprep.subr.mxu0 0.0
      %1259 = vmatpush1.msra.mxu0 0.0
      %1260 = vmatprep.subr.mxu0 0.0
      %1261 = vmatpush1.msra.mxu0 0.0
      %1262 = vmatprep.subr.mxu0 0.0
      %1263 = vmatpush1.msra.mxu0 0.0
      %1264 = vmatprep.subr.mxu0 0.0
      %1265 = vmatpush1.msra.mxu0 0.0
      %1266 = vmatprep.subr.mxu0 0.0
      %1267 = vmatpush1.msra.mxu0 0.0
      %1268 = vmatprep.subr.mxu0 0.0
      %1269 = vmatpush1.msra.mxu0 0.0
      %1270 = vmatprep.subr.mxu0 0.0
      %1271 = vmatpush1.msra.mxu0 0.0
      %1272 = vmatprep.subr.mxu0 0.0
      %1273 = vmatpush1.msra.mxu0 0.0
      %1274 = vmatprep.subr.mxu0 0.0
      %1275 = vmatpush1.msra.mxu0 0.0
      %1276 = vmatprep.subr.mxu0 0.0
      %1277 = vmatpush1.msra.mxu0 0.0
      %1278 = vmatprep.subr.mxu0 0.0
      %1279 = vmatpush1.msra.mxu0 0.0
      %1280 = vmatprep.subr.mxu0 0.0
      %1281 = vmatpush1.msra.mxu0 0.0
      %1282 = vmatprep.subr.mxu0 0.0
      %1283 = vmatpush1.msra.mxu0 0.0
      %1284 = vmatprep.subr.mxu0 0.0
      %1285 = vmatpush1.msra.mxu0 0.0
      %1286 = vmatprep.subr.mxu0 0.0
      %1287 = vmatpush1.msra.mxu0 0.0
      %1288 = vmatprep.subr.mxu0 0.0
      %1289 = vmatpush1.msra.mxu0 0.0
      %1290 = vmatprep.subr.mxu0 0.0
      %1291 = vmatpush1.msra.mxu0 0.0
      %1292 = vmatprep.subr.mxu0 0.0
      %1293 = vmatpush1.msra.mxu0 0.0
      %1294 = vmatprep.subr.mxu0 0.0
      %1295 = vmatpush1.msra.mxu0 0.0
      %1296 = vmatprep.subr.mxu0 0.0
      %1297 = vmatpush1.msra.mxu0 0.0
      %1298 = vmatprep.subr.mxu0 0.0
      %1299 = vmatpush1.msra.mxu0 0.0
      %1300 = vmatprep.subr.mxu0 0.0
      %1301 = vmatpush1.msra.mxu0 0.0
      %1302 = vmatprep.subr.mxu0 0.0
      %1303 = vmatpush1.msra.mxu0 0.0
      %1304 = vmatprep.mubr.f32.mxu0 0.0
      %v1305 = vand.u32 %v799, 4294901760
      %v1306 = vsub.f32 %v799, %v1305
      %1307 = vmatmul.mubr.f32.gmra.mrb[0].mxu0 %v1306
      %v1308 = vpop.f32.mrb[0].mxu0
      %v1309 = vadd.f32 %v1145, %v1308
      %v1310 = vpop.f32.mrb[0].mxu0
      %1311 = vmatprep.mubr.f32.mxu0 0.0
      %v1312 = vand.u32 %v802, 4294901760
      %v1313 = vsub.f32 %v802, %v1312
      %1314 = vmatmul.mubr.f32.gmra.mrb[0].mxu0 %v1313
      %v1315 = vpop.f32.mrb[0].mxu0
      %v1316 = vadd.f32 %v1151, %v1315
      %v1317 = vpop.f32.mrb[0].mxu0
      %1318 = vmatprep.mubr.f32.mxu0 0.0
      %v1319 = vand.u32 %v805, 4294901760
      %v1320 = vsub.f32 %v805, %v1319
      %1321 = vmatmul.mubr.f32.gmra.mrb[0].mxu0 %v1320
      %v1322 = vpop.f32.mrb[0].mxu0
      %v1323 = vadd.f32 %v1157, %v1322
      %v1324 = vpop.f32.mrb[0].mxu0
      %1325 = vmatprep.mubr.f32.mxu0 0.0
      %v1326 = vand.u32 %v808, 4294901760
      %v1327 = vsub.f32 %v808, %v1326
      %1328 = vmatmul.mubr.f32.gmra.mrb[0].mxu0 %v1327
      %v1329 = vpop.f32.mrb[0].mxu0
      %v1330 = vadd.f32 %v1163, %v1329
      %v1331 = vpop.f32.mrb[0].mxu0
      %1332 = vmatprep.mubr.f32.mxu0 0.0
      %v1333 = vand.u32 %v811, 4294901760
      %v1334 = vsub.f32 %v811, %v1333
      %1335 = vmatmul.mubr.f32.gmra.mrb[0].mxu0 %v1334
      %v1336 = vpop.f32.mrb[0].mxu0
      %v1337 = vadd.f32 %v1169, %v1336
      %v1338 = vpop.f32.mrb[0].mxu0
      %1339 = vmatprep.mubr.f32.mxu0 0.0
      %v1340 = vand.u32 %v814, 4294901760
      %v1341 = vsub.f32 %v814, %v1340
      %1342 = vmatmul.mubr.f32.gmra.mrb[0].mxu0 %v1341
      %v1343 = vpop.f32.mrb[0].mxu0
      %v1344 = vadd.f32 %v1175, %v1343
      %v1345 = vpop.f32.mrb[0].mxu0
      %1346 = vmatprep.mubr.f32.mxu0 0.0
      %v1347 = vand.u32 %v817, 4294901760
      %v1348 = vsub.f32 %v817, %v1347
      %1349 = vmatmul.mubr.f32.gmra.mrb[0].mxu0 %v1348
      %v1350 = vpop.f32.mrb[0].mxu0
      %v1351 = vadd.f32 %v1181, %v1350
      %v1352 = vpop.f32.mrb[0].mxu0
      %1353 = vmatprep.mubr.f32.mxu0 0.0
      %v1354 = vand.u32 %v820, 4294901760
      %v1355 = vsub.f32 %v820, %v1354
      %1356 = vmatmul.mubr.f32.gmra.mrb[0].mxu0 %v1355
      %v1357 = vpop.f32.mrb[0].mxu0
      %v1358 = vadd.f32 %v1187, %v1357
      %v1359 = vpop.f32.mrb[0].mxu0
      %1360 = vmatprep.mubr.f32.mxu0 0.0
      %v1361 = vand.u32 %v823, 4294901760
      %v1362 = vsub.f32 %v823, %v1361
      %1363 = vmatmul.mubr.f32.gmra.mrb[0].mxu0 %v1362
      %v1364 = vpop.f32.mrb[0].mxu0
      %v1365 = vadd.f32 %v1193, %v1364
      %v1366 = vpop.f32.mrb[0].mxu0
      %1367 = vmatprep.mubr.f32.mxu0 0.0
      %v1368 = vand.u32 %v826, 4294901760
      %v1369 = vsub.f32 %v826, %v1368
      %1370 = vmatmul.mubr.f32.gmra.mrb[0].mxu0 %v1369
      %v1371 = vpop.f32.mrb[0].mxu0
      %v1372 = vadd.f32 %v1199, %v1371
      %v1373 = vpop.f32.mrb[0].mxu0
      %1374 = vmatprep.mubr.f32.mxu0 0.0
      %v1375 = vand.u32 %v829, 4294901760
      %v1376 = vsub.f32 %v829, %v1375
      %1377 = vmatmul.mubr.f32.gmra.mrb[0].mxu0 %v1376
      %v1378 = vpop.f32.mrb[0].mxu0
      %v1379 = vadd.f32 %v1205, %v1378
      %v1380 = vpop.f32.mrb[0].mxu0
      %1381 = vmatprep.mubr.f32.mxu0 0.0
      %v1382 = vand.u32 %v832, 4294901760
      %v1383 = vsub.f32 %v832, %v1382
      %1384 = vmatmul.mubr.f32.gmra.mrb[0].mxu0 %v1383
      %v1385 = vpop.f32.mrb[0].mxu0
      %v1386 = vadd.f32 %v1211, %v1385
      %v1387 = vpop.f32.mrb[0].mxu0
      %1388 = vmatprep.mubr.f32.mxu0 0.0
      %v1389 = vand.u32 %v835, 4294901760
      %v1390 = vsub.f32 %v835, %v1389
      %1391 = vmatmul.mubr.f32.gmra.mrb[0].mxu0 %v1390
      %v1392 = vpop.f32.mrb[0].mxu0
      %v1393 = vadd.f32 %v1217, %v1392
      %v1394 = vpop.f32.mrb[0].mxu0
      %1395 = vmatprep.mubr.f32.mxu0 0.0
      %v1396 = vand.u32 %v838, 4294901760
      %v1397 = vsub.f32 %v838, %v1396
      %1398 = vmatmul.mubr.f32.gmra.mrb[0].mxu0 %v1397
      %v1399 = vpop.f32.mrb[0].mxu0
      %v1400 = vadd.f32 %v1223, %v1399
      %v1401 = vpop.f32.mrb[0].mxu0
      %1402 = vmatprep.mubr.f32.mxu0 0.0
      %v1403 = vand.u32 %v841, 4294901760
      %v1404 = vsub.f32 %v841, %v1403
      %1405 = vmatmul.mubr.f32.gmra.mrb[0].mxu0 %v1404
      %v1406 = vpop.f32.mrb[0].mxu0
      %v1407 = vadd.f32 %v1229, %v1406
      %v1408 = vpop.f32.mrb[0].mxu0
      %1409 = vmatprep.mubr.f32.mxu0 0.0
      %v1410 = vand.u32 %v844, 4294901760
      %v1411 = vsub.f32 %v844, %v1410
      %1412 = vmatmul.mubr.f32.gmra.mrb[0].mxu0 %v1411
      %v1413 = vpop.f32.mrb[0].mxu0
      %v1414 = vadd.f32 %v1235, %v1413
      %v1415 = vpop.f32.mrb[0].mxu0
      %1416 = vdwg.mxu0
      %1417 = vmatprep.subr.mxu0 0.0
      %v1418 = vand.u32 %v731, 4294901760
      %1419 = vmatpush1.msra.mxu0 %v1418
      %1420 = vmatprep.subr.mxu0 0.0
      %1421 = vmatpush1.msra.mxu0 0.0
      %1422 = vmatprep.subr.mxu0 0.0
      %1423 = vmatpush1.msra.mxu0 0.0
      %1424 = vmatprep.subr.mxu0 0.0
      %1425 = vmatpush1.msra.mxu0 0.0
      %1426 = vmatprep.subr.mxu0 0.0
      %1427 = vmatpush1.msra.mxu0 0.0
      %1428 = vmatprep.subr.mxu0 0.0
      %1429 = vmatpush1.msra.mxu0 0.0
      %1430 = vmatprep.subr.mxu0 0.0
      %1431 = vmatpush1.msra.mxu0 0.0
      %1432 = vmatprep.subr.mxu0 0.0
      %1433 = vmatpush1.msra.mxu0 0.0
      %1434 = vmatprep.subr.mxu0 0.0
      %1435 = vmatpush1.msra.mxu0 0.0
      %1436 = vmatprep.subr.mxu0 0.0
      %1437 = vmatpush1.msra.mxu0 0.0
      %1438 = vmatprep.subr.mxu0 0.0
      %1439 = vmatpush1.msra.mxu0 0.0
      %1440 = vmatprep.subr.mxu0 0.0
      %1441 = vmatpush1.msra.mxu0 0.0
      %1442 = vmatprep.subr.mxu0 0.0
      %1443 = vmatpush1.msra.mxu0 0.0
      %1444 = vmatprep.subr.mxu0 0.0
      %1445 = vmatpush1.msra.mxu0 0.0
      %1446 = vmatprep.subr.mxu0 0.0
      %1447 = vmatpush1.msra.mxu0 0.0
      %1448 = vmatprep.subr.mxu0 0.0
      %1449 = vmatpush1.msra.mxu0 0.0
      %1450 = vmatprep.subr.mxu0 0.0
      %1451 = vmatpush1.msra.mxu0 0.0
      %1452 = vmatprep.subr.mxu0 0.0
      %1453 = vmatpush1.msra.mxu0 0.0
      %1454 = vmatprep.subr.mxu0 0.0
      %1455 = vmatpush1.msra.mxu0 0.0
      %1456 = vmatprep.subr.mxu0 0.0
      %1457 = vmatpush1.msra.mxu0 0.0
      %1458 = vmatprep.subr.mxu0 0.0
      %1459 = vmatpush1.msra.mxu0 0.0
      %1460 = vmatprep.subr.mxu0 0.0
      %1461 = vmatpush1.msra.mxu0 0.0
      %1462 = vmatprep.subr.mxu0 0.0
      %1463 = vmatpush1.msra.mxu0 0.0
      %1464 = vmatprep.subr.mxu0 0.0
      %1465 = vmatpush1.msra.mxu0 0.0
      %1466 = vmatprep.subr.mxu0 0.0
      %1467 = vmatpush1.msra.mxu0 0.0
      %1468 = vmatprep.subr.mxu0 0.0
      %1469 = vmatpush1.msra.mxu0 0.0
      %1470 = vmatprep.subr.mxu0 0.0
      %1471 = vmatpush1.msra.mxu0 0.0
      %1472 = vmatprep.subr.mxu0 0.0
      %1473 = vmatpush1.msra.mxu0 0.0
      %1474 = vmatprep.subr.mxu0 0.0
      %1475 = vmatpush1.msra.mxu0 0.0
      %1476 = vmatprep.subr.mxu0 0.0
      %1477 = vmatpush1.msra.mxu0 0.0
      %1478 = vmatprep.subr.mxu0 0.0
      %1479 = vmatpush1.msra.mxu0 0.0
      %1480 = vmatprep.subr.mxu0 0.0
      %1481 = vmatpush1.msra.mxu0 0.0
      %1482 = vmatprep.mubr.f32.mxu0 0.0
      %v1483 = vand.u32 %v799, 4294901760
      %v1484 = vsub.f32 %v799, %v1483
      %v1485 = vand.u32 %v1484, 4294901760
      %1486 = vmatmul.mubr.f32.gmra.mrb[0].mxu0 %v1485
      %v1487 = vpop.f32.mrb[0].mxu0
      %v1488 = vadd.f32 %v1309, %v1487
      %v1489 = vpop.f32.mrb[0].mxu0
      %1490 = vmatprep.mubr.f32.mxu0 0.0
      %v1491 = vand.u32 %v802, 4294901760
      %v1492 = vsub.f32 %v802, %v1491
      %v1493 = vand.u32 %v1492, 4294901760
      %1494 = vmatmul.mubr.f32.gmra.mrb[0].mxu0 %v1493
      %v1495 = vpop.f32.mrb[0].mxu0
      %v1496 = vadd.f32 %v1316, %v1495
      %v1497 = vpop.f32.mrb[0].mxu0
      %1498 = vmatprep.mubr.f32.mxu0 0.0
      %v1499 = vand.u32 %v805, 4294901760
      %v1500 = vsub.f32 %v805, %v1499
      %v1501 = vand.u32 %v1500, 4294901760
      %1502 = vmatmul.mubr.f32.gmra.mrb[0].mxu0 %v1501
      %v1503 = vpop.f32.mrb[0].mxu0
      %v1504 = vadd.f32 %v1323, %v1503
      %v1505 = vpop.f32.mrb[0].mxu0
      %1506 = vmatprep.mubr.f32.mxu0 0.0
      %v1507 = vand.u32 %v808, 4294901760
      %v1508 = vsub.f32 %v808, %v1507
      %v1509 = vand.u32 %v1508, 4294901760
      %1510 = vmatmul.mubr.f32.gmra.mrb[0].mxu0 %v1509
      %v1511 = vpop.f32.mrb[0].mxu0
      %v1512 = vadd.f32 %v1330, %v1511
      %v1513 = vpop.f32.mrb[0].mxu0
      %1514 = vmatprep.mubr.f32.mxu0 0.0
      %v1515 = vand.u32 %v811, 4294901760
      %v1516 = vsub.f32 %v811, %v1515
      %v1517 = vand.u32 %v1516, 4294901760
      %1518 = vmatmul.mubr.f32.gmra.mrb[0].mxu0 %v1517
      %v1519 = vpop.f32.mrb[0].mxu0
      %v1520 = vadd.f32 %v1337, %v1519
      %v1521 = vpop.f32.mrb[0].mxu0
      %1522 = vmatprep.mubr.f32.mxu0 0.0
      %v1523 = vand.u32 %v814, 4294901760
      %v1524 = vsub.f32 %v814, %v1523
      %v1525 = vand.u32 %v1524, 4294901760
      %1526 = vmatmul.mubr.f32.gmra.mrb[0].mxu0 %v1525
      %v1527 = vpop.f32.mrb[0].mxu0
      %v1528 = vadd.f32 %v1344, %v1527
      %v1529 = vpop.f32.mrb[0].mxu0
      %1530 = vmatprep.mubr.f32.mxu0 0.0
      %v1531 = vand.u32 %v817, 4294901760
      %v1532 = vsub.f32 %v817, %v1531
      %v1533 = vand.u32 %v1532, 4294901760
      %1534 = vmatmul.mubr.f32.gmra.mrb[0].mxu0 %v1533
      %v1535 = vpop.f32.mrb[0].mxu0
      %v1536 = vadd.f32 %v1351, %v1535
      %v1537 = vpop.f32.mrb[0].mxu0
      %1538 = vmatprep.mubr.f32.mxu0 0.0
      %v1539 = vand.u32 %v820, 4294901760
      %v1540 = vsub.f32 %v820, %v1539
      %v1541 = vand.u32 %v1540, 4294901760
      %1542 = vmatmul.mubr.f32.gmra.mrb[0].mxu0 %v1541
      %v1543 = vpop.f32.mrb[0].mxu0
      %v1544 = vadd.f32 %v1358, %v1543
      %v1545 = vpop.f32.mrb[0].mxu0
      %1546 = vmatprep.mubr.f32.mxu0 0.0
      %v1547 = vand.u32 %v823, 4294901760
      %v1548 = vsub.f32 %v823, %v1547
      %v1549 = vand.u32 %v1548, 4294901760
      %1550 = vmatmul.mubr.f32.gmra.mrb[0].mxu0 %v1549
      %v1551 = vpop.f32.mrb[0].mxu0
      %v1552 = vadd.f32 %v1365, %v1551
      %v1553 = vpop.f32.mrb[0].mxu0
      %1554 = vmatprep.mubr.f32.mxu0 0.0
      %v1555 = vand.u32 %v826, 4294901760
      %v1556 = vsub.f32 %v826, %v1555
      %v1557 = vand.u32 %v1556, 4294901760
      %1558 = vmatmul.mubr.f32.gmra.mrb[0].mxu0 %v1557
      %v1559 = vpop.f32.mrb[0].mxu0
      %v1560 = vadd.f32 %v1372, %v1559
      %v1561 = vpop.f32.mrb[0].mxu0
      %1562 = vmatprep.mubr.f32.mxu0 0.0
      %v1563 = vand.u32 %v829, 4294901760
      %v1564 = vsub.f32 %v829, %v1563
      %v1565 = vand.u32 %v1564, 4294901760
      %1566 = vmatmul.mubr.f32.gmra.mrb[0].mxu0 %v1565
      %v1567 = vpop.f32.mrb[0].mxu0
      %v1568 = vadd.f32 %v1379, %v1567
      %v1569 = vpop.f32.mrb[0].mxu0
      %1570 = vmatprep.mubr.f32.mxu0 0.0
      %v1571 = vand.u32 %v832, 4294901760
      %v1572 = vsub.f32 %v832, %v1571
      %v1573 = vand.u32 %v1572, 4294901760
      %1574 = vmatmul.mubr.f32.gmra.mrb[0].mxu0 %v1573
      %v1575 = vpop.f32.mrb[0].mxu0
      %v1576 = vadd.f32 %v1386, %v1575
      %v1577 = vpop.f32.mrb[0].mxu0
      %1578 = vmatprep.mubr.f32.mxu0 0.0
      %v1579 = vand.u32 %v835, 4294901760
      %v1580 = vsub.f32 %v835, %v1579
      %v1581 = vand.u32 %v1580, 4294901760
      %1582 = vmatmul.mubr.f32.gmra.mrb[0].mxu0 %v1581
      %v1583 = vpop.f32.mrb[0].mxu0
      %v1584 = vadd.f32 %v1393, %v1583
      %v1585 = vpop.f32.mrb[0].mxu0
      %1586 = vmatprep.mubr.f32.mxu0 0.0
      %v1587 = vand.u32 %v838, 4294901760
      %v1588 = vsub.f32 %v838, %v1587
      %v1589 = vand.u32 %v1588, 4294901760
      %1590 = vmatmul.mubr.f32.gmra.mrb[0].mxu0 %v1589
      %v1591 = vpop.f32.mrb[0].mxu0
      %v1592 = vadd.f32 %v1400, %v1591
      %v1593 = vpop.f32.mrb[0].mxu0
      %1594 = vmatprep.mubr.f32.mxu0 0.0
      %v1595 = vand.u32 %v841, 4294901760
      %v1596 = vsub.f32 %v841, %v1595
      %v1597 = vand.u32 %v1596, 4294901760
      %1598 = vmatmul.mubr.f32.gmra.mrb[0].mxu0 %v1597
      %v1599 = vpop.f32.mrb[0].mxu0
      %v1600 = vadd.f32 %v1407, %v1599
      %v1601 = vpop.f32.mrb[0].mxu0
      %1602 = vmatprep.mubr.f32.mxu0 0.0
      %v1603 = vand.u32 %v844, 4294901760
      %v1604 = vsub.f32 %v844, %v1603
      %v1605 = vand.u32 %v1604, 4294901760
      %1606 = vmatmul.mubr.f32.gmra.mrb[0].mxu0 %v1605
      %v1607 = vpop.f32.mrb[0].mxu0
      %v1608 = vadd.f32 %v1414, %v1607
      %v1609 = vpop.f32.mrb[0].mxu0
      %1610 = vdwg.mxu0
      %1611 = vmatprep.subr.mxu0 0.0
      %v1612 = vand.u32 %v731, 4294901760
      %v1613 = vsub.f32 %v731, %v1612
      %v1614 = vand.u32 %v1613, 4294901760
      %1615 = vmatpush1.msra.mxu0 %v1614
      %1616 = vmatprep.subr.mxu0 0.0
      %1617 = vmatpush1.msra.mxu0 0.0
      %1618 = vmatprep.subr.mxu0 0.0
      %1619 = vmatpush1.msra.mxu0 0.0
      %1620 = vmatprep.subr.mxu0 0.0
      %1621 = vmatpush1.msra.mxu0 0.0
      %1622 = vmatprep.subr.mxu0 0.0
      %1623 = vmatpush1.msra.mxu0 0.0
      %1624 = vmatprep.subr.mxu0 0.0
      %1625 = vmatpush1.msra.mxu0 0.0
      %1626 = vmatprep.subr.mxu0 0.0
      %1627 = vmatpush1.msra.mxu0 0.0
      %1628 = vmatprep.subr.mxu0 0.0
      %1629 = vmatpush1.msra.mxu0 0.0
      %1630 = vmatprep.subr.mxu0 0.0
      %1631 = vmatpush1.msra.mxu0 0.0
      %1632 = vmatprep.subr.mxu0 0.0
      %1633 = vmatpush1.msra.mxu0 0.0
      %1634 = vmatprep.subr.mxu0 0.0
      %1635 = vmatpush1.msra.mxu0 0.0
      %1636 = vmatprep.subr.mxu0 0.0
      %1637 = vmatpush1.msra.mxu0 0.0
      %1638 = vmatprep.subr.mxu0 0.0
      %1639 = vmatpush1.msra.mxu0 0.0
      %1640 = vmatprep.subr.mxu0 0.0
      %1641 = vmatpush1.msra.mxu0 0.0
      %1642 = vmatprep.subr.mxu0 0.0
      %1643 = vmatpush1.msra.mxu0 0.0
      %1644 = vmatprep.subr.mxu0 0.0
      %1645 = vmatpush1.msra.mxu0 0.0
      %1646 = vmatprep.subr.mxu0 0.0
      %1647 = vmatpush1.msra.mxu0 0.0
      %1648 = vmatprep.subr.mxu0 0.0
      %1649 = vmatpush1.msra.mxu0 0.0
      %1650 = vmatprep.subr.mxu0 0.0
      %1651 = vmatpush1.msra.mxu0 0.0
      %1652 = vmatprep.subr.mxu0 0.0
      %1653 = vmatpush1.msra.mxu0 0.0
      %1654 = vmatprep.subr.mxu0 0.0
      %1655 = vmatpush1.msra.mxu0 0.0
      %1656 = vmatprep.subr.mxu0 0.0
      %1657 = vmatpush1.msra.mxu0 0.0
      %1658 = vmatprep.subr.mxu0 0.0
      %1659 = vmatpush1.msra.mxu0 0.0
      %1660 = vmatprep.subr.mxu0 0.0
      %1661 = vmatpush1.msra.mxu0 0.0
      %1662 = vmatprep.subr.mxu0 0.0
      %1663 = vmatpush1.msra.mxu0 0.0
      %1664 = vmatprep.subr.mxu0 0.0
      %1665 = vmatpush1.msra.mxu0 0.0
      %1666 = vmatprep.subr.mxu0 0.0
      %1667 = vmatpush1.msra.mxu0 0.0
      %1668 = vmatprep.subr.mxu0 0.0
      %1669 = vmatpush1.msra.mxu0 0.0
      %1670 = vmatprep.subr.mxu0 0.0
      %1671 = vmatpush1.msra.mxu0 0.0
      %1672 = vmatprep.subr.mxu0 0.0
      %1673 = vmatpush1.msra.mxu0 0.0
      %1674 = vmatprep.subr.mxu0 0.0
      %1675 = vmatpush1.msra.mxu0 0.0
      %1676 = vmatprep.subr.mxu0 0.0
      %1677 = vmatpush1.msra.mxu0 0.0
      %1678 = vmatprep.mubr.f32.mxu0 0.0
      %v1679 = vand.u32 %v799, 4294901760
      %1680 = vmatmul.mubr.f32.gmra.mrb[0].mxu0 %v1679
      %v1681 = vpop.f32.mrb[0].mxu0
      %v1682 = vadd.f32 %v1488, %v1681
      %v1683 = vpop.f32.mrb[0].mxu0
      %1684 = vmatprep.mubr.f32.mxu0 0.0
      %v1685 = vand.u32 %v802, 4294901760
      %1686 = vmatmul.mubr.f32.gmra.mrb[0].mxu0 %v1685
      %v1687 = vpop.f32.mrb[0].mxu0
      %v1688 = vadd.f32 %v1496, %v1687
      %v1689 = vpop.f32.mrb[0].mxu0
      %1690 = vmatprep.mubr.f32.mxu0 0.0
      %v1691 = vand.u32 %v805, 4294901760
      %1692 = vmatmul.mubr.f32.gmra.mrb[0].mxu0 %v1691
      %v1693 = vpop.f32.mrb[0].mxu0
      %v1694 = vadd.f32 %v1504, %v1693
      %v1695 = vpop.f32.mrb[0].mxu0
      %1696 = vmatprep.mubr.f32.mxu0 0.0
      %v1697 = vand.u32 %v808, 4294901760
      %1698 = vmatmul.mubr.f32.gmra.mrb[0].mxu0 %v1697
      %v1699 = vpop.f32.mrb[0].mxu0
      %v1700 = vadd.f32 %v1512, %v1699
      %v1701 = vpop.f32.mrb[0].mxu0
      %1702 = vmatprep.mubr.f32.mxu0 0.0
      %v1703 = vand.u32 %v811, 4294901760
      %1704 = vmatmul.mubr.f32.gmra.mrb[0].mxu0 %v1703
      %v1705 = vpop.f32.mrb[0].mxu0
      %v1706 = vadd.f32 %v1520, %v1705
      %v1707 = vpop.f32.mrb[0].mxu0
      %1708 = vmatprep.mubr.f32.mxu0 0.0
      %v1709 = vand.u32 %v814, 4294901760
      %1710 = vmatmul.mubr.f32.gmra.mrb[0].mxu0 %v1709
      %v1711 = vpop.f32.mrb[0].mxu0
      %v1712 = vadd.f32 %v1528, %v1711
      %v1713 = vpop.f32.mrb[0].mxu0
      %1714 = vmatprep.mubr.f32.mxu0 0.0
      %v1715 = vand.u32 %v817, 4294901760
      %1716 = vmatmul.mubr.f32.gmra.mrb[0].mxu0 %v1715
      %v1717 = vpop.f32.mrb[0].mxu0
      %v1718 = vadd.f32 %v1536, %v1717
      %v1719 = vpop.f32.mrb[0].mxu0
      %1720 = vmatprep.mubr.f32.mxu0 0.0
      %v1721 = vand.u32 %v820, 4294901760
      %1722 = vmatmul.mubr.f32.gmra.mrb[0].mxu0 %v1721
      %v1723 = vpop.f32.mrb[0].mxu0
      %v1724 = vadd.f32 %v1544, %v1723
      %v1725 = vpop.f32.mrb[0].mxu0
      %1726 = vmatprep.mubr.f32.mxu0 0.0
      %v1727 = vand.u32 %v823, 4294901760
      %1728 = vmatmul.mubr.f32.gmra.mrb[0].mxu0 %v1727
      %v1729 = vpop.f32.mrb[0].mxu0
      %v1730 = vadd.f32 %v1552, %v1729
      %v1731 = vpop.f32.mrb[0].mxu0
      %1732 = vmatprep.mubr.f32.mxu0 0.0
      %v1733 = vand.u32 %v826, 4294901760
      %1734 = vmatmul.mubr.f32.gmra.mrb[0].mxu0 %v1733
      %v1735 = vpop.f32.mrb[0].mxu0
      %v1736 = vadd.f32 %v1560, %v1735
      %v1737 = vpop.f32.mrb[0].mxu0
      %1738 = vmatprep.mubr.f32.mxu0 0.0
      %v1739 = vand.u32 %v829, 4294901760
      %1740 = vmatmul.mubr.f32.gmra.mrb[0].mxu0 %v1739
      %v1741 = vpop.f32.mrb[0].mxu0
      %v1742 = vadd.f32 %v1568, %v1741
      %v1743 = vpop.f32.mrb[0].mxu0
      %1744 = vmatprep.mubr.f32.mxu0 0.0
      %v1745 = vand.u32 %v832, 4294901760
      %1746 = vmatmul.mubr.f32.gmra.mrb[0].mxu0 %v1745
      %v1747 = vpop.f32.mrb[0].mxu0
      %v1748 = vadd.f32 %v1576, %v1747
      %v1749 = vpop.f32.mrb[0].mxu0
      %1750 = vmatprep.mubr.f32.mxu0 0.0
      %v1751 = vand.u32 %v835, 4294901760
      %1752 = vmatmul.mubr.f32.gmra.mrb[0].mxu0 %v1751
      %v1753 = vpop.f32.mrb[0].mxu0
      %v1754 = vadd.f32 %v1584, %v1753
      %v1755 = vpop.f32.mrb[0].mxu0
      %1756 = vmatprep.mubr.f32.mxu0 0.0
      %v1757 = vand.u32 %v838, 4294901760
      %1758 = vmatmul.mubr.f32.gmra.mrb[0].mxu0 %v1757
      %v1759 = vpop.f32.mrb[0].mxu0
      %v1760 = vadd.f32 %v1592, %v1759
      %v1761 = vpop.f32.mrb[0].mxu0
      %1762 = vmatprep.mubr.f32.mxu0 0.0
      %v1763 = vand.u32 %v841, 4294901760
      %1764 = vmatmul.mubr.f32.gmra.mrb[0].mxu0 %v1763
      %v1765 = vpop.f32.mrb[0].mxu0
      %v1766 = vadd.f32 %v1600, %v1765
      %v1767 = vpop.f32.mrb[0].mxu0
      %1768 = vmatprep.mubr.f32.mxu0 0.0
      %v1769 = vand.u32 %v844, 4294901760
      %1770 = vmatmul.mubr.f32.gmra.mrb[0].mxu0 %v1769
      %v1771 = vpop.f32.mrb[0].mxu0
      %v1772 = vadd.f32 %v1608, %v1771
      %v1773 = vpop.f32.mrb[0].mxu0
      %1774 = vdwg.mxu0
      %1775 = vmatprep.subr.mxu0 0.0
      %v1776 = vand.u32 %v731, 4294901760
      %1777 = vmatpush1.msra.mxu0 %v1776
      %1778 = vmatprep.subr.mxu0 0.0
      %1779 = vmatpush1.msra.mxu0 0.0
      %1780 = vmatprep.subr.mxu0 0.0
      %1781 = vmatpush1.msra.mxu0 0.0
      %1782 = vmatprep.subr.mxu0 0.0
      %1783 = vmatpush1.msra.mxu0 0.0
      %1784 = vmatprep.subr.mxu0 0.0
      %1785 = vmatpush1.msra.mxu0 0.0
      %1786 = vmatprep.subr.mxu0 0.0
      %1787 = vmatpush1.msra.mxu0 0.0
      %1788 = vmatprep.subr.mxu0 0.0
      %1789 = vmatpush1.msra.mxu0 0.0
      %1790 = vmatprep.subr.mxu0 0.0
      %1791 = vmatpush1.msra.mxu0 0.0
      %1792 = vmatprep.subr.mxu0 0.0
      %1793 = vmatpush1.msra.mxu0 0.0
      %1794 = vmatprep.subr.mxu0 0.0
      %1795 = vmatpush1.msra.mxu0 0.0
      %1796 = vmatprep.subr.mxu0 0.0
      %1797 = vmatpush1.msra.mxu0 0.0
      %1798 = vmatprep.subr.mxu0 0.0
      %1799 = vmatpush1.msra.mxu0 0.0
      %1800 = vmatprep.subr.mxu0 0.0
      %1801 = vmatpush1.msra.mxu0 0.0
      %1802 = vmatprep.subr.mxu0 0.0
      %1803 = vmatpush1.msra.mxu0 0.0
      %1804 = vmatprep.subr.mxu0 0.0
      %1805 = vmatpush1.msra.mxu0 0.0
      %1806 = vmatprep.subr.mxu0 0.0
      %1807 = vmatpush1.msra.mxu0 0.0
      %1808 = vmatprep.subr.mxu0 0.0
      %1809 = vmatpush1.msra.mxu0 0.0
      %1810 = vmatprep.subr.mxu0 0.0
      %1811 = vmatpush1.msra.mxu0 0.0
      %1812 = vmatprep.subr.mxu0 0.0
      %1813 = vmatpush1.msra.mxu0 0.0
      %1814 = vmatprep.subr.mxu0 0.0
      %1815 = vmatpush1.msra.mxu0 0.0
      %1816 = vmatprep.subr.mxu0 0.0
      %1817 = vmatpush1.msra.mxu0 0.0
      %1818 = vmatprep.subr.mxu0 0.0
      %1819 = vmatpush1.msra.mxu0 0.0
      %1820 = vmatprep.subr.mxu0 0.0
      %1821 = vmatpush1.msra.mxu0 0.0
      %1822 = vmatprep.subr.mxu0 0.0
      %1823 = vmatpush1.msra.mxu0 0.0
      %1824 = vmatprep.subr.mxu0 0.0
      %1825 = vmatpush1.msra.mxu0 0.0
      %1826 = vmatprep.subr.mxu0 0.0
      %1827 = vmatpush1.msra.mxu0 0.0
      %1828 = vmatprep.subr.mxu0 0.0
      %1829 = vmatpush1.msra.mxu0 0.0
      %1830 = vmatprep.subr.mxu0 0.0
      %1831 = vmatpush1.msra.mxu0 0.0
      %1832 = vmatprep.subr.mxu0 0.0
      %1833 = vmatpush1.msra.mxu0 0.0
      %1834 = vmatprep.subr.mxu0 0.0
      %1835 = vmatpush1.msra.mxu0 0.0
      %1836 = vmatprep.subr.mxu0 0.0
      %1837 = vmatpush1.msra.mxu0 0.0
      %1838 = vmatprep.subr.mxu0 0.0
      %1839 = vmatpush1.msra.mxu0 0.0
      %1840 = vmatprep.mubr.f32.mxu0 0.0
      %v1841 = vand.u32 %v799, 4294901760
      %1842 = vmatmul.mubr.f32.gmra.mrb[0].mxu0 %v1841
      %v1843 = vpop.f32.mrb[0].mxu0
      %v1844 = vadd.f32 %v1682, %v1843
      %v1845 = vpop.f32.mrb[0].mxu0
      %1846 = vmatprep.mubr.f32.mxu0 0.0
      %v1847 = vand.u32 %v802, 4294901760
      %1848 = vmatmul.mubr.f32.gmra.mrb[0].mxu0 %v1847
      %v1849 = vpop.f32.mrb[0].mxu0
      %v1850 = vadd.f32 %v1688, %v1849
      %v1851 = vpop.f32.mrb[0].mxu0
      %1852 = vmatprep.mubr.f32.mxu0 0.0
      %v1853 = vand.u32 %v805, 4294901760
      %1854 = vmatmul.mubr.f32.gmra.mrb[0].mxu0 %v1853
      %v1855 = vpop.f32.mrb[0].mxu0
      %v1856 = vadd.f32 %v1694, %v1855
      %v1857 = vpop.f32.mrb[0].mxu0
      %1858 = vmatprep.mubr.f32.mxu0 0.0
      %v1859 = vand.u32 %v808, 4294901760
      %1860 = vmatmul.mubr.f32.gmra.mrb[0].mxu0 %v1859
      %v1861 = vpop.f32.mrb[0].mxu0
      %v1862 = vadd.f32 %v1700, %v1861
      %v1863 = vpop.f32.mrb[0].mxu0
      %1864 = vmatprep.mubr.f32.mxu0 0.0
      %v1865 = vand.u32 %v811, 4294901760
      %1866 = vmatmul.mubr.f32.gmra.mrb[0].mxu0 %v1865
      %v1867 = vpop.f32.mrb[0].mxu0
      %v1868 = vadd.f32 %v1706, %v1867
      %v1869 = vpop.f32.mrb[0].mxu0
      %1870 = vmatprep.mubr.f32.mxu0 0.0
      %v1871 = vand.u32 %v814, 4294901760
      %1872 = vmatmul.mubr.f32.gmra.mrb[0].mxu0 %v1871
      %v1873 = vpop.f32.mrb[0].mxu0
      %v1874 = vadd.f32 %v1712, %v1873
      %v1875 = vpop.f32.mrb[0].mxu0
      %1876 = vmatprep.mubr.f32.mxu0 0.0
      %v1877 = vand.u32 %v817, 4294901760
      %1878 = vmatmul.mubr.f32.gmra.mrb[0].mxu0 %v1877
      %v1879 = vpop.f32.mrb[0].mxu0
      %v1880 = vadd.f32 %v1718, %v1879
      %v1881 = vpop.f32.mrb[0].mxu0
      %1882 = vmatprep.mubr.f32.mxu0 0.0
      %v1883 = vand.u32 %v820, 4294901760
      %1884 = vmatmul.mubr.f32.gmra.mrb[0].mxu0 %v1883
      %v1885 = vpop.f32.mrb[0].mxu0
      %v1886 = vadd.f32 %v1724, %v1885
      %v1887 = vpop.f32.mrb[0].mxu0
      %1888 = vmatprep.mubr.f32.mxu0 0.0
      %v1889 = vand.u32 %v823, 4294901760
      %1890 = vmatmul.mubr.f32.gmra.mrb[0].mxu0 %v1889
      %v1891 = vpop.f32.mrb[0].mxu0
      %v1892 = vadd.f32 %v1730, %v1891
      %v1893 = vpop.f32.mrb[0].mxu0
      %1894 = vmatprep.mubr.f32.mxu0 0.0
      %v1895 = vand.u32 %v826, 4294901760
      %1896 = vmatmul.mubr.f32.gmra.mrb[0].mxu0 %v1895
      %v1897 = vpop.f32.mrb[0].mxu0
      %v1898 = vadd.f32 %v1736, %v1897
      %v1899 = vpop.f32.mrb[0].mxu0
      %1900 = vmatprep.mubr.f32.mxu0 0.0
      %v1901 = vand.u32 %v829, 4294901760
      %1902 = vmatmul.mubr.f32.gmra.mrb[0].mxu0 %v1901
      %v1903 = vpop.f32.mrb[0].mxu0
      %v1904 = vadd.f32 %v1742, %v1903
      %v1905 = vpop.f32.mrb[0].mxu0
      %1906 = vmatprep.mubr.f32.mxu0 0.0
      %v1907 = vand.u32 %v832, 4294901760
      %1908 = vmatmul.mubr.f32.gmra.mrb[0].mxu0 %v1907
      %v1909 = vpop.f32.mrb[0].mxu0
      %v1910 = vadd.f32 %v1748, %v1909
      %v1911 = vpop.f32.mrb[0].mxu0
      %1912 = vmatprep.mubr.f32.mxu0 0.0
      %v1913 = vand.u32 %v835, 4294901760
      %1914 = vmatmul.mubr.f32.gmra.mrb[0].mxu0 %v1913
      %v1915 = vpop.f32.mrb[0].mxu0
      %v1916 = vadd.f32 %v1754, %v1915
      %v1917 = vpop.f32.mrb[0].mxu0
      %1918 = vmatprep.mubr.f32.mxu0 0.0
      %v1919 = vand.u32 %v838, 4294901760
      %1920 = vmatmul.mubr.f32.gmra.mrb[0].mxu0 %v1919
      %v1921 = vpop.f32.mrb[0].mxu0
      %v1922 = vadd.f32 %v1760, %v1921
      %v1923 = vpop.f32.mrb[0].mxu0
      %1924 = vmatprep.mubr.f32.mxu0 0.0
      %v1925 = vand.u32 %v841, 4294901760
      %1926 = vmatmul.mubr.f32.gmra.mrb[0].mxu0 %v1925
      %v1927 = vpop.f32.mrb[0].mxu0
      %v1928 = vadd.f32 %v1766, %v1927
      %v1929 = vpop.f32.mrb[0].mxu0
      %1930 = vmatprep.mubr.f32.mxu0 0.0
      %v1931 = vand.u32 %v844, 4294901760
      %1932 = vmatmul.mubr.f32.gmra.mrb[0].mxu0 %v1931
      %v1933 = vpop.f32.mrb[0].mxu0
      %v1934 = vadd.f32 %v1772, %v1933
      %v1935 = vpop.f32.mrb[0].mxu0
      %1936 = vdwg.mxu0
      %v1937 = vadd.s32 %v756, 8
      %v1938 = vadd.s32 %v756, 16
      %v1939 = vadd.s32 %v756, 24
      %v1940 = vadd.s32 %v756, 32
      %v1941 = vadd.s32 %v756, 40
      %v1942 = vadd.s32 %v756, 48
      %v1943 = vadd.s32 %v756, 56
      %v1944 = vadd.s32 %v756, 64
      %v1945 = vadd.s32 %v756, 72
      %v1946 = vadd.s32 %v756, 80
      %v1947 = vadd.s32 %v756, 88
      %v1948 = vadd.s32 %v756, 96
      %v1949 = vadd.s32 %v756, 104
      %v1950 = vadd.s32 %v756, 112
      %v1951 = vadd.s32 %v756, 120
      %v1952 = vcvt.s32.f32 %v756
      %v1953 = vcvt.s32.f32 %v1937
      %v1954 = vcvt.s32.f32 %v1938
      %v1955 = vcvt.s32.f32 %v1939
      %v1956 = vcvt.s32.f32 %v1940
      %v1957 = vcvt.s32.f32 %v1941
      %v1958 = vcvt.s32.f32 %v1942
      %v1959 = vcvt.s32.f32 %v1943
      %v1960 = vcvt.s32.f32 %v1944
      %v1961 = vcvt.s32.f32 %v1945
      %v1962 = vcvt.s32.f32 %v1946
      %v1963 = vcvt.s32.f32 %v1947
      %v1964 = vcvt.s32.f32 %v1948
      %v1965 = vcvt.s32.f32 %v1949
      %v1966 = vcvt.s32.f32 %v1950
      %v1967 = vcvt.s32.f32 %v1951
      %v1968 = vadd.f32 %v1952, 0.5
      %v1969 = vadd.f32 %v1953, 0.5
      %v1970 = vadd.f32 %v1954, 0.5
      %v1971 = vadd.f32 %v1955, 0.5
      %v1972 = vadd.f32 %v1956, 0.5
      %v1973 = vadd.f32 %v1957, 0.5
      %v1974 = vadd.f32 %v1958, 0.5
      %v1975 = vadd.f32 %v1959, 0.5
      %v1976 = vadd.f32 %v1960, 0.5
      %v1977 = vadd.f32 %v1961, 0.5
      %v1978 = vadd.f32 %v1962, 0.5
      %v1979 = vadd.f32 %v1963, 0.5
      %v1980 = vadd.f32 %v1964, 0.5
      %v1981 = vadd.f32 %v1965, 0.5
      %v1982 = vadd.f32 %v1966, 0.5
      %v1983 = vadd.f32 %v1967, 0.5
      %v1984 = vmul.f32 %v1968, 0.0625
      %v1985 = vmul.f32 %v1969, 0.0625
      %v1986 = vmul.f32 %v1970, 0.0625
      %v1987 = vmul.f32 %v1971, 0.0625
      %v1988 = vmul.f32 %v1972, 0.0625
      %v1989 = vmul.f32 %v1973, 0.0625
      %v1990 = vmul.f32 %v1974, 0.0625
      %v1991 = vmul.f32 %v1975, 0.0625
      %v1992 = vmul.f32 %v1976, 0.0625
      %v1993 = vmul.f32 %v1977, 0.0625
      %v1994 = vmul.f32 %v1978, 0.0625
      %v1995 = vmul.f32 %v1979, 0.0625
      %v1996 = vmul.f32 %v1980, 0.0625
      %v1997 = vmul.f32 %v1981, 0.0625
      %v1998 = vmul.f32 %v1982, 0.0625
      %v1999 = vmul.f32 %v1983, 0.0625
      %v2000 = vfloor.f32 %v1984
      %v2001 = vfloor.f32 %v1985
      %v2002 = vfloor.f32 %v1986
      %v2003 = vfloor.f32 %v1987
      %v2004 = vfloor.f32 %v1988
      %v2005 = vfloor.f32 %v1989
      %v2006 = vfloor.f32 %v1990
      %v2007 = vfloor.f32 %v1991
      %v2008 = vfloor.f32 %v1992
      %v2009 = vfloor.f32 %v1993
      %v2010 = vfloor.f32 %v1994
      %v2011 = vfloor.f32 %v1995
      %v2012 = vfloor.f32 %v1996
      %v2013 = vfloor.f32 %v1997
      %v2014 = vfloor.f32 %v1998
      %v2015 = vfloor.f32 %v1999
      %v2016 = vmul.f32 %v2000, 16.0
      %v2017 = vmul.f32 %v2001, 16.0
      %v2018 = vmul.f32 %v2002, 16.0
      %v2019 = vmul.f32 %v2003, 16.0
      %v2020 = vmul.f32 %v2004, 16.0
      %v2021 = vmul.f32 %v2005, 16.0
      %v2022 = vmul.f32 %v2006, 16.0
      %v2023 = vmul.f32 %v2007, 16.0
      %v2024 = vmul.f32 %v2008, 16.0
      %v2025 = vmul.f32 %v2009, 16.0
      %v2026 = vmul.f32 %v2010, 16.0
      %v2027 = vmul.f32 %v2011, 16.0
      %v2028 = vmul.f32 %v2012, 16.0
      %v2029 = vmul.f32 %v2013, 16.0
      %v2030 = vmul.f32 %v2014, 16.0
      %v2031 = vmul.f32 %v2015, 16.0
      %v2032 = vsub.f32 %v1952, %v2016
      %v2033 = vsub.f32 %v1953, %v2017
      %v2034 = vsub.f32 %v1954, %v2018
      %v2035 = vsub.f32 %v1955, %v2019
      %v2036 = vsub.f32 %v1956, %v2020
      %v2037 = vsub.f32 %v1957, %v2021
      %v2038 = vsub.f32 %v1958, %v2022
      %v2039 = vsub.f32 %v1959, %v2023
      %v2040 = vsub.f32 %v1960, %v2024
      %v2041 = vsub.f32 %v1961, %v2025
      %v2042 = vsub.f32 %v1962, %v2026
      %v2043 = vsub.f32 %v1963, %v2027
      %v2044 = vsub.f32 %v1964, %v2028
      %v2045 = vsub.f32 %v1965, %v2029
      %v2046 = vsub.f32 %v1966, %v2030
      %v2047 = vsub.f32 %v1967, %v2031
      %vm2048 = vcmp.eq.f32.partialorder %v1844, %v2032
      %vm2049 = vcmp.eq.f32.partialorder %v1850, %v2033
      %vm2050 = vcmp.eq.f32.partialorder %v1856, %v2034
      %vm2051 = vcmp.eq.f32.partialorder %v1862, %v2035
      %vm2052 = vcmp.eq.f32.partialorder %v1868, %v2036
      %vm2053 = vcmp.eq.f32.partialorder %v1874, %v2037
      %vm2054 = vcmp.eq.f32.partialorder %v1880, %v2038
      %vm2055 = vcmp.eq.f32.partialorder %v1886, %v2039
      %vm2056 = vcmp.eq.f32.partialorder %v1892, %v2040
      %vm2057 = vcmp.eq.f32.partialorder %v1898, %v2041
      %vm2058 = vcmp.eq.f32.partialorder %v1904, %v2042
      %vm2059 = vcmp.eq.f32.partialorder %v1910, %v2043
      %vm2060 = vcmp.eq.f32.partialorder %v1916, %v2044
      %vm2061 = vcmp.eq.f32.partialorder %v1922, %v2045
      %vm2062 = vcmp.eq.f32.partialorder %v1928, %v2046
      %vm2063 = vcmp.eq.f32.partialorder %v1934, %v2047
      %v2064 = vsel %vm2048, 1, 0
      %v2065 = vsel %vm2049, 1, 0
      %v2066 = vsel %vm2050, 1, 0
      %v2067 = vsel %vm2051, 1, 0
      %v2068 = vsel %vm2052, 1, 0
      %v2069 = vsel %vm2053, 1, 0
      %v2070 = vsel %vm2054, 1, 0
      %v2071 = vsel %vm2055, 1, 0
      %v2072 = vsel %vm2056, 1, 0
      %v2073 = vsel %vm2057, 1, 0
      %v2074 = vsel %vm2058, 1, 0
      %v2075 = vsel %vm2059, 1, 0
      %v2076 = vsel %vm2060, 1, 0
      %v2077 = vsel %vm2061, 1, 0
      %v2078 = vsel %vm2062, 1, 0
      %v2079 = vsel %vm2063, 1, 0
      %v2080 = vcvt.s32.f32 %v2064
      %v2081 = vcvt.s32.f32 %v2065
      %v2082 = vcvt.s32.f32 %v2066
      %v2083 = vcvt.s32.f32 %v2067
      %v2084 = vcvt.s32.f32 %v2068
      %v2085 = vcvt.s32.f32 %v2069
      %v2086 = vcvt.s32.f32 %v2070
      %v2087 = vcvt.s32.f32 %v2071
      %v2088 = vcvt.s32.f32 %v2072
      %v2089 = vcvt.s32.f32 %v2073
      %v2090 = vcvt.s32.f32 %v2074
      %v2091 = vcvt.s32.f32 %v2075
      %v2092 = vcvt.s32.f32 %v2076
      %v2093 = vcvt.s32.f32 %v2077
      %v2094 = vcvt.s32.f32 %v2078
      %v2095 = vcvt.s32.f32 %v2079
      %2096 = vmatprep.subr.mxu0 0.0
      %v2097 = vand.u32 %v2080, 4294901760
      %2098 = vmatpush1.xpose.msra.mxu0 %v2097
      %2099 = vmatprep.subr.mxu0 0.0
      %v2100 = vand.u32 %v2081, 4294901760
      %2101 = vmatpush1.xpose.msra.mxu0 %v2100
      %2102 = vmatprep.subr.mxu0 0.0
      %v2103 = vand.u32 %v2082, 4294901760
      %2104 = vmatpush1.xpose.msra.mxu0 %v2103
      %2105 = vmatprep.subr.mxu0 0.0
      %v2106 = vand.u32 %v2083, 4294901760
      %2107 = vmatpush1.xpose.msra.mxu0 %v2106
      %2108 = vmatprep.subr.mxu0 0.0
      %v2109 = vand.u32 %v2084, 4294901760
      %2110 = vmatpush1.xpose.msra.mxu0 %v2109
      %2111 = vmatprep.subr.mxu0 0.0
      %v2112 = vand.u32 %v2085, 4294901760
      %2113 = vmatpush1.xpose.msra.mxu0 %v2112
      %2114 = vmatprep.subr.mxu0 0.0
      %v2115 = vand.u32 %v2086, 4294901760
      %2116 = vmatpush1.xpose.msra.mxu0 %v2115
      %2117 = vmatprep.subr.mxu0 0.0
      %v2118 = vand.u32 %v2087, 4294901760
      %2119 = vmatpush1.xpose.msra.mxu0 %v2118
      %2120 = vmatprep.subr.mxu0 0.0
      %v2121 = vand.u32 %v2088, 4294901760
      %2122 = vmatpush1.xpose.msra.mxu0 %v2121
      %2123 = vmatprep.subr.mxu0 0.0
      %v2124 = vand.u32 %v2089, 4294901760
      %2125 = vmatpush1.xpose.msra.mxu0 %v2124
      %2126 = vmatprep.subr.mxu0 0.0
      %v2127 = vand.u32 %v2090, 4294901760
      %2128 = vmatpush1.xpose.msra.mxu0 %v2127
      %2129 = vmatprep.subr.mxu0 0.0
      %v2130 = vand.u32 %v2091, 4294901760
      %2131 = vmatpush1.xpose.msra.mxu0 %v2130
      %2132 = vmatprep.subr.mxu0 0.0
      %v2133 = vand.u32 %v2092, 4294901760
      %2134 = vmatpush1.xpose.msra.mxu0 %v2133
      %2135 = vmatprep.subr.mxu0 0.0
      %v2136 = vand.u32 %v2093, 4294901760
      %2137 = vmatpush1.xpose.msra.mxu0 %v2136
      %2138 = vmatprep.subr.mxu0 0.0
      %v2139 = vand.u32 %v2094, 4294901760
      %2140 = vmatpush1.xpose.msra.mxu0 %v2139
      %2141 = vmatprep.subr.mxu0 0.0
      %v2142 = vand.u32 %v2095, 4294901760
      %2143 = vmatpush1.xpose.msra.mxu0 %v2142
      %2144 = vmatprep.subr.mxu0 0.0
      %2145 = vmatpush1.xpose.msra.mxu0 0.0
      %2146 = vmatprep.subr.mxu0 0.0
      %2147 = vmatpush1.xpose.msra.mxu0 0.0
      %2148 = vmatprep.subr.mxu0 0.0
      %2149 = vmatpush1.xpose.msra.mxu0 0.0
      %2150 = vmatprep.subr.mxu0 0.0
      %2151 = vmatpush1.xpose.msra.mxu0 0.0
      %2152 = vmatprep.subr.mxu0 0.0
      %2153 = vmatpush1.xpose.msra.mxu0 0.0
      %2154 = vmatprep.subr.mxu0 0.0
      %2155 = vmatpush1.xpose.msra.mxu0 0.0
      %2156 = vmatprep.subr.mxu0 0.0
      %2157 = vmatpush1.xpose.msra.mxu0 0.0
      %2158 = vmatprep.subr.mxu0 0.0
      %2159 = vmatpush1.xpose.msra.mxu0 0.0
      %2160 = vmatprep.subr.mxu0 0.0
      %2161 = vmatpush1.xpose.msra.mxu0 0.0
      %2162 = vmatprep.subr.mxu0 0.0
      %2163 = vmatpush1.xpose.msra.mxu0 0.0
      %2164 = vmatprep.subr.mxu0 0.0
      %2165 = vmatpush1.xpose.msra.mxu0 0.0
      %2166 = vmatprep.subr.mxu0 0.0
      %2167 = vmatpush1.xpose.msra.mxu0 0.0
      %2168 = vmatprep.subr.mxu0 0.0
      %2169 = vmatpush1.xpose.msra.mxu0 0.0
      %2170 = vmatprep.subr.mxu0 0.0
      %2171 = vmatpush1.xpose.msra.mxu0 0.0
      %2172 = vmatprep.subr.mxu0 0.0
      %2173 = vmatpush1.xpose.msra.mxu0 0.0
      %2174 = vmatprep.subr.mxu0 0.0
      %2175 = vmatpush1.xpose.msra.mxu0 0.0
      %2176 = vmatprep.mubr.f32.mxu0 0.0
      %v2177 = vand.u32 %v157, 4294901760
      %v2178 = vsub.f32 %v157, %v2177
      %v2179 = vand.u32 %v2178, 4294901760
      %v2180 = vsub.f32 %v2178, %v2179
      %v2181 = vand.u32 %v2180, 4294901760
      %2182 = vmatmul.mubr.f32.gmra.mrb[0].mxu0 %v2181
      %v2183 = vpop.f32.mrb[0].mxu0
      %v2184 = vadd.f32 0.0, %v2183
      %v2185 = vpop.f32.mrb[0].mxu0
      %2186 = vdwg.mxu0
      %2187 = vmatprep.subr.mxu0 0.0
      %v2188 = vand.u32 %v2080, 4294901760
      %v2189 = vsub.f32 %v2080, %v2188
      %v2190 = vand.u32 %v2189, 4294901760
      %v2191 = vsub.f32 %v2189, %v2190
      %v2192 = vand.u32 %v2191, 4294901760
      %2193 = vmatpush1.xpose.msra.mxu0 %v2192
      %2194 = vmatprep.subr.mxu0 0.0
      %v2195 = vand.u32 %v2081, 4294901760
      %v2196 = vsub.f32 %v2081, %v2195
      %v2197 = vand.u32 %v2196, 4294901760
      %v2198 = vsub.f32 %v2196, %v2197
      %v2199 = vand.u32 %v2198, 4294901760
      %2200 = vmatpush1.xpose.msra.mxu0 %v2199
      %2201 = vmatprep.subr.mxu0 0.0
      %v2202 = vand.u32 %v2082, 4294901760
      %v2203 = vsub.f32 %v2082, %v2202
      %v2204 = vand.u32 %v2203, 4294901760
      %v2205 = vsub.f32 %v2203, %v2204
      %v2206 = vand.u32 %v2205, 4294901760
      %2207 = vmatpush1.xpose.msra.mxu0 %v2206
      %2208 = vmatprep.subr.mxu0 0.0
      %v2209 = vand.u32 %v2083, 4294901760
      %v2210 = vsub.f32 %v2083, %v2209
      %v2211 = vand.u32 %v2210, 4294901760
      %v2212 = vsub.f32 %v2210, %v2211
      %v2213 = vand.u32 %v2212, 4294901760
      %2214 = vmatpush1.xpose.msra.mxu0 %v2213
      %2215 = vmatprep.subr.mxu0 0.0
      %v2216 = vand.u32 %v2084, 4294901760
      %v2217 = vsub.f32 %v2084, %v2216
      %v2218 = vand.u32 %v2217, 4294901760
      %v2219 = vsub.f32 %v2217, %v2218
      %v2220 = vand.u32 %v2219, 4294901760
      %2221 = vmatpush1.xpose.msra.mxu0 %v2220
      %2222 = vmatprep.subr.mxu0 0.0
      %v2223 = vand.u32 %v2085, 4294901760
      %v2224 = vsub.f32 %v2085, %v2223
      %v2225 = vand.u32 %v2224, 4294901760
      %v2226 = vsub.f32 %v2224, %v2225
      %v2227 = vand.u32 %v2226, 4294901760
      %2228 = vmatpush1.xpose.msra.mxu0 %v2227
      %2229 = vmatprep.subr.mxu0 0.0
      %v2230 = vand.u32 %v2086, 4294901760
      %v2231 = vsub.f32 %v2086, %v2230
      %v2232 = vand.u32 %v2231, 4294901760
      %v2233 = vsub.f32 %v2231, %v2232
      %v2234 = vand.u32 %v2233, 4294901760
      %2235 = vmatpush1.xpose.msra.mxu0 %v2234
      %2236 = vmatprep.subr.mxu0 0.0
      %v2237 = vand.u32 %v2087, 4294901760
      %v2238 = vsub.f32 %v2087, %v2237
      %v2239 = vand.u32 %v2238, 4294901760
      %v2240 = vsub.f32 %v2238, %v2239
      %v2241 = vand.u32 %v2240, 4294901760
      %2242 = vmatpush1.xpose.msra.mxu0 %v2241
      %2243 = vmatprep.subr.mxu0 0.0
      %v2244 = vand.u32 %v2088, 4294901760
      %v2245 = vsub.f32 %v2088, %v2244
      %v2246 = vand.u32 %v2245, 4294901760
      %v2247 = vsub.f32 %v2245, %v2246
      %v2248 = vand.u32 %v2247, 4294901760
      %2249 = vmatpush1.xpose.msra.mxu0 %v2248
      %2250 = vmatprep.subr.mxu0 0.0
      %v2251 = vand.u32 %v2089, 4294901760
      %v2252 = vsub.f32 %v2089, %v2251
      %v2253 = vand.u32 %v2252, 4294901760
      %v2254 = vsub.f32 %v2252, %v2253
      %v2255 = vand.u32 %v2254, 4294901760
      %2256 = vmatpush1.xpose.msra.mxu0 %v2255
      %2257 = vmatprep.subr.mxu0 0.0
      %v2258 = vand.u32 %v2090, 4294901760
      %v2259 = vsub.f32 %v2090, %v2258
      %v2260 = vand.u32 %v2259, 4294901760
      %v2261 = vsub.f32 %v2259, %v2260
      %v2262 = vand.u32 %v2261, 4294901760
      %2263 = vmatpush1.xpose.msra.mxu0 %v2262
      %2264 = vmatprep.subr.mxu0 0.0
      %v2265 = vand.u32 %v2091, 4294901760
      %v2266 = vsub.f32 %v2091, %v2265
      %v2267 = vand.u32 %v2266, 4294901760
      %v2268 = vsub.f32 %v2266, %v2267
      %v2269 = vand.u32 %v2268, 4294901760
      %2270 = vmatpush1.xpose.msra.mxu0 %v2269
      %2271 = vmatprep.subr.mxu0 0.0
      %v2272 = vand.u32 %v2092, 4294901760
      %v2273 = vsub.f32 %v2092, %v2272
      %v2274 = vand.u32 %v2273, 4294901760
      %v2275 = vsub.f32 %v2273, %v2274
      %v2276 = vand.u32 %v2275, 4294901760
      %2277 = vmatpush1.xpose.msra.mxu0 %v2276
      %2278 = vmatprep.subr.mxu0 0.0
      %v2279 = vand.u32 %v2093, 4294901760
      %v2280 = vsub.f32 %v2093, %v2279
      %v2281 = vand.u32 %v2280, 4294901760
      %v2282 = vsub.f32 %v2280, %v2281
      %v2283 = vand.u32 %v2282, 4294901760
      %2284 = vmatpush1.xpose.msra.mxu0 %v2283
      %2285 = vmatprep.subr.mxu0 0.0
      %v2286 = vand.u32 %v2094, 4294901760
      %v2287 = vsub.f32 %v2094, %v2286
      %v2288 = vand.u32 %v2287, 4294901760
      %v2289 = vsub.f32 %v2287, %v2288
      %v2290 = vand.u32 %v2289, 4294901760
      %2291 = vmatpush1.xpose.msra.mxu0 %v2290
      %2292 = vmatprep.subr.mxu0 0.0
      %v2293 = vand.u32 %v2095, 4294901760
      %v2294 = vsub.f32 %v2095, %v2293
      %v2295 = vand.u32 %v2294, 4294901760
      %v2296 = vsub.f32 %v2294, %v2295
      %v2297 = vand.u32 %v2296, 4294901760
      %2298 = vmatpush1.xpose.msra.mxu0 %v2297
      %2299 = vmatprep.subr.mxu0 0.0
      %2300 = vmatpush1.xpose.msra.mxu0 0.0
      %2301 = vmatprep.subr.mxu0 0.0
      %2302 = vmatpush1.xpose.msra.mxu0 0.0
      %2303 = vmatprep.subr.mxu0 0.0
      %2304 = vmatpush1.xpose.msra.mxu0 0.0
      %2305 = vmatprep.subr.mxu0 0.0
      %2306 = vmatpush1.xpose.msra.mxu0 0.0
      %2307 = vmatprep.subr.mxu0 0.0
      %2308 = vmatpush1.xpose.msra.mxu0 0.0
      %2309 = vmatprep.subr.mxu0 0.0
      %2310 = vmatpush1.xpose.msra.mxu0 0.0
      %2311 = vmatprep.subr.mxu0 0.0
      %2312 = vmatpush1.xpose.msra.mxu0 0.0
      %2313 = vmatprep.subr.mxu0 0.0
      %2314 = vmatpush1.xpose.msra.mxu0 0.0
      %2315 = vmatprep.subr.mxu0 0.0
      %2316 = vmatpush1.xpose.msra.mxu0 0.0
      %2317 = vmatprep.subr.mxu0 0.0
      %2318 = vmatpush1.xpose.msra.mxu0 0.0
      %2319 = vmatprep.subr.mxu0 0.0
      %2320 = vmatpush1.xpose.msra.mxu0 0.0
      %2321 = vmatprep.subr.mxu0 0.0
      %2322 = vmatpush1.xpose.msra.mxu0 0.0
      %2323 = vmatprep.subr.mxu0 0.0
      %2324 = vmatpush1.xpose.msra.mxu0 0.0
      %2325 = vmatprep.subr.mxu0 0.0
      %2326 = vmatpush1.xpose.msra.mxu0 0.0
      %2327 = vmatprep.subr.mxu0 0.0
      %2328 = vmatpush1.xpose.msra.mxu0 0.0
      %2329 = vmatprep.subr.mxu0 0.0
      %2330 = vmatpush1.xpose.msra.mxu0 0.0
      %2331 = vmatprep.mubr.f32.mxu0 0.0
      %v2332 = vand.u32 %v157, 4294901760
      %2333 = vmatmul.mubr.f32.gmra.mrb[0].mxu0 %v2332
      %v2334 = vpop.f32.mrb[0].mxu0
      %v2335 = vadd.f32 %v2184, %v2334
      %v2336 = vpop.f32.mrb[0].mxu0
      %2337 = vdwg.mxu0
      %2338 = vmatprep.subr.mxu0 0.0
      %v2339 = vand.u32 %v2080, 4294901760
      %v2340 = vsub.f32 %v2080, %v2339
      %2341 = vmatpush1.xpose.msra.mxu0 %v2340
      %2342 = vmatprep.subr.mxu0 0.0
      %v2343 = vand.u32 %v2081, 4294901760
      %v2344 = vsub.f32 %v2081, %v2343
      %2345 = vmatpush1.xpose.msra.mxu0 %v2344
      %2346 = vmatprep.subr.mxu0 0.0
      %v2347 = vand.u32 %v2082, 4294901760
      %v2348 = vsub.f32 %v2082, %v2347
      %2349 = vmatpush1.xpose.msra.mxu0 %v2348
      %2350 = vmatprep.subr.mxu0 0.0
      %v2351 = vand.u32 %v2083, 4294901760
      %v2352 = vsub.f32 %v2083, %v2351
      %2353 = vmatpush1.xpose.msra.mxu0 %v2352
      %2354 = vmatprep.subr.mxu0 0.0
      %v2355 = vand.u32 %v2084, 4294901760
      %v2356 = vsub.f32 %v2084, %v2355
      %2357 = vmatpush1.xpose.msra.mxu0 %v2356
      %2358 = vmatprep.subr.mxu0 0.0
      %v2359 = vand.u32 %v2085, 4294901760
      %v2360 = vsub.f32 %v2085, %v2359
      %2361 = vmatpush1.xpose.msra.mxu0 %v2360
      %2362 = vmatprep.subr.mxu0 0.0
      %v2363 = vand.u32 %v2086, 4294901760
      %v2364 = vsub.f32 %v2086, %v2363
      %2365 = vmatpush1.xpose.msra.mxu0 %v2364
      %2366 = vmatprep.subr.mxu0 0.0
      %v2367 = vand.u32 %v2087, 4294901760
      %v2368 = vsub.f32 %v2087, %v2367
      %2369 = vmatpush1.xpose.msra.mxu0 %v2368
      %2370 = vmatprep.subr.mxu0 0.0
      %v2371 = vand.u32 %v2088, 4294901760
      %v2372 = vsub.f32 %v2088, %v2371
      %2373 = vmatpush1.xpose.msra.mxu0 %v2372
      %2374 = vmatprep.subr.mxu0 0.0
      %v2375 = vand.u32 %v2089, 4294901760
      %v2376 = vsub.f32 %v2089, %v2375
      %2377 = vmatpush1.xpose.msra.mxu0 %v2376
      %2378 = vmatprep.subr.mxu0 0.0
      %v2379 = vand.u32 %v2090, 4294901760
      %v2380 = vsub.f32 %v2090, %v2379
      %2381 = vmatpush1.xpose.msra.mxu0 %v2380
      %2382 = vmatprep.subr.mxu0 0.0
      %v2383 = vand.u32 %v2091, 4294901760
      %v2384 = vsub.f32 %v2091, %v2383
      %2385 = vmatpush1.xpose.msra.mxu0 %v2384
      %2386 = vmatprep.subr.mxu0 0.0
      %v2387 = vand.u32 %v2092, 4294901760
      %v2388 = vsub.f32 %v2092, %v2387
      %2389 = vmatpush1.xpose.msra.mxu0 %v2388
      %2390 = vmatprep.subr.mxu0 0.0
      %v2391 = vand.u32 %v2093, 4294901760
      %v2392 = vsub.f32 %v2093, %v2391
      %2393 = vmatpush1.xpose.msra.mxu0 %v2392
      %2394 = vmatprep.subr.mxu0 0.0
      %v2395 = vand.u32 %v2094, 4294901760
      %v2396 = vsub.f32 %v2094, %v2395
      %2397 = vmatpush1.xpose.msra.mxu0 %v2396
      %2398 = vmatprep.subr.mxu0 0.0
      %v2399 = vand.u32 %v2095, 4294901760
      %v2400 = vsub.f32 %v2095, %v2399
      %2401 = vmatpush1.xpose.msra.mxu0 %v2400
      %2402 = vmatprep.subr.mxu0 0.0
      %2403 = vmatpush1.xpose.msra.mxu0 0.0
      %2404 = vmatprep.subr.mxu0 0.0
      %2405 = vmatpush1.xpose.msra.mxu0 0.0
      %2406 = vmatprep.subr.mxu0 0.0
      %2407 = vmatpush1.xpose.msra.mxu0 0.0
      %2408 = vmatprep.subr.mxu0 0.0
      %2409 = vmatpush1.xpose.msra.mxu0 0.0
      %2410 = vmatprep.subr.mxu0 0.0
      %2411 = vmatpush1.xpose.msra.mxu0 0.0
      %2412 = vmatprep.subr.mxu0 0.0
      %2413 = vmatpush1.xpose.msra.mxu0 0.0
      %2414 = vmatprep.subr.mxu0 0.0
      %2415 = vmatpush1.xpose.msra.mxu0 0.0
      %2416 = vmatprep.subr.mxu0 0.0
      %2417 = vmatpush1.xpose.msra.mxu0 0.0
      %2418 = vmatprep.subr.mxu0 0.0
      %2419 = vmatpush1.xpose.msra.mxu0 0.0
      %2420 = vmatprep.subr.mxu0 0.0
      %2421 = vmatpush1.xpose.msra.mxu0 0.0
      %2422 = vmatprep.subr.mxu0 0.0
      %2423 = vmatpush1.xpose.msra.mxu0 0.0
      %2424 = vmatprep.subr.mxu0 0.0
      %2425 = vmatpush1.xpose.msra.mxu0 0.0
      %2426 = vmatprep.subr.mxu0 0.0
      %2427 = vmatpush1.xpose.msra.mxu0 0.0
      %2428 = vmatprep.subr.mxu0 0.0
      %2429 = vmatpush1.xpose.msra.mxu0 0.0
      %2430 = vmatprep.subr.mxu0 0.0
      %2431 = vmatpush1.xpose.msra.mxu0 0.0
      %2432 = vmatprep.subr.mxu0 0.0
      %2433 = vmatpush1.xpose.msra.mxu0 0.0
      %2434 = vmatprep.mubr.f32.mxu0 0.0
      %v2435 = vand.u32 %v157, 4294901760
      %v2436 = vsub.f32 %v157, %v2435
      %2437 = vmatmul.mubr.f32.gmra.mrb[0].mxu0 %v2436
      %v2438 = vpop.f32.mrb[0].mxu0
      %v2439 = vadd.f32 %v2335, %v2438
      %v2440 = vpop.f32.mrb[0].mxu0
      %2441 = vdwg.mxu0
      %2442 = vmatprep.subr.mxu0 0.0
      %v2443 = vand.u32 %v2080, 4294901760
      %2444 = vmatpush1.xpose.msra.mxu0 %v2443
      %2445 = vmatprep.subr.mxu0 0.0
      %v2446 = vand.u32 %v2081, 4294901760
      %2447 = vmatpush1.xpose.msra.mxu0 %v2446
      %2448 = vmatprep.subr.mxu0 0.0
      %v2449 = vand.u32 %v2082, 4294901760
      %2450 = vmatpush1.xpose.msra.mxu0 %v2449
      %2451 = vmatprep.subr.mxu0 0.0
      %v2452 = vand.u32 %v2083, 4294901760
      %2453 = vmatpush1.xpose.msra.mxu0 %v2452
      %2454 = vmatprep.subr.mxu0 0.0
      %v2455 = vand.u32 %v2084, 4294901760
      %2456 = vmatpush1.xpose.msra.mxu0 %v2455
      %2457 = vmatprep.subr.mxu0 0.0
      %v2458 = vand.u32 %v2085, 4294901760
      %2459 = vmatpush1.xpose.msra.mxu0 %v2458
      %2460 = vmatprep.subr.mxu0 0.0
      %v2461 = vand.u32 %v2086, 4294901760
      %2462 = vmatpush1.xpose.msra.mxu0 %v2461
      %2463 = vmatprep.subr.mxu0 0.0
      %v2464 = vand.u32 %v2087, 4294901760
      %2465 = vmatpush1.xpose.msra.mxu0 %v2464
      %2466 = vmatprep.subr.mxu0 0.0
      %v2467 = vand.u32 %v2088, 4294901760
      %2468 = vmatpush1.xpose.msra.mxu0 %v2467
      %2469 = vmatprep.subr.mxu0 0.0
      %v2470 = vand.u32 %v2089, 4294901760
      %2471 = vmatpush1.xpose.msra.mxu0 %v2470
      %2472 = vmatprep.subr.mxu0 0.0
      %v2473 = vand.u32 %v2090, 4294901760
      %2474 = vmatpush1.xpose.msra.mxu0 %v2473
      %2475 = vmatprep.subr.mxu0 0.0
      %v2476 = vand.u32 %v2091, 4294901760
      %2477 = vmatpush1.xpose.msra.mxu0 %v2476
      %2478 = vmatprep.subr.mxu0 0.0
      %v2479 = vand.u32 %v2092, 4294901760
      %2480 = vmatpush1.xpose.msra.mxu0 %v2479
      %2481 = vmatprep.subr.mxu0 0.0
      %v2482 = vand.u32 %v2093, 4294901760
      %2483 = vmatpush1.xpose.msra.mxu0 %v2482
      %2484 = vmatprep.subr.mxu0 0.0
      %v2485 = vand.u32 %v2094, 4294901760
      %2486 = vmatpush1.xpose.msra.mxu0 %v2485
      %2487 = vmatprep.subr.mxu0 0.0
      %v2488 = vand.u32 %v2095, 4294901760
      %2489 = vmatpush1.xpose.msra.mxu0 %v2488
      %2490 = vmatprep.subr.mxu0 0.0
      %2491 = vmatpush1.xpose.msra.mxu0 0.0
      %2492 = vmatprep.subr.mxu0 0.0
      %2493 = vmatpush1.xpose.msra.mxu0 0.0
      %2494 = vmatprep.subr.mxu0 0.0
      %2495 = vmatpush1.xpose.msra.mxu0 0.0
      %2496 = vmatprep.subr.mxu0 0.0
      %2497 = vmatpush1.xpose.msra.mxu0 0.0
      %2498 = vmatprep.subr.mxu0 0.0
      %2499 = vmatpush1.xpose.msra.mxu0 0.0
      %2500 = vmatprep.subr.mxu0 0.0
      %2501 = vmatpush1.xpose.msra.mxu0 0.0
      %2502 = vmatprep.subr.mxu0 0.0
      %2503 = vmatpush1.xpose.msra.mxu0 0.0
      %2504 = vmatprep.subr.mxu0 0.0
      %2505 = vmatpush1.xpose.msra.mxu0 0.0
      %2506 = vmatprep.subr.mxu0 0.0
      %2507 = vmatpush1.xpose.msra.mxu0 0.0
      %2508 = vmatprep.subr.mxu0 0.0
      %2509 = vmatpush1.xpose.msra.mxu0 0.0
      %2510 = vmatprep.subr.mxu0 0.0
      %2511 = vmatpush1.xpose.msra.mxu0 0.0
      %2512 = vmatprep.subr.mxu0 0.0
      %2513 = vmatpush1.xpose.msra.mxu0 0.0
      %2514 = vmatprep.subr.mxu0 0.0
      %2515 = vmatpush1.xpose.msra.mxu0 0.0
      %2516 = vmatprep.subr.mxu0 0.0
      %2517 = vmatpush1.xpose.msra.mxu0 0.0
      %2518 = vmatprep.subr.mxu0 0.0
      %2519 = vmatpush1.xpose.msra.mxu0 0.0
      %2520 = vmatprep.subr.mxu0 0.0
      %2521 = vmatpush1.xpose.msra.mxu0 0.0
      %2522 = vmatprep.mubr.f32.mxu0 0.0
      %v2523 = vand.u32 %v157, 4294901760
      %v2524 = vsub.f32 %v157, %v2523
      %v2525 = vand.u32 %v2524, 4294901760
      %2526 = vmatmul.mubr.f32.gmra.mrb[0].mxu0 %v2525
      %v2527 = vpop.f32.mrb[0].mxu0
      %v2528 = vadd.f32 %v2439, %v2527
      %v2529 = vpop.f32.mrb[0].mxu0
      %2530 = vdwg.mxu0
      %2531 = vmatprep.subr.mxu0 0.0
      %v2532 = vand.u32 %v2080, 4294901760
      %v2533 = vsub.f32 %v2080, %v2532
      %v2534 = vand.u32 %v2533, 4294901760
      %2535 = vmatpush1.xpose.msra.mxu0 %v2534
      %2536 = vmatprep.subr.mxu0 0.0
      %v2537 = vand.u32 %v2081, 4294901760
      %v2538 = vsub.f32 %v2081, %v2537
      %v2539 = vand.u32 %v2538, 4294901760
      %2540 = vmatpush1.xpose.msra.mxu0 %v2539
      %2541 = vmatprep.subr.mxu0 0.0
      %v2542 = vand.u32 %v2082, 4294901760
      %v2543 = vsub.f32 %v2082, %v2542
      %v2544 = vand.u32 %v2543, 4294901760
      %2545 = vmatpush1.xpose.msra.mxu0 %v2544
      %2546 = vmatprep.subr.mxu0 0.0
      %v2547 = vand.u32 %v2083, 4294901760
      %v2548 = vsub.f32 %v2083, %v2547
      %v2549 = vand.u32 %v2548, 4294901760
      %2550 = vmatpush1.xpose.msra.mxu0 %v2549
      %2551 = vmatprep.subr.mxu0 0.0
      %v2552 = vand.u32 %v2084, 4294901760
      %v2553 = vsub.f32 %v2084, %v2552
      %v2554 = vand.u32 %v2553, 4294901760
      %2555 = vmatpush1.xpose.msra.mxu0 %v2554
      %2556 = vmatprep.subr.mxu0 0.0
      %v2557 = vand.u32 %v2085, 4294901760
      %v2558 = vsub.f32 %v2085, %v2557
      %v2559 = vand.u32 %v2558, 4294901760
      %2560 = vmatpush1.xpose.msra.mxu0 %v2559
      %2561 = vmatprep.subr.mxu0 0.0
      %v2562 = vand.u32 %v2086, 4294901760
      %v2563 = vsub.f32 %v2086, %v2562
      %v2564 = vand.u32 %v2563, 4294901760
      %2565 = vmatpush1.xpose.msra.mxu0 %v2564
      %2566 = vmatprep.subr.mxu0 0.0
      %v2567 = vand.u32 %v2087, 4294901760
      %v2568 = vsub.f32 %v2087, %v2567
      %v2569 = vand.u32 %v2568, 4294901760
      %2570 = vmatpush1.xpose.msra.mxu0 %v2569
      %2571 = vmatprep.subr.mxu0 0.0
      %v2572 = vand.u32 %v2088, 4294901760
      %v2573 = vsub.f32 %v2088, %v2572
      %v2574 = vand.u32 %v2573, 4294901760
      %2575 = vmatpush1.xpose.msra.mxu0 %v2574
      %2576 = vmatprep.subr.mxu0 0.0
      %v2577 = vand.u32 %v2089, 4294901760
      %v2578 = vsub.f32 %v2089, %v2577
      %v2579 = vand.u32 %v2578, 4294901760
      %2580 = vmatpush1.xpose.msra.mxu0 %v2579
      %2581 = vmatprep.subr.mxu0 0.0
      %v2582 = vand.u32 %v2090, 4294901760
      %v2583 = vsub.f32 %v2090, %v2582
      %v2584 = vand.u32 %v2583, 4294901760
      %2585 = vmatpush1.xpose.msra.mxu0 %v2584
      %2586 = vmatprep.subr.mxu0 0.0
      %v2587 = vand.u32 %v2091, 4294901760
      %v2588 = vsub.f32 %v2091, %v2587
      %v2589 = vand.u32 %v2588, 4294901760
      %2590 = vmatpush1.xpose.msra.mxu0 %v2589
      %2591 = vmatprep.subr.mxu0 0.0
      %v2592 = vand.u32 %v2092, 4294901760
      %v2593 = vsub.f32 %v2092, %v2592
      %v2594 = vand.u32 %v2593, 4294901760
      %2595 = vmatpush1.xpose.msra.mxu0 %v2594
      %2596 = vmatprep.subr.mxu0 0.0
      %v2597 = vand.u32 %v2093, 4294901760
      %v2598 = vsub.f32 %v2093, %v2597
      %v2599 = vand.u32 %v2598, 4294901760
      %2600 = vmatpush1.xpose.msra.mxu0 %v2599
      %2601 = vmatprep.subr.mxu0 0.0
      %v2602 = vand.u32 %v2094, 4294901760
      %v2603 = vsub.f32 %v2094, %v2602
      %v2604 = vand.u32 %v2603, 4294901760
      %2605 = vmatpush1.xpose.msra.mxu0 %v2604
      %2606 = vmatprep.subr.mxu0 0.0
      %v2607 = vand.u32 %v2095, 4294901760
      %v2608 = vsub.f32 %v2095, %v2607
      %v2609 = vand.u32 %v2608, 4294901760
      %2610 = vmatpush1.xpose.msra.mxu0 %v2609
      %2611 = vmatprep.subr.mxu0 0.0
      %2612 = vmatpush1.xpose.msra.mxu0 0.0
      %2613 = vmatprep.subr.mxu0 0.0
      %2614 = vmatpush1.xpose.msra.mxu0 0.0
      %2615 = vmatprep.subr.mxu0 0.0
      %2616 = vmatpush1.xpose.msra.mxu0 0.0
      %2617 = vmatprep.subr.mxu0 0.0
      %2618 = vmatpush1.xpose.msra.mxu0 0.0
      %2619 = vmatprep.subr.mxu0 0.0
      %2620 = vmatpush1.xpose.msra.mxu0 0.0
      %2621 = vmatprep.subr.mxu0 0.0
      %2622 = vmatpush1.xpose.msra.mxu0 0.0
      %2623 = vmatprep.subr.mxu0 0.0
      %2624 = vmatpush1.xpose.msra.mxu0 0.0
      %2625 = vmatprep.subr.mxu0 0.0
      %2626 = vmatpush1.xpose.msra.mxu0 0.0
      %2627 = vmatprep.subr.mxu0 0.0
      %2628 = vmatpush1.xpose.msra.mxu0 0.0
      %2629 = vmatprep.subr.mxu0 0.0
      %2630 = vmatpush1.xpose.msra.mxu0 0.0
      %2631 = vmatprep.subr.mxu0 0.0
      %2632 = vmatpush1.xpose.msra.mxu0 0.0
      %2633 = vmatprep.subr.mxu0 0.0
      %2634 = vmatpush1.xpose.msra.mxu0 0.0
      %2635 = vmatprep.subr.mxu0 0.0
      %2636 = vmatpush1.xpose.msra.mxu0 0.0
      %2637 = vmatprep.subr.mxu0 0.0
      %2638 = vmatpush1.xpose.msra.mxu0 0.0
      %2639 = vmatprep.subr.mxu0 0.0
      %2640 = vmatpush1.xpose.msra.mxu0 0.0
      %2641 = vmatprep.subr.mxu0 0.0
      %2642 = vmatpush1.xpose.msra.mxu0 0.0
      %2643 = vmatprep.mubr.f32.mxu0 0.0
      %v2644 = vand.u32 %v157, 4294901760
      %2645 = vmatmul.mubr.f32.gmra.mrb[0].mxu0 %v2644
      %v2646 = vpop.f32.mrb[0].mxu0
      %v2647 = vadd.f32 %v2528, %v2646
      %v2648 = vpop.f32.mrb[0].mxu0
      %2649 = vdwg.mxu0
      %2650 = vmatprep.subr.mxu0 0.0
      %v2651 = vand.u32 %v2080, 4294901760
      %2652 = vmatpush1.xpose.msra.mxu0 %v2651
      %2653 = vmatprep.subr.mxu0 0.0
      %v2654 = vand.u32 %v2081, 4294901760
      %2655 = vmatpush1.xpose.msra.mxu0 %v2654
      %2656 = vmatprep.subr.mxu0 0.0
      %v2657 = vand.u32 %v2082, 4294901760
      %2658 = vmatpush1.xpose.msra.mxu0 %v2657
      %2659 = vmatprep.subr.mxu0 0.0
      %v2660 = vand.u32 %v2083, 4294901760
      %2661 = vmatpush1.xpose.msra.mxu0 %v2660
      %2662 = vmatprep.subr.mxu0 0.0
      %v2663 = vand.u32 %v2084, 4294901760
      %2664 = vmatpush1.xpose.msra.mxu0 %v2663
      %2665 = vmatprep.subr.mxu0 0.0
      %v2666 = vand.u32 %v2085, 4294901760
      %2667 = vmatpush1.xpose.msra.mxu0 %v2666
      %2668 = vmatprep.subr.mxu0 0.0
      %v2669 = vand.u32 %v2086, 4294901760
      %2670 = vmatpush1.xpose.msra.mxu0 %v2669
      %2671 = vmatprep.subr.mxu0 0.0
      %v2672 = vand.u32 %v2087, 4294901760
      %2673 = vmatpush1.xpose.msra.mxu0 %v2672
      %2674 = vmatprep.subr.mxu0 0.0
      %v2675 = vand.u32 %v2088, 4294901760
      %2676 = vmatpush1.xpose.msra.mxu0 %v2675
      %2677 = vmatprep.subr.mxu0 0.0
      %v2678 = vand.u32 %v2089, 4294901760
      %2679 = vmatpush1.xpose.msra.mxu0 %v2678
      %2680 = vmatprep.subr.mxu0 0.0
      %v2681 = vand.u32 %v2090, 4294901760
      %2682 = vmatpush1.xpose.msra.mxu0 %v2681
      %2683 = vmatprep.subr.mxu0 0.0
      %v2684 = vand.u32 %v2091, 4294901760
      %2685 = vmatpush1.xpose.msra.mxu0 %v2684
      %2686 = vmatprep.subr.mxu0 0.0
      %v2687 = vand.u32 %v2092, 4294901760
      %2688 = vmatpush1.xpose.msra.mxu0 %v2687
      %2689 = vmatprep.subr.mxu0 0.0
      %v2690 = vand.u32 %v2093, 4294901760
      %2691 = vmatpush1.xpose.msra.mxu0 %v2690
      %2692 = vmatprep.subr.mxu0 0.0
      %v2693 = vand.u32 %v2094, 4294901760
      %2694 = vmatpush1.xpose.msra.mxu0 %v2693
      %2695 = vmatprep.subr.mxu0 0.0
      %v2696 = vand.u32 %v2095, 4294901760
      %2697 = vmatpush1.xpose.msra.mxu0 %v2696
      %2698 = vmatprep.subr.mxu0 0.0
      %2699 = vmatpush1.xpose.msra.mxu0 0.0
      %2700 = vmatprep.subr.mxu0 0.0
      %2701 = vmatpush1.xpose.msra.mxu0 0.0
      %2702 = vmatprep.subr.mxu0 0.0
      %2703 = vmatpush1.xpose.msra.mxu0 0.0
      %2704 = vmatprep.subr.mxu0 0.0
      %2705 = vmatpush1.xpose.msra.mxu0 0.0
      %2706 = vmatprep.subr.mxu0 0.0
      %2707 = vmatpush1.xpose.msra.mxu0 0.0
      %2708 = vmatprep.subr.mxu0 0.0
      %2709 = vmatpush1.xpose.msra.mxu0 0.0
      %2710 = vmatprep.subr.mxu0 0.0
      %2711 = vmatpush1.xpose.msra.mxu0 0.0
      %2712 = vmatprep.subr.mxu0 0.0
      %2713 = vmatpush1.xpose.msra.mxu0 0.0
      %2714 = vmatprep.subr.mxu0 0.0
      %2715 = vmatpush1.xpose.msra.mxu0 0.0
      %2716 = vmatprep.subr.mxu0 0.0
      %2717 = vmatpush1.xpose.msra.mxu0 0.0
      %2718 = vmatprep.subr.mxu0 0.0
      %2719 = vmatpush1.xpose.msra.mxu0 0.0
      %2720 = vmatprep.subr.mxu0 0.0
      %2721 = vmatpush1.xpose.msra.mxu0 0.0
      %2722 = vmatprep.subr.mxu0 0.0
      %2723 = vmatpush1.xpose.msra.mxu0 0.0
      %2724 = vmatprep.subr.mxu0 0.0
      %2725 = vmatpush1.xpose.msra.mxu0 0.0
      %2726 = vmatprep.subr.mxu0 0.0
      %2727 = vmatpush1.xpose.msra.mxu0 0.0
      %2728 = vmatprep.subr.mxu0 0.0
      %2729 = vmatpush1.xpose.msra.mxu0 0.0
      %2730 = vmatprep.mubr.f32.mxu0 0.0
      %v2731 = vand.u32 %v157, 4294901760
      %2732 = vmatmul.mubr.f32.gmra.mrb[0].mxu0 %v2731
      %v2733 = vpop.f32.mrb[0].mxu0
      %v2734 = vadd.f32 %v2647, %v2733
      %v2735 = vpop.f32.mrb[0].mxu0
      %2736 = vdwg.mxu0
      %v2738 = vsel %vm797, %v167, 0
      %2740 = vmatprep.subr.mxu0 0.0
      %v2741 = vand.u32 %v764, 4294901760
      %2742 = vmatpush1.msra.mxu0 %v2741
      %2743 = vmatprep.subr.mxu0 0.0
      %2744 = vmatpush1.msra.mxu0 0.0
      %2745 = vmatprep.subr.mxu0 0.0
      %2746 = vmatpush1.msra.mxu0 0.0
      %2747 = vmatprep.subr.mxu0 0.0
      %2748 = vmatpush1.msra.mxu0 0.0
      %2749 = vmatprep.subr.mxu0 0.0
      %2750 = vmatpush1.msra.mxu0 0.0
      %2751 = vmatprep.subr.mxu0 0.0
      %2752 = vmatpush1.msra.mxu0 0.0
      %2753 = vmatprep.subr.mxu0 0.0
      %2754 = vmatpush1.msra.mxu0 0.0
      %2755 = vmatprep.subr.mxu0 0.0
      %2756 = vmatpush1.msra.mxu0 0.0
      %2757 = vmatprep.subr.mxu0 0.0
      %2758 = vmatpush1.msra.mxu0 0.0
      %2759 = vmatprep.subr.mxu0 0.0
      %2760 = vmatpush1.msra.mxu0 0.0
      %2761 = vmatprep.subr.mxu0 0.0
      %2762 = vmatpush1.msra.mxu0 0.0
      %2763 = vmatprep.subr.mxu0 0.0
      %2764 = vmatpush1.msra.mxu0 0.0
      %2765 = vmatprep.subr.mxu0 0.0
      %2766 = vmatpush1.msra.mxu0 0.0
      %2767 = vmatprep.subr.mxu0 0.0
      %2768 = vmatpush1.msra.mxu0 0.0
      %2769 = vmatprep.subr.mxu0 0.0
      %2770 = vmatpush1.msra.mxu0 0.0
      %2771 = vmatprep.subr.mxu0 0.0
      %2772 = vmatpush1.msra.mxu0 0.0
      %2773 = vmatprep.subr.mxu0 0.0
      %2774 = vmatpush1.msra.mxu0 0.0
      %2775 = vmatprep.subr.mxu0 0.0
      %2776 = vmatpush1.msra.mxu0 0.0
      %2777 = vmatprep.subr.mxu0 0.0
      %2778 = vmatpush1.msra.mxu0 0.0
      %2779 = vmatprep.subr.mxu0 0.0
      %2780 = vmatpush1.msra.mxu0 0.0
      %2781 = vmatprep.subr.mxu0 0.0
      %2782 = vmatpush1.msra.mxu0 0.0
      %2783 = vmatprep.subr.mxu0 0.0
      %2784 = vmatpush1.msra.mxu0 0.0
      %2785 = vmatprep.subr.mxu0 0.0
      %2786 = vmatpush1.msra.mxu0 0.0
      %2787 = vmatprep.subr.mxu0 0.0
      %2788 = vmatpush1.msra.mxu0 0.0
      %2789 = vmatprep.subr.mxu0 0.0
      %2790 = vmatpush1.msra.mxu0 0.0
      %2791 = vmatprep.subr.mxu0 0.0
      %2792 = vmatpush1.msra.mxu0 0.0
      %2793 = vmatprep.subr.mxu0 0.0
      %2794 = vmatpush1.msra.mxu0 0.0
      %2795 = vmatprep.subr.mxu0 0.0
      %2796 = vmatpush1.msra.mxu0 0.0
      %2797 = vmatprep.subr.mxu0 0.0
      %2798 = vmatpush1.msra.mxu0 0.0
      %2799 = vmatprep.subr.mxu0 0.0
      %2800 = vmatpush1.msra.mxu0 0.0
      %2801 = vmatprep.subr.mxu0 0.0
      %2802 = vmatpush1.msra.mxu0 0.0
      %2803 = vmatprep.subr.mxu0 0.0
      %2804 = vmatpush1.msra.mxu0 0.0
      %2805 = vmatprep.mubr.f32.mxu0 0.0
      %v2806 = vand.u32 %v2738, 4294901760
      %v2807 = vsub.f32 %v2738, %v2806
      %v2808 = vand.u32 %v2807, 4294901760
      %v2809 = vsub.f32 %v2807, %v2808
      %v2810 = vand.u32 %v2809, 4294901760
      %2811 = vmatmul.mubr.f32.gmra.mrb[0].mxu0 %v2810
      %v2812 = vpop.f32.mrb[0].mxu0
      %v2813 = vadd.f32 0.0, %v2812
      %v2814 = vpop.f32.mrb[0].mxu0
      %2815 = vdwg.mxu0
      %2816 = vmatprep.subr.mxu0 0.0
      %v2817 = vand.u32 %v764, 4294901760
      %v2818 = vsub.f32 %v764, %v2817
      %v2819 = vand.u32 %v2818, 4294901760
      %v2820 = vsub.f32 %v2818, %v2819
      %v2821 = vand.u32 %v2820, 4294901760
      %2822 = vmatpush1.msra.mxu0 %v2821
      %2823 = vmatprep.subr.mxu0 0.0
      %2824 = vmatpush1.msra.mxu0 0.0
      %2825 = vmatprep.subr.mxu0 0.0
      %2826 = vmatpush1.msra.mxu0 0.0
      %2827 = vmatprep.subr.mxu0 0.0
      %2828 = vmatpush1.msra.mxu0 0.0
      %2829 = vmatprep.subr.mxu0 0.0
      %2830 = vmatpush1.msra.mxu0 0.0
      %2831 = vmatprep.subr.mxu0 0.0
      %2832 = vmatpush1.msra.mxu0 0.0
      %2833 = vmatprep.subr.mxu0 0.0
      %2834 = vmatpush1.msra.mxu0 0.0
      %2835 = vmatprep.subr.mxu0 0.0
      %2836 = vmatpush1.msra.mxu0 0.0
      %2837 = vmatprep.subr.mxu0 0.0
      %2838 = vmatpush1.msra.mxu0 0.0
      %2839 = vmatprep.subr.mxu0 0.0
      %2840 = vmatpush1.msra.mxu0 0.0
      %2841 = vmatprep.subr.mxu0 0.0
      %2842 = vmatpush1.msra.mxu0 0.0
      %2843 = vmatprep.subr.mxu0 0.0
      %2844 = vmatpush1.msra.mxu0 0.0
      %2845 = vmatprep.subr.mxu0 0.0
      %2846 = vmatpush1.msra.mxu0 0.0
      %2847 = vmatprep.subr.mxu0 0.0
      %2848 = vmatpush1.msra.mxu0 0.0
      %2849 = vmatprep.subr.mxu0 0.0
      %2850 = vmatpush1.msra.mxu0 0.0
      %2851 = vmatprep.subr.mxu0 0.0
      %2852 = vmatpush1.msra.mxu0 0.0
      %2853 = vmatprep.subr.mxu0 0.0
      %2854 = vmatpush1.msra.mxu0 0.0
      %2855 = vmatprep.subr.mxu0 0.0
      %2856 = vmatpush1.msra.mxu0 0.0
      %2857 = vmatprep.subr.mxu0 0.0
      %2858 = vmatpush1.msra.mxu0 0.0
      %2859 = vmatprep.subr.mxu0 0.0
      %2860 = vmatpush1.msra.mxu0 0.0
      %2861 = vmatprep.subr.mxu0 0.0
      %2862 = vmatpush1.msra.mxu0 0.0
      %2863 = vmatprep.subr.mxu0 0.0
      %2864 = vmatpush1.msra.mxu0 0.0
      %2865 = vmatprep.subr.mxu0 0.0
      %2866 = vmatpush1.msra.mxu0 0.0
      %2867 = vmatprep.subr.mxu0 0.0
      %2868 = vmatpush1.msra.mxu0 0.0
      %2869 = vmatprep.subr.mxu0 0.0
      %2870 = vmatpush1.msra.mxu0 0.0
      %2871 = vmatprep.subr.mxu0 0.0
      %2872 = vmatpush1.msra.mxu0 0.0
      %2873 = vmatprep.subr.mxu0 0.0
      %2874 = vmatpush1.msra.mxu0 0.0
      %2875 = vmatprep.subr.mxu0 0.0
      %2876 = vmatpush1.msra.mxu0 0.0
      %2877 = vmatprep.subr.mxu0 0.0
      %2878 = vmatpush1.msra.mxu0 0.0
      %2879 = vmatprep.subr.mxu0 0.0
      %2880 = vmatpush1.msra.mxu0 0.0
      %2881 = vmatprep.subr.mxu0 0.0
      %2882 = vmatpush1.msra.mxu0 0.0
      %2883 = vmatprep.subr.mxu0 0.0
      %2884 = vmatpush1.msra.mxu0 0.0
      %2885 = vmatprep.mubr.f32.mxu0 0.0
      %v2886 = vand.u32 %v2738, 4294901760
      %2887 = vmatmul.mubr.f32.gmra.mrb[0].mxu0 %v2886
      %v2888 = vpop.f32.mrb[0].mxu0
      %v2889 = vadd.f32 %v2813, %v2888
      %v2890 = vpop.f32.mrb[0].mxu0
      %2891 = vdwg.mxu0
      %2892 = vmatprep.subr.mxu0 0.0
      %v2893 = vand.u32 %v764, 4294901760
      %v2894 = vsub.f32 %v764, %v2893
      %2895 = vmatpush1.msra.mxu0 %v2894
      %2896 = vmatprep.subr.mxu0 0.0
      %2897 = vmatpush1.msra.mxu0 0.0
      %2898 = vmatprep.subr.mxu0 0.0
      %2899 = vmatpush1.msra.mxu0 0.0
      %2900 = vmatprep.subr.mxu0 0.0
      %2901 = vmatpush1.msra.mxu0 0.0
      %2902 = vmatprep.subr.mxu0 0.0
      %2903 = vmatpush1.msra.mxu0 0.0
      %2904 = vmatprep.subr.mxu0 0.0
      %2905 = vmatpush1.msra.mxu0 0.0
      %2906 = vmatprep.subr.mxu0 0.0
      %2907 = vmatpush1.msra.mxu0 0.0
      %2908 = vmatprep.subr.mxu0 0.0
      %2909 = vmatpush1.msra.mxu0 0.0
      %2910 = vmatprep.subr.mxu0 0.0
      %2911 = vmatpush1.msra.mxu0 0.0
      %2912 = vmatprep.subr.mxu0 0.0
      %2913 = vmatpush1.msra.mxu0 0.0
      %2914 = vmatprep.subr.mxu0 0.0
      %2915 = vmatpush1.msra.mxu0 0.0
      %2916 = vmatprep.subr.mxu0 0.0
      %2917 = vmatpush1.msra.mxu0 0.0
      %2918 = vmatprep.subr.mxu0 0.0
      %2919 = vmatpush1.msra.mxu0 0.0
      %2920 = vmatprep.subr.mxu0 0.0
      %2921 = vmatpush1.msra.mxu0 0.0
      %2922 = vmatprep.subr.mxu0 0.0
      %2923 = vmatpush1.msra.mxu0 0.0
      %2924 = vmatprep.subr.mxu0 0.0
      %2925 = vmatpush1.msra.mxu0 0.0
      %2926 = vmatprep.subr.mxu0 0.0
      %2927 = vmatpush1.msra.mxu0 0.0
      %2928 = vmatprep.subr.mxu0 0.0
      %2929 = vmatpush1.msra.mxu0 0.0
      %2930 = vmatprep.subr.mxu0 0.0
      %2931 = vmatpush1.msra.mxu0 0.0
      %2932 = vmatprep.subr.mxu0 0.0
      %2933 = vmatpush1.msra.mxu0 0.0
      %2934 = vmatprep.subr.mxu0 0.0
      %2935 = vmatpush1.msra.mxu0 0.0
      %2936 = vmatprep.subr.mxu0 0.0
      %2937 = vmatpush1.msra.mxu0 0.0
      %2938 = vmatprep.subr.mxu0 0.0
      %2939 = vmatpush1.msra.mxu0 0.0
      %2940 = vmatprep.subr.mxu0 0.0
      %2941 = vmatpush1.msra.mxu0 0.0
      %2942 = vmatprep.subr.mxu0 0.0
      %2943 = vmatpush1.msra.mxu0 0.0
      %2944 = vmatprep.subr.mxu0 0.0
      %2945 = vmatpush1.msra.mxu0 0.0
      %2946 = vmatprep.subr.mxu0 0.0
      %2947 = vmatpush1.msra.mxu0 0.0
      %2948 = vmatprep.subr.mxu0 0.0
      %2949 = vmatpush1.msra.mxu0 0.0
      %2950 = vmatprep.subr.mxu0 0.0
      %2951 = vmatpush1.msra.mxu0 0.0
      %2952 = vmatprep.subr.mxu0 0.0
      %2953 = vmatpush1.msra.mxu0 0.0
      %2954 = vmatprep.subr.mxu0 0.0
      %2955 = vmatpush1.msra.mxu0 0.0
      %2956 = vmatprep.subr.mxu0 0.0
      %2957 = vmatpush1.msra.mxu0 0.0
      %2958 = vmatprep.mubr.f32.mxu0 0.0
      %v2959 = vand.u32 %v2738, 4294901760
      %v2960 = vsub.f32 %v2738, %v2959
      %2961 = vmatmul.mubr.f32.gmra.mrb[0].mxu0 %v2960
      %v2962 = vpop.f32.mrb[0].mxu0
      %v2963 = vadd.f32 %v2889, %v2962
      %v2964 = vpop.f32.mrb[0].mxu0
      %2965 = vdwg.mxu0
      %2966 = vmatprep.subr.mxu0 0.0
      %v2967 = vand.u32 %v764, 4294901760
      %2968 = vmatpush1.msra.mxu0 %v2967
      %2969 = vmatprep.subr.mxu0 0.0
      %2970 = vmatpush1.msra.mxu0 0.0
      %2971 = vmatprep.subr.mxu0 0.0
      %2972 = vmatpush1.msra.mxu0 0.0
      %2973 = vmatprep.subr.mxu0 0.0
      %2974 = vmatpush1.msra.mxu0 0.0
      %2975 = vmatprep.subr.mxu0 0.0
      %2976 = vmatpush1.msra.mxu0 0.0
      %2977 = vmatprep.subr.mxu0 0.0
      %2978 = vmatpush1.msra.mxu0 0.0
      %2979 = vmatprep.subr.mxu0 0.0
      %2980 = vmatpush1.msra.mxu0 0.0
      %2981 = vmatprep.subr.mxu0 0.0
      %2982 = vmatpush1.msra.mxu0 0.0
      %2983 = vmatprep.subr.mxu0 0.0
      %2984 = vmatpush1.msra.mxu0 0.0
      %2985 = vmatprep.subr.mxu0 0.0
      %2986 = vmatpush1.msra.mxu0 0.0
      %2987 = vmatprep.subr.mxu0 0.0
      %2988 = vmatpush1.msra.mxu0 0.0
      %2989 = vmatprep.subr.mxu0 0.0
      %2990 = vmatpush1.msra.mxu0 0.0
      %2991 = vmatprep.subr.mxu0 0.0
      %2992 = vmatpush1.msra.mxu0 0.0
      %2993 = vmatprep.subr.mxu0 0.0
      %2994 = vmatpush1.msra.mxu0 0.0
      %2995 = vmatprep.subr.mxu0 0.0
      %2996 = vmatpush1.msra.mxu0 0.0
      %2997 = vmatprep.subr.mxu0 0.0
      %2998 = vmatpush1.msra.mxu0 0.0
      %2999 = vmatprep.subr.mxu0 0.0
      %3000 = vmatpush1.msra.mxu0 0.0
      %3001 = vmatprep.subr.mxu0 0.0
      %3002 = vmatpush1.msra.mxu0 0.0
      %3003 = vmatprep.subr.mxu0 0.0
      %3004 = vmatpush1.msra.mxu0 0.0
      %3005 = vmatprep.subr.mxu0 0.0
      %3006 = vmatpush1.msra.mxu0 0.0
      %3007 = vmatprep.subr.mxu0 0.0
      %3008 = vmatpush1.msra.mxu0 0.0
      %3009 = vmatprep.subr.mxu0 0.0
      %3010 = vmatpush1.msra.mxu0 0.0
      %3011 = vmatprep.subr.mxu0 0.0
      %3012 = vmatpush1.msra.mxu0 0.0
      %3013 = vmatprep.subr.mxu0 0.0
      %3014 = vmatpush1.msra.mxu0 0.0
      %3015 = vmatprep.subr.mxu0 0.0
      %3016 = vmatpush1.msra.mxu0 0.0
      %3017 = vmatprep.subr.mxu0 0.0
      %3018 = vmatpush1.msra.mxu0 0.0
      %3019 = vmatprep.subr.mxu0 0.0
      %3020 = vmatpush1.msra.mxu0 0.0
      %3021 = vmatprep.subr.mxu0 0.0
      %3022 = vmatpush1.msra.mxu0 0.0
      %3023 = vmatprep.subr.mxu0 0.0
      %3024 = vmatpush1.msra.mxu0 0.0
      %3025 = vmatprep.subr.mxu0 0.0
      %3026 = vmatpush1.msra.mxu0 0.0
      %3027 = vmatprep.subr.mxu0 0.0
      %3028 = vmatpush1.msra.mxu0 0.0
      %3029 = vmatprep.subr.mxu0 0.0
      %3030 = vmatpush1.msra.mxu0 0.0
      %3031 = vmatprep.mubr.f32.mxu0 0.0
      %v3032 = vand.u32 %v2738, 4294901760
      %v3033 = vsub.f32 %v2738, %v3032
      %v3034 = vand.u32 %v3033, 4294901760
      %3035 = vmatmul.mubr.f32.gmra.mrb[0].mxu0 %v3034
      %v3036 = vpop.f32.mrb[0].mxu0
      %v3037 = vadd.f32 %v2963, %v3036
      %v3038 = vpop.f32.mrb[0].mxu0
      %3039 = vdwg.mxu0
      %3040 = vmatprep.subr.mxu0 0.0
      %v3041 = vand.u32 %v764, 4294901760
      %v3042 = vsub.f32 %v764, %v3041
      %v3043 = vand.u32 %v3042, 4294901760
      %3044 = vmatpush1.msra.mxu0 %v3043
      %3045 = vmatprep.subr.mxu0 0.0
      %3046 = vmatpush1.msra.mxu0 0.0
      %3047 = vmatprep.subr.mxu0 0.0
      %3048 = vmatpush1.msra.mxu0 0.0
      %3049 = vmatprep.subr.mxu0 0.0
      %3050 = vmatpush1.msra.mxu0 0.0
      %3051 = vmatprep.subr.mxu0 0.0
      %3052 = vmatpush1.msra.mxu0 0.0
      %3053 = vmatprep.subr.mxu0 0.0
      %3054 = vmatpush1.msra.mxu0 0.0
      %3055 = vmatprep.subr.mxu0 0.0
      %3056 = vmatpush1.msra.mxu0 0.0
      %3057 = vmatprep.subr.mxu0 0.0
      %3058 = vmatpush1.msra.mxu0 0.0
      %3059 = vmatprep.subr.mxu0 0.0
      %3060 = vmatpush1.msra.mxu0 0.0
      %3061 = vmatprep.subr.mxu0 0.0
      %3062 = vmatpush1.msra.mxu0 0.0
      %3063 = vmatprep.subr.mxu0 0.0
      %3064 = vmatpush1.msra.mxu0 0.0
      %3065 = vmatprep.subr.mxu0 0.0
      %3066 = vmatpush1.msra.mxu0 0.0
      %3067 = vmatprep.subr.mxu0 0.0
      %3068 = vmatpush1.msra.mxu0 0.0
      %3069 = vmatprep.subr.mxu0 0.0
      %3070 = vmatpush1.msra.mxu0 0.0
      %3071 = vmatprep.subr.mxu0 0.0
      %3072 = vmatpush1.msra.mxu0 0.0
      %3073 = vmatprep.subr.mxu0 0.0
      %3074 = vmatpush1.msra.mxu0 0.0
      %3075 = vmatprep.subr.mxu0 0.0
      %3076 = vmatpush1.msra.mxu0 0.0
      %3077 = vmatprep.subr.mxu0 0.0
      %3078 = vmatpush1.msra.mxu0 0.0
      %3079 = vmatprep.subr.mxu0 0.0
      %3080 = vmatpush1.msra.mxu0 0.0
      %3081 = vmatprep.subr.mxu0 0.0
      %3082 = vmatpush1.msra.mxu0 0.0
      %3083 = vmatprep.subr.mxu0 0.0
      %3084 = vmatpush1.msra.mxu0 0.0
      %3085 = vmatprep.subr.mxu0 0.0
      %3086 = vmatpush1.msra.mxu0 0.0
      %3087 = vmatprep.subr.mxu0 0.0
      %3088 = vmatpush1.msra.mxu0 0.0
      %3089 = vmatprep.subr.mxu0 0.0
      %3090 = vmatpush1.msra.mxu0 0.0
      %3091 = vmatprep.subr.mxu0 0.0
      %3092 = vmatpush1.msra.mxu0 0.0
      %3093 = vmatprep.subr.mxu0 0.0
      %3094 = vmatpush1.msra.mxu0 0.0
      %3095 = vmatprep.subr.mxu0 0.0
      %3096 = vmatpush1.msra.mxu0 0.0
      %3097 = vmatprep.subr.mxu0 0.0
      %3098 = vmatpush1.msra.mxu0 0.0
      %3099 = vmatprep.subr.mxu0 0.0
      %3100 = vmatpush1.msra.mxu0 0.0
      %3101 = vmatprep.subr.mxu0 0.0
      %3102 = vmatpush1.msra.mxu0 0.0
      %3103 = vmatprep.subr.mxu0 0.0
      %3104 = vmatpush1.msra.mxu0 0.0
      %3105 = vmatprep.subr.mxu0 0.0
      %3106 = vmatpush1.msra.mxu0 0.0
      %3107 = vmatprep.mubr.f32.mxu0 0.0
      %v3108 = vand.u32 %v2738, 4294901760
      %3109 = vmatmul.mubr.f32.gmra.mrb[0].mxu0 %v3108
      %v3110 = vpop.f32.mrb[0].mxu0
      %v3111 = vadd.f32 %v3037, %v3110
      %v3112 = vpop.f32.mrb[0].mxu0
      %3113 = vdwg.mxu0
      %3114 = vmatprep.subr.mxu0 0.0
      %v3115 = vand.u32 %v764, 4294901760
      %3116 = vmatpush1.msra.mxu0 %v3115
      %3117 = vmatprep.subr.mxu0 0.0
      %3118 = vmatpush1.msra.mxu0 0.0
      %3119 = vmatprep.subr.mxu0 0.0
      %3120 = vmatpush1.msra.mxu0 0.0
      %3121 = vmatprep.subr.mxu0 0.0
      %3122 = vmatpush1.msra.mxu0 0.0
      %3123 = vmatprep.subr.mxu0 0.0
      %3124 = vmatpush1.msra.mxu0 0.0
      %3125 = vmatprep.subr.mxu0 0.0
      %3126 = vmatpush1.msra.mxu0 0.0
      %3127 = vmatprep.subr.mxu0 0.0
      %3128 = vmatpush1.msra.mxu0 0.0
      %3129 = vmatprep.subr.mxu0 0.0
      %3130 = vmatpush1.msra.mxu0 0.0
      %3131 = vmatprep.subr.mxu0 0.0
      %3132 = vmatpush1.msra.mxu0 0.0
      %3133 = vmatprep.subr.mxu0 0.0
      %3134 = vmatpush1.msra.mxu0 0.0
      %3135 = vmatprep.subr.mxu0 0.0
      %3136 = vmatpush1.msra.mxu0 0.0
      %3137 = vmatprep.subr.mxu0 0.0
      %3138 = vmatpush1.msra.mxu0 0.0
      %3139 = vmatprep.subr.mxu0 0.0
      %3140 = vmatpush1.msra.mxu0 0.0
      %3141 = vmatprep.subr.mxu0 0.0
      %3142 = vmatpush1.msra.mxu0 0.0
      %3143 = vmatprep.subr.mxu0 0.0
      %3144 = vmatpush1.msra.mxu0 0.0
      %3145 = vmatprep.subr.mxu0 0.0
      %3146 = vmatpush1.msra.mxu0 0.0
      %3147 = vmatprep.subr.mxu0 0.0
      %3148 = vmatpush1.msra.mxu0 0.0
      %3149 = vmatprep.subr.mxu0 0.0
      %3150 = vmatpush1.msra.mxu0 0.0
      %3151 = vmatprep.subr.mxu0 0.0
      %3152 = vmatpush1.msra.mxu0 0.0
      %3153 = vmatprep.subr.mxu0 0.0
      %3154 = vmatpush1.msra.mxu0 0.0
      %3155 = vmatprep.subr.mxu0 0.0
      %3156 = vmatpush1.msra.mxu0 0.0
      %3157 = vmatprep.subr.mxu0 0.0
      %3158 = vmatpush1.msra.mxu0 0.0
      %3159 = vmatprep.subr.mxu0 0.0
      %3160 = vmatpush1.msra.mxu0 0.0
      %3161 = vmatprep.subr.mxu0 0.0
      %3162 = vmatpush1.msra.mxu0 0.0
      %3163 = vmatprep.subr.mxu0 0.0
      %3164 = vmatpush1.msra.mxu0 0.0
      %3165 = vmatprep.subr.mxu0 0.0
      %3166 = vmatpush1.msra.mxu0 0.0
      %3167 = vmatprep.subr.mxu0 0.0
      %3168 = vmatpush1.msra.mxu0 0.0
      %3169 = vmatprep.subr.mxu0 0.0
      %3170 = vmatpush1.msra.mxu0 0.0
      %3171 = vmatprep.subr.mxu0 0.0
      %3172 = vmatpush1.msra.mxu0 0.0
      %3173 = vmatprep.subr.mxu0 0.0
      %3174 = vmatpush1.msra.mxu0 0.0
      %3175 = vmatprep.subr.mxu0 0.0
      %3176 = vmatpush1.msra.mxu0 0.0
      %3177 = vmatprep.subr.mxu0 0.0
      %3178 = vmatpush1.msra.mxu0 0.0
      %3179 = vmatprep.mubr.f32.mxu0 0.0
      %v3180 = vand.u32 %v2738, 4294901760
      %3181 = vmatmul.mubr.f32.gmra.mrb[0].mxu0 %v3180
      %v3182 = vpop.f32.mrb[0].mxu0
      %v3183 = vadd.f32 %v3111, %v3182
      %v3184 = vpop.f32.mrb[0].mxu0
      %3185 = vdwg.mxu0
      %v3186 = vsel %vm217, %v3183, 0.0
      %v3187 = vsub.f32 %v2734, %v3186
      %3188 = vst [vmem:[%s152] sm:$0x3f] %v3187
      %3189 = vst.msk [vmem:[%s156] sm:$0x7] %vm226, %v167
      %p3190 = scmp.lt.s32.totalorder %s21, 1
      %s3191 = scalar_select %p3190, %s21, 1
      %s3192 = smul.addr %s3191, 8
      %s3193 = scalar_lea.vmem %s2, %s3192
      %p3194 = scmp.lt.s32.totalorder %s21, 1
      %s3195 = scalar_select %p3194, %s21, 1
      %s3196 = smul.addr %s3195, 4
      %s3197 = scalar_lea.vmem %s3, %s3196
      // Predicated region
      $region39: #{tpu_custom_call.1} parent=23 // pred_check
        %p3198 = pneg %p65
      $region40: #{tpu_custom_call.1} parent=23 // pred_check_branch
        %3200 = sbr.rel (%p3198) target = $region42
      $region41: #{tpu_custom_call.1} parent=23 // pred_region
        _
      $region42: #{tpu_custom_call.1} parent=23 // pred_fallthru
        _
      // Predicated region
      $region43: #{tpu_custom_call.1} parent=23 // pred_check
        %p3201 = pneg %p91
      $region44: #{tpu_custom_call.1} parent=23 // pred_check_branch
        %3203 = sbr.rel (%p3201) target = $region46
      $region45: #{tpu_custom_call.1} parent=23 // pred_region
        _
      $region46: #{tpu_custom_call.1} parent=23 // pred_fallthru
        _
    $region24: #{tpu_custom_call.1} parent=5 // pred_fallthru
      _
    %p3204 = scmp.le.s32.totalorder 2, %s16
    // Predicated region
    $region47: #{tpu_custom_call.1} parent=5 // pred_check
      %p3205 = pneg %p3204
    $region48: #{tpu_custom_call.1} parent=5 // pred_check_branch
      %3207 = sbr.rel (%p3205) target = $region50
    $region49: #{tpu_custom_call.1} parent=5 // pred_region
      %s3208 = ssub.s32 %s16, 2
      // Predicated region
      $region51: #{tpu_custom_call.1} parent=49 // pred_check
        %p3209 = pneg %p71
      $region52: #{tpu_custom_call.1} parent=49 // pred_check_branch
        %3211 = sbr.rel (%p3209) target = $region54
      $region53: #{tpu_custom_call.1} parent=49 // pred_region
        %p3212 = scmp.lt.s32.totalorder %s22, 1
        %s3213 = scalar_select %p3212, %s22, 1
        %s3214 = smul.addr %s3213, 8
        %s3215 = scalar_lea.vmem %s2, %s3214
      $region54: #{tpu_custom_call.1} parent=49 // pred_fallthru
        _
      // Predicated region
      $region55: #{tpu_custom_call.1} parent=49 // pred_check
        %p3216 = pneg %p97
      $region56: #{tpu_custom_call.1} parent=49 // pred_check_branch
        %3218 = sbr.rel (%p3216) target = $region58
      $region57: #{tpu_custom_call.1} parent=49 // pred_region
        %p3219 = scmp.lt.s32.totalorder %s22, 1
        %s3220 = scalar_select %p3219, %s22, 1
        %s3221 = smul.addr %s3220, 4
        %s3222 = scalar_lea.vmem %s3, %s3221
      $region58: #{tpu_custom_call.1} parent=49 // pred_fallthru
        _
    $region50: #{tpu_custom_call.1} parent=5 // pred_fallthru
      _
  $region6: #{tpu_custom_call.1} parent=0 // loop_footer
    %s20 = sadd.s32 1, %s16
  $region7: #{tpu_custom_call.1} parent=0 // loop_footer_branch
    %15 = sbr.rel target = $region3
  $region8: #{tpu_custom_call.1} parent=0 // loop_exit
    _

</llo_original>
